<compile_context>
chip_gen: v5e
topology: v5e:2x2
jax: 0.10.0
libtpu: 0.0.40
codegen_flags: <defaults>
</compile_context>

<pallas_src>
import functools

import jax
import jax.numpy as jnp
from jax import lax
from jax.experimental import pallas as pl
from jax.experimental.pallas import tpu as pltpu

LEAKY_SLOPE = 0.2
BN_EPS = 1e-5


# --------------------------------------------------------------------------
# Fused Pallas kernel: conv1 -> bn1 -> act -> conv2 -> bn2 -> +identity -> act
# --------------------------------------------------------------------------
def _d_block_kernel(x_ref, w1_ref, w2_ref, s1_ref, b1_ref, s2_ref, b2_ref,
                    o_ref, ypad_ref, *, H, W, cin, planes, dil, leaky):
    """One grid step = one image (NHWC, zero-padded by `dil`).

    x_ref   : (H+2d, W+2d, cin)      padded input, f32
    w1_ref  : (9*cin, planes)        conv1 weights, (kh,kw,cin)-major rows, bf16
    w2_ref  : (9*planes, planes)     conv2 weights, bf16
    s*/b*   : (1, planes)            folded BatchNorm scale / shift, f32
    o_ref   : (H, W, planes)         output, f32
    ypad_ref: (H+2d, W+2d, planes)   VMEM scratch (padded conv1 activation)
    """
    d = dil
    N = H * W

    def act(y):
        if leaky:
            return jnp.maximum(y, jnp.float32(LEAKY_SLOPE) * y)   # LeakyReLU(0.2)
        return jnp.maximum(y, jnp.float32(0.0))                   # ReLU

    def taps(src, c):
        # 9 dilated shifts of the padded tile -> (N, 9*c): one big-K MXU operand.
        cols = [src[kh:kh + H, kw:kw + W, :].reshape(N, c)
                for kh in (0, d, 2 * d) for kw in (0, d, 2 * d)]
        return jnp.concatenate(cols, axis=-1)

    xp = x_ref[...]                                             # (H+2d, W+2d, cin)

    # conv1 -> dropout(identity) -> bn1 -> act     (single K = 9*cin matmul)
    xs1 = taps(xp, cin).astype(jnp.bfloat16)                    # (N, 9*cin)
    y1 = jnp.dot(xs1, w1_ref[...], preferred_element_type=jnp.float32)
    y1 = act(y1 * s1_ref[...] + b1_ref[...])                    # (N, planes) f32

    # zero-padded VMEM buffer feeding the second dilated conv
    ypad_ref[...] = jnp.zeros(ypad_ref.shape, ypad_ref.dtype)
    ypad_ref[d:d + H, d:d + W, :] = y1.reshape(H, W, planes)

    # conv2 -> dropout(identity) -> bn2            (single K = 9*planes matmul)
    xs2 = taps(ypad_ref[...], planes).astype(jnp.bfloat16)      # (N, 9*planes)
    y2 = jnp.dot(xs2, w2_ref[...], preferred_element_type=jnp.float32)
    y2 = y2 * s2_ref[...] + b2_ref[...]

    # residual add: identity = centre of the padded input,
    # channel zero-padded in-kernel when shortcut_conv is used.
    ident = xp[d:d + H, d:d + W, :].reshape(N, cin)
    if planes != cin:
        padc = (planes - cin) // 2
        z = jnp.zeros((N, padc), jnp.float32)
        ident = jnp.concatenate([z, ident, z], axis=-1)

    out = act(y2 + ident)
    o_ref[...] = out.reshape(H, W, planes).astype(o_ref.dtype)


# --------------------------------------------------------------------------
# Wrapper
# --------------------------------------------------------------------------
def d_block_forward(params, x_nchw, *, inplanes, planes, dilation=2,
                    leaky=False, shortcut_pad=False):
    B, C, H, W = x_nchw.shape
    assert C == inplanes
    if shortcut_pad:
        assert planes > inplanes and (planes - inplanes) % 2 == 0
    else:
        assert planes == inplanes, "identity shortcut needs planes == inplanes"
    d = dilation
    Hp, Wp = H + 2 * d, W + 2 * d

    x = jnp.transpose(x_nchw, (0, 2, 3, 1)).astype(jnp.float32)   # NCHW -> NHWC
    x_pad = jnp.pad(x, ((0, 0), (d, d), (d, d), (0, 0)))          # padding_mode='zeros'

    w1, w2 = params["w1"], params["w2"]
    s1, b1 = params["bn1"]
    s2, b2 = params["bn2"]

    kernel = functools.partial(_d_block_kernel, H=H, W=W, cin=inplanes,
                               planes=planes, dil=d, leaky=leaky)

    flops = 2 * B * H * W * 9 * (inplanes * planes + planes * planes)
    bytes_accessed = ((B * Hp * Wp * inplanes + B * H * W * planes) * 4
                      + (9 * inplanes * planes + 9 * planes * planes) * 2
                      + 4 * planes * 4)

    out = pl.pallas_call(
        kernel,
        out_shape=jax.ShapeDtypeStruct((B, H, W, planes), jnp.float32),
        grid=(B,),
        in_specs=[
            pl.BlockSpec((None, Hp, Wp, inplanes), lambda b: (b, 0, 0, 0)),
            pl.BlockSpec((9 * inplanes, planes), lambda b: (0, 0)),
            pl.BlockSpec((9 * planes, planes), lambda b: (0, 0)),
            pl.BlockSpec((1, planes), lambda b: (0, 0)),
            pl.BlockSpec((1, planes), lambda b: (0, 0)),
            pl.BlockSpec((1, planes), lambda b: (0, 0)),
            pl.BlockSpec((1, planes), lambda b: (0, 0)),
        ],
        out_specs=pl.BlockSpec((None, H, W, planes), lambda b: (b, 0, 0, 0)),
        scratch_shapes=[pltpu.VMEM((Hp, Wp, planes), jnp.float32)],
        compiler_params=pltpu.CompilerParams(dimension_semantics=("parallel",)),
        cost_estimate=pl.CostEstimate(flops=flops, transcendentals=0,
                                      bytes_accessed=bytes_accessed),
    )(x_pad, w1, w2, s1, b1, s2, b2)

    return jnp.transpose(out, (0, 3, 1, 2))   # NHWC -> NCHW


# --------------------------------------------------------------------------
# Parameters (deterministic synthetic init; shapes from D_Block.__init__)
# PyTorch conv weight (cout, cin, 3, 3) maps to our layout via
#     w.transpose(2, 3, 1, 0).reshape(9 * cin, cout)
# --------------------------------------------------------------------------
def init_d_block_params(key, inplanes, planes):
    ks = jax.random.split(key, 4)

    def conv_w(k, cin, cout):
        fan_in = cin * 9
        std = (2.0 / fan_in) ** 0.5
        w = jax.random.normal(k, (3, 3, cin, cout), jnp.float32) * std
        return w.reshape(9 * cin, cout).astype(jnp.bfloat16)

    def bn(k, c):
        kg, kb, km, kv = jax.random.split(k, 4)
        gamma = 1.0 + 0.1 * jax.random.normal(kg, (c,), jnp.float32)
        beta = 0.1 * jax.random.normal(kb, (c,), jnp.float32)
        mean = 0.1 * jax.random.normal(km, (c,), jnp.float32)
        var = jnp.abs(1.0 + 0.1 * jax.random.normal(kv, (c,), jnp.float32))
        scale = gamma / jnp.sqrt(var + BN_EPS)
        shift = beta - mean * scale
        return scale.reshape(1, c), shift.reshape(1, c)

    return {
        "w1": conv_w(ks[0], inplanes, planes),
        "w2": conv_w(ks[1], planes, planes),
        "bn1": bn(ks[2], planes),
        "bn2": bn(ks[3], planes),
    }


# --------------------------------------------------------------------------
# Pure-JAX reference (for a numerical sanity check against the fused kernel)
# --------------------------------------------------------------------------
def d_block_reference(params, x_nchw, *, inplanes, planes, dilation=2,
                      leaky=False, shortcut_pad=False):
    d = dilation
    x = jnp.transpose(x_nchw, (0, 2, 3, 1)).astype(jnp.float32)
    w1 = params["w1"].astype(jnp.float32).reshape(3, 3, inplanes, planes)
    w2 = params["w2"].astype(jnp.float32).reshape(3, 3, planes, planes)
    s1, b1 = params["bn1"]
    s2, b2 = params["bn2"]

    def conv(inp, w):
        return lax.conv_general_dilated(
            inp, w, window_strides=(1, 1), padding=((d, d), (d, d)),
            rhs_dilation=(d, d), dimension_numbers=("NHWC", "HWIO", "NHWC"),
            precision=lax.Precision.HIGHEST)

    def act(y):
        return jnp.maximum(y, LEAKY_SLOPE * y) if leaky else jnp.maximum(y, 0.0)

    y = act(conv(x, w1) * s1.reshape(1, 1, 1, -1) + b1.reshape(1, 1, 1, -1))
    y = conv(y, w2) * s2.reshape(1, 1, 1, -1) + b2.reshape(1, 1, 1, -1)
    ident = x
    if shortcut_pad:
        padc = (planes - inplanes) // 2
        ident = jnp.pad(x, ((0, 0), (0, 0), (0, 0), (padc, padc)))
    y = act(y + ident)
    return jnp.transpose(y, (0, 3, 1, 2))


# --------------------------------------------------------------------------
if __name__ == "__main__":
    key = jax.random.PRNGKey(0)
    kx, kp = jax.random.split(key)

    # Config 1: module defaults — ReLU, identity shortcut, dilation=2, stride=1.
    B, inplanes, H, W = 2, 64, 16, 16
    planes = inplanes
    x = jax.random.normal(kx, (B, inplanes, H, W), jnp.float32)   # NCHW like PyTorch
    params = init_d_block_params(kp, inplanes, planes)

    fwd = jax.jit(functools.partial(d_block_forward, inplanes=inplanes,
                                    planes=planes, dilation=2,
                                    leaky=False, shortcut_pad=False))
    out = fwd(params, x)
    jax.block_until_ready(out)
    assert out.shape == (B, planes, H, W), out.shape
    assert out.dtype == jnp.float32

    ref = d_block_reference(params, x, inplanes=inplanes, planes=planes,
                            dilation=2, leaky=False, shortcut_pad=False)
    err = float(jnp.max(jnp.abs(out - ref)))
    assert err < 1e-1, f"config1 mismatch vs reference: max|diff|={err}"

    # Config 2: LeakyReLU(0.2) + zero-padded channel shortcut (planes = 2*inplanes).
    planes2 = 2 * inplanes
    params2 = init_d_block_params(jax.random.PRNGKey(1), inplanes, planes2)
    fwd2 = jax.jit(functools.partial(d_block_forward, inplanes=inplanes,
                                     planes=planes2, dilation=2,
                                     leaky=True, shortcut_pad=True))
    out2 = fwd2(params2, x)
    jax.block_until_ready(out2)
    assert out2.shape == (B, planes2, H, W), out2.shape

    ref2 = d_block_reference(params2, x, inplanes=inplanes, planes=planes2,
                             dilation=2, leaky=True, shortcut_pad=True)
    err2 = float(jnp.max(jnp.abs(out2 - ref2)))
    assert err2 < 1e-1, f"config2 mismatch vs reference: max|diff|={err2}"

    print("KERNEL_OK")
</pallas_src>

<mosaic_0001>
module attributes {stable_mosaic.version = 11 : i64} {
  func.func @_d_block_kernel(%arg0: i32, %arg1: memref<1x20x20x64xf32, #tpu.memory_space<vmem>>, %arg2: memref<576x64xbf16, #tpu.memory_space<vmem>>, %arg3: memref<576x64xbf16, #tpu.memory_space<vmem>>, %arg4: memref<1x64xf32, #tpu.memory_space<vmem>>, %arg5: memref<1x64xf32, #tpu.memory_space<vmem>>, %arg6: memref<1x64xf32, #tpu.memory_space<vmem>>, %arg7: memref<1x64xf32, #tpu.memory_space<vmem>>, %arg8: memref<1x16x16x64xf32, #tpu.memory_space<vmem>>, %arg9: memref<20x20x64xf32, #tpu.memory_space<vmem>>) attributes {dimension_semantics = [#tpu.dimension_semantics<parallel>], iteration_bounds = array<i64: 2>, scalar_prefetch = 0 : i64, scratch_operands = 1 : i64, tpu.core_type = #tpu.core_type<tc>, window_params = [{transform_indices = @transform_0, window_bounds = array<i64: 1, 20, 20, 64>}, {pipeline_mode = #tpu.pipeline_mode<synchronous>, transform_indices = @transform_1, window_bounds = array<i64: 576, 64>}, {pipeline_mode = #tpu.pipeline_mode<synchronous>, transform_indices = @transform_2, window_bounds = array<i64: 576, 64>}, {pipeline_mode = #tpu.pipeline_mode<synchronous>, transform_indices = @transform_3, window_bounds = array<i64: 1, 64>}, {pipeline_mode = #tpu.pipeline_mode<synchronous>, transform_indices = @transform_4, window_bounds = array<i64: 1, 64>}, {pipeline_mode = #tpu.pipeline_mode<synchronous>, transform_indices = @transform_5, window_bounds = array<i64: 1, 64>}, {pipeline_mode = #tpu.pipeline_mode<synchronous>, transform_indices = @transform_6, window_bounds = array<i64: 1, 64>}, {transform_indices = @transform_7, window_bounds = array<i64: 1, 16, 16, 64>}]} {
    %c0 = arith.constant 0 : index
    %c0_0 = arith.constant 0 : index
    %c0_1 = arith.constant 0 : index
    %c0_2 = arith.constant 0 : index
    %0 = vector.load %arg1[%c0, %c0_0, %c0_1, %c0_2] : memref<1x20x20x64xf32, #tpu.memory_space<vmem>>, vector<1x20x20x64xf32>
    %1 = vector.shape_cast %0 : vector<1x20x20x64xf32> to vector<20x20x64xf32>
    %2 = vector.extract_strided_slice %1 {offsets = [0, 0, 0], sizes = [16, 16, 64], strides = [1, 1, 1]} : vector<20x20x64xf32> to vector<16x16x64xf32>
    %3 = vector.shape_cast %2 : vector<16x16x64xf32> to vector<256x64xf32>
    %4 = vector.extract_strided_slice %1 {offsets = [0, 2, 0], sizes = [16, 16, 64], strides = [1, 1, 1]} : vector<20x20x64xf32> to vector<16x16x64xf32>
    %5 = vector.shape_cast %4 : vector<16x16x64xf32> to vector<256x64xf32>
    %6 = vector.extract_strided_slice %1 {offsets = [0, 4, 0], sizes = [16, 16, 64], strides = [1, 1, 1]} : vector<20x20x64xf32> to vector<16x16x64xf32>
    %7 = vector.shape_cast %6 : vector<16x16x64xf32> to vector<256x64xf32>
    %8 = vector.extract_strided_slice %1 {offsets = [2, 0, 0], sizes = [16, 16, 64], strides = [1, 1, 1]} : vector<20x20x64xf32> to vector<16x16x64xf32>
    %9 = vector.shape_cast %8 : vector<16x16x64xf32> to vector<256x64xf32>
    %10 = vector.extract_strided_slice %1 {offsets = [2, 2, 0], sizes = [16, 16, 64], strides = [1, 1, 1]} : vector<20x20x64xf32> to vector<16x16x64xf32>
    %11 = vector.shape_cast %10 : vector<16x16x64xf32> to vector<256x64xf32>
    %12 = vector.extract_strided_slice %1 {offsets = [2, 4, 0], sizes = [16, 16, 64], strides = [1, 1, 1]} : vector<20x20x64xf32> to vector<16x16x64xf32>
    %13 = vector.shape_cast %12 : vector<16x16x64xf32> to vector<256x64xf32>
    %14 = vector.extract_strided_slice %1 {offsets = [4, 0, 0], sizes = [16, 16, 64], strides = [1, 1, 1]} : vector<20x20x64xf32> to vector<16x16x64xf32>
    %15 = vector.shape_cast %14 : vector<16x16x64xf32> to vector<256x64xf32>
    %16 = vector.extract_strided_slice %1 {offsets = [4, 2, 0], sizes = [16, 16, 64], strides = [1, 1, 1]} : vector<20x20x64xf32> to vector<16x16x64xf32>
    %17 = vector.shape_cast %16 : vector<16x16x64xf32> to vector<256x64xf32>
    %18 = vector.extract_strided_slice %1 {offsets = [4, 4, 0], sizes = [16, 16, 64], strides = [1, 1, 1]} : vector<20x20x64xf32> to vector<16x16x64xf32>
    %19 = vector.shape_cast %18 : vector<16x16x64xf32> to vector<256x64xf32>
    %20 = tpu.concatenate %3, %5, %7, %9, %11, %13, %15, %17, %19 in 1 : vector<256x64xf32>, vector<256x64xf32>, vector<256x64xf32>, vector<256x64xf32>, vector<256x64xf32>, vector<256x64xf32>, vector<256x64xf32>, vector<256x64xf32>, vector<256x64xf32> -> vector<256x576xf32>
    %21 = arith.truncf %20 : vector<256x576xf32> to vector<256x576xbf16>
    %c0_3 = arith.constant 0 : index
    %c0_4 = arith.constant 0 : index
    %22 = vector.load %arg2[%c0_3, %c0_4] : memref<576x64xbf16, #tpu.memory_space<vmem>>, vector<576x64xbf16>
    %cst = arith.constant dense<0.000000e+00> : vector<256x64xf32>
    %23 = tpu.matmul %21, %22, %cst {dimension_numbers = #tpu.dot_dimension_numbers<[1], [0], [0], [1], [0, 0, 1, 1], [], []>} : vector<256x576xbf16>, vector<576x64xbf16>, vector<256x64xf32> -> vector<256x64xf32>
    %c0_5 = arith.constant 0 : index
    %c0_6 = arith.constant 0 : index
    %24 = vector.load %arg4[%c0_5, %c0_6] : memref<1x64xf32, #tpu.memory_space<vmem>>, vector<1x64xf32>
    %25 = vector.broadcast %24 : vector<1x64xf32> to vector<256x64xf32>
    %26 = arith.mulf %23, %25 : vector<256x64xf32>
    %c0_7 = arith.constant 0 : index
    %c0_8 = arith.constant 0 : index
    %27 = vector.load %arg5[%c0_7, %c0_8] : memref<1x64xf32, #tpu.memory_space<vmem>>, vector<1x64xf32>
    %28 = vector.broadcast %27 : vector<1x64xf32> to vector<256x64xf32>
    %29 = arith.addf %26, %28 : vector<256x64xf32>
    %cst_9 = arith.constant 0.000000e+00 : f32
    %30 = vector.broadcast %cst_9 : f32 to vector<256x64xf32>
    %31 = arith.maximumf %29, %30 : vector<256x64xf32>
    %cst_10 = arith.constant 0.000000e+00 : f32
    %32 = vector.broadcast %cst_10 : f32 to vector<20x20x64xf32>
    %c0_11 = arith.constant 0 : index
    %c0_12 = arith.constant 0 : index
    %c0_13 = arith.constant 0 : index
    %33 = vector.load %arg9[%c0_11, %c0_12, %c0_13] : memref<20x20x64xf32, #tpu.memory_space<vmem>>, vector<20x20x64xf32>
    tpu.vector_store %arg9[%c0_11, %c0_12, %c0_13], %32 {strides = array<i32>} : memref<20x20x64xf32, #tpu.memory_space<vmem>>, vector<20x20x64xf32>,
    %34 = vector.shape_cast %31 : vector<256x64xf32> to vector<16x16x64xf32>
    %c2 = arith.constant 2 : index
    %c2_14 = arith.constant 2 : index
    %c0_15 = arith.constant 0 : index
    %35 = vector.load %arg9[%c2, %c2_14, %c0_15] : memref<20x20x64xf32, #tpu.memory_space<vmem>>, vector<16x16x64xf32>
    tpu.vector_store %arg9[%c2, %c2_14, %c0_15], %34 {strides = array<i32>} : memref<20x20x64xf32, #tpu.memory_space<vmem>>, vector<16x16x64xf32>,
    %c0_16 = arith.constant 0 : index
    %c0_17 = arith.constant 0 : index
    %c0_18 = arith.constant 0 : index
    %36 = vector.load %arg9[%c0_16, %c0_17, %c0_18] : memref<20x20x64xf32, #tpu.memory_space<vmem>>, vector<20x20x64xf32>
    %37 = vector.extract_strided_slice %36 {offsets = [0, 0, 0], sizes = [16, 16, 64], strides = [1, 1, 1]} : vector<20x20x64xf32> to vector<16x16x64xf32>
    %38 = vector.shape_cast %37 : vector<16x16x64xf32> to vector<256x64xf32>
    %39 = vector.extract_strided_slice %36 {offsets = [0, 2, 0], sizes = [16, 16, 64], strides = [1, 1, 1]} : vector<20x20x64xf32> to vector<16x16x64xf32>
    %40 = vector.shape_cast %39 : vector<16x16x64xf32> to vector<256x64xf32>
    %41 = vector.extract_strided_slice %36 {offsets = [0, 4, 0], sizes = [16, 16, 64], strides = [1, 1, 1]} : vector<20x20x64xf32> to vector<16x16x64xf32>
    %42 = vector.shape_cast %41 : vector<16x16x64xf32> to vector<256x64xf32>
    %43 = vector.extract_strided_slice %36 {offsets = [2, 0, 0], sizes = [16, 16, 64], strides = [1, 1, 1]} : vector<20x20x64xf32> to vector<16x16x64xf32>
    %44 = vector.shape_cast %43 : vector<16x16x64xf32> to vector<256x64xf32>
    %45 = vector.extract_strided_slice %36 {offsets = [2, 2, 0], sizes = [16, 16, 64], strides = [1, 1, 1]} : vector<20x20x64xf32> to vector<16x16x64xf32>
    %46 = vector.shape_cast %45 : vector<16x16x64xf32> to vector<256x64xf32>
    %47 = vector.extract_strided_slice %36 {offsets = [2, 4, 0], sizes = [16, 16, 64], strides = [1, 1, 1]} : vector<20x20x64xf32> to vector<16x16x64xf32>
    %48 = vector.shape_cast %47 : vector<16x16x64xf32> to vector<256x64xf32>
    %49 = vector.extract_strided_slice %36 {offsets = [4, 0, 0], sizes = [16, 16, 64], strides = [1, 1, 1]} : vector<20x20x64xf32> to vector<16x16x64xf32>
    %50 = vector.shape_cast %49 : vector<16x16x64xf32> to vector<256x64xf32>
    %51 = vector.extract_strided_slice %36 {offsets = [4, 2, 0], sizes = [16, 16, 64], strides = [1, 1, 1]} : vector<20x20x64xf32> to vector<16x16x64xf32>
    %52 = vector.shape_cast %51 : vector<16x16x64xf32> to vector<256x64xf32>
    %53 = vector.extract_strided_slice %36 {offsets = [4, 4, 0], sizes = [16, 16, 64], strides = [1, 1, 1]} : vector<20x20x64xf32> to vector<16x16x64xf32>
    %54 = vector.shape_cast %53 : vector<16x16x64xf32> to vector<256x64xf32>
    %55 = tpu.concatenate %38, %40, %42, %44, %46, %48, %50, %52, %54 in 1 : vector<256x64xf32>, vector<256x64xf32>, vector<256x64xf32>, vector<256x64xf32>, vector<256x64xf32>, vector<256x64xf32>, vector<256x64xf32>, vector<256x64xf32>, vector<256x64xf32> -> vector<256x576xf32>
    %56 = arith.truncf %55 : vector<256x576xf32> to vector<256x576xbf16>
    %c0_19 = arith.constant 0 : index
    %c0_20 = arith.constant 0 : index
    %57 = vector.load %arg3[%c0_19, %c0_20] : memref<576x64xbf16, #tpu.memory_space<vmem>>, vector<576x64xbf16>
    %cst_21 = arith.constant dense<0.000000e+00> : vector<256x64xf32>
    %58 = tpu.matmul %56, %57, %cst_21 {dimension_numbers = #tpu.dot_dimension_numbers<[1], [0], [0], [1], [0, 0, 1, 1], [], []>} : vector<256x576xbf16>, vector<576x64xbf16>, vector<256x64xf32> -> vector<256x64xf32>
    %c0_22 = arith.constant 0 : index
    %c0_23 = arith.constant 0 : index
    %59 = vector.load %arg6[%c0_22, %c0_23] : memref<1x64xf32, #tpu.memory_space<vmem>>, vector<1x64xf32>
    %60 = vector.broadcast %59 : vector<1x64xf32> to vector<256x64xf32>
    %61 = arith.mulf %58, %60 : vector<256x64xf32>
    %c0_24 = arith.constant 0 : index
    %c0_25 = arith.constant 0 : index
    %62 = vector.load %arg7[%c0_24, %c0_25] : memref<1x64xf32, #tpu.memory_space<vmem>>, vector<1x64xf32>
    %63 = vector.broadcast %62 : vector<1x64xf32> to vector<256x64xf32>
    %64 = arith.addf %61, %63 : vector<256x64xf32>
    %65 = vector.extract_strided_slice %1 {offsets = [2, 2, 0], sizes = [16, 16, 64], strides = [1, 1, 1]} : vector<20x20x64xf32> to vector<16x16x64xf32>
    %66 = vector.shape_cast %65 : vector<16x16x64xf32> to vector<256x64xf32>
    %67 = arith.addf %64, %66 : vector<256x64xf32>
    %cst_26 = arith.constant 0.000000e+00 : f32
    %68 = vector.broadcast %cst_26 : f32 to vector<256x64xf32>
    %69 = arith.maximumf %67, %68 : vector<256x64xf32>
    %70 = vector.shape_cast %69 : vector<256x64xf32> to vector<16x16x64xf32>
    %c0_27 = arith.constant 0 : index
    %c0_28 = arith.constant 0 : index
    %c0_29 = arith.constant 0 : index
    %c0_30 = arith.constant 0 : index
    %71 = vector.load %arg8[%c0_27, %c0_28, %c0_29, %c0_30] : memref<1x16x16x64xf32, #tpu.memory_space<vmem>>, vector<1x16x16x64xf32>
    %72 = vector.shape_cast %71 : vector<1x16x16x64xf32> to vector<16x16x64xf32>
    %73 = vector.shape_cast %70 : vector<16x16x64xf32> to vector<1x16x16x64xf32>
    tpu.vector_store %arg8[%c0_27, %c0_28, %c0_29, %c0_30], %73 {strides = array<i32>} : memref<1x16x16x64xf32, #tpu.memory_space<vmem>>, vector<1x16x16x64xf32>,
    return
  }
  func.func @transform_0(%arg0: i32) -> (i32, i32, i32, i32) {
    %c0_i32 = arith.constant 0 : i32
    %c0_i32_0 = arith.constant 0 : i32
    %c0_i32_1 = arith.constant 0 : i32
    %c0_i32_2 = arith.constant 0 : i32
    return %arg0, %c0_i32, %c0_i32_0, %c0_i32_1 : i32, i32, i32, i32
  }
  func.func @transform_1(%arg0: i32) -> (i32, i32) {
    %c0_i32 = arith.constant 0 : i32
    %c0_i32_0 = arith.constant 0 : i32
    %c0_i32_1 = arith.constant 0 : i32
    return %c0_i32, %c0_i32_0 : i32, i32
  }
  func.func @transform_2(%arg0: i32) -> (i32, i32) {
    %c0_i32 = arith.constant 0 : i32
    %c0_i32_0 = arith.constant 0 : i32
    %c0_i32_1 = arith.constant 0 : i32
    return %c0_i32, %c0_i32_0 : i32, i32
  }
  func.func @transform_3(%arg0: i32) -> (i32, i32) {
    %c0_i32 = arith.constant 0 : i32
    %c0_i32_0 = arith.constant 0 : i32
    %c0_i32_1 = arith.constant 0 : i32
    return %c0_i32, %c0_i32_0 : i32, i32
  }
  func.func @transform_4(%arg0: i32) -> (i32, i32) {
    %c0_i32 = arith.constant 0 : i32
    %c0_i32_0 = arith.constant 0 : i32
    %c0_i32_1 = arith.constant 0 : i32
    return %c0_i32, %c0_i32_0 : i32, i32
  }
  func.func @transform_5(%arg0: i32) -> (i32, i32) {
    %c0_i32 = arith.constant 0 : i32
    %c0_i32_0 = arith.constant 0 : i32
    %c0_i32_1 = arith.constant 0 : i32
    return %c0_i32, %c0_i32_0 : i32, i32
  }
  func.func @transform_6(%arg0: i32) -> (i32, i32) {
    %c0_i32 = arith.constant 0 : i32
    %c0_i32_0 = arith.constant 0 : i32
    %c0_i32_1 = arith.constant 0 : i32
    return %c0_i32, %c0_i32_0 : i32, i32
  }
  func.func @transform_7(%arg0: i32) -> (i32, i32, i32, i32) {
    %c0_i32 = arith.constant 0 : i32
    %c0_i32_0 = arith.constant 0 : i32
    %c0_i32_1 = arith.constant 0 : i32
    %c0_i32_2 = arith.constant 0 : i32
    return %arg0, %c0_i32, %c0_i32_0, %c0_i32_1 : i32, i32, i32, i32
  }
}

</mosaic_0001>

<llo_original>
// kernel: d_block_forward.1
$region0: #{d_block_forward.1}
  #allocation0 [shape = 'u32[]', space=smem, size = 0x4, offset = 0x4, fixed_abs, tag = 'smem constant byte address 0x4 - core index']
  #allocation1 [shape = 'u32[72,128]{1,0:T(1,128)}', space=vmem, size = 0x9000, scoped, tag = 'internal scratch']
  #allocation2 [shape = 'f32[20,20,64]{2,1,0:T(8,128)}', space=vmem, size = 0x3c000, scoped, tag = 'scratch operand']
  %s0 = inlined_call_operand.vmem [shape: f32[2,20,20,64], index: 0, kind: input, shape index: {}]
  %s1 = inlined_call_operand.vmem [shape: bf16[576,64], index: 1, kind: input, shape index: {}]
  %s2 = inlined_call_operand.vmem [shape: bf16[576,64], index: 2, kind: input, shape index: {}]
  %s3 = inlined_call_operand.vmem [shape: f32[1,64], index: 3, kind: input, shape index: {}]
  %s4 = inlined_call_operand.vmem [shape: f32[1,64], index: 4, kind: input, shape index: {}]
  %s5 = inlined_call_operand.vmem [shape: f32[1,64], index: 5, kind: input, shape index: {}]
  %s6 = inlined_call_operand.vmem [shape: f32[1,64], index: 6, kind: input, shape index: {}]
  %s7 = inlined_call_operand.hbm [shape: f32[2,16,16,64], index: 7, kind: output, shape index: {}]
  %s8 = sld [smem:[#allocation0]]
  $region61: #{d_block_forward.1} parent=0
    _
  %s10 = ssub.s32 1, %s8
  %s11 = scalar_select 0, %s10, %s8
  $region1: #{d_block_forward.1} parent=0
    #allocation3 [shape = 'u8[262144]{0}', space=vmem, size = 0x40000, scoped, tag = 'output window, operand 0']
    #allocation4 [shape = 's32[2]{0}', space=sflag, size = 0x8, scoped, tag = 'scoped memory for d_block_forward.1']
    %12 = vsyncpa [#allocation4], 0
    %s13 = scalar_lea.sflag [#allocation4], 1
    %14 = vsyncpa %s13, 0
    loop: start=0, step=1, limit=4
    $region2: #{d_block_forward.1} parent=1 // loop_pre_header
      _
    $region3: #{d_block_forward.1} parent=1 // loop_header
      %s16 = sphi 0, %s20
      %p17 = scmp.ge.s32.totalorder %s16, 4
      %s26 = sphi 0, %s28
      %s29 = sphi 0, %s26
      %s30 = sphi 0, %s29
      %s46 = sphi 0, %s30
      %s50 = sphi 0, %s50
      %s52 = sphi 0, %s50
      %s53 = sphi 0, %s52
      %s67 = sphi 0, %s53
      %s71 = sphi 0, %s71
      %s73 = sphi 0, %s71
      %s74 = sphi 0, %s73
      %s88 = sphi 0, %s74
      %s92 = sphi 0, %s92
      %s94 = sphi 0, %s92
      %s95 = sphi 0, %s94
      %s109 = sphi 0, %s95
      %s113 = sphi 0, %s113
      %s115 = sphi 0, %s113
      %s116 = sphi 0, %s115
      %s130 = sphi 0, %s116
      %s134 = sphi 0, %s134
      %s136 = sphi 0, %s134
      %s137 = sphi 0, %s136
      %s151 = sphi 0, %s137
      %s155 = sphi 0, %s155
      %s157 = sphi 0, %s155
      %s158 = sphi 0, %s157
      %s172 = sphi 0, %s158
      %s178 = sphi 0, %s180
      %s181 = sphi 0, %s178
      %s182 = sphi 0, %s181
      %s198 = sphi 0, %s182
    $region4: #{d_block_forward.1} parent=1 // loop_header_branch
      %19 = sbr.rel (%p17) target = $region8
    $region5: #{d_block_forward.1} parent=1 // loop_body
      %s21 = ssub.s32 %s16, 1
      %s22 = ssub.s32 %s16, 2
      %s23 = sadd.s32 %s16, 1
      %s24 = ssub.s32 %s16, %s23
      %p25 = scmp.eq.s32.totalorder %s24, 0
      %s27 = sadd.s32 %s26, 1
      %s28 = scalar_select %p25, %s26, %s27
      %p31 = pneg %p25
      %p32 = scmp.eq.s32.totalorder %s16, 1
      %p33 = por %p31, %p32
      %p34 = scmp.ne.s32.totalorder %s26, %s29
      %p35 = scmp.eq.s32.totalorder %s16, 0
      %p36 = por %p34, %p35
      %p37 = scmp.ne.s32.totalorder %s26, %s29
      %p38 = scmp.eq.s32.totalorder %s21, 1
      %p39 = por %p37, %p38
      %p40 = scmp.ne.s32.totalorder %s29, %s30
      %p41 = scmp.eq.s32.totalorder %s21, 0
      %p42 = por %p40, %p41
      %p43 = scmp.ne.s32.totalorder %s29, %s30
      %p44 = scmp.eq.s32.totalorder %s22, 1
      %p45 = por %p43, %p44
      %p47 = scmp.ne.s32.totalorder %s30, %s46
      %p48 = scmp.eq.s32.totalorder %s22, 0
      %p49 = por %p47, %p48
      %s51 = sadd.s32 %s50, 1
      %p54 = scmp.eq.s32.totalorder %s16, 1
      %p55 = scmp.ne.s32.totalorder %s50, %s52
      %p56 = scmp.eq.s32.totalorder %s16, 0
      %p57 = por %p55, %p56
      %p58 = scmp.ne.s32.totalorder %s50, %s52
      %p59 = scmp.eq.s32.totalorder %s21, 1
      %p60 = por %p58, %p59
      %p61 = scmp.ne.s32.totalorder %s52, %s53
      %p62 = scmp.eq.s32.totalorder %s21, 0
      %p63 = por %p61, %p62
      %p64 = scmp.ne.s32.totalorder %s52, %s53
      %p65 = scmp.eq.s32.totalorder %s22, 1
      %p66 = por %p64, %p65
      %p68 = scmp.ne.s32.totalorder %s53, %s67
      %p69 = scmp.eq.s32.totalorder %s22, 0
      %p70 = por %p68, %p69
      %s72 = sadd.s32 %s71, 1
      %p75 = scmp.eq.s32.totalorder %s16, 1
      %p76 = scmp.ne.s32.totalorder %s71, %s73
      %p77 = scmp.eq.s32.totalorder %s16, 0
      %p78 = por %p76, %p77
      %p79 = scmp.ne.s32.totalorder %s71, %s73
      %p80 = scmp.eq.s32.totalorder %s21, 1
      %p81 = por %p79, %p80
      %p82 = scmp.ne.s32.totalorder %s73, %s74
      %p83 = scmp.eq.s32.totalorder %s21, 0
      %p84 = por %p82, %p83
      %p85 = scmp.ne.s32.totalorder %s73, %s74
      %p86 = scmp.eq.s32.totalorder %s22, 1
      %p87 = por %p85, %p86
      %p89 = scmp.ne.s32.totalorder %s74, %s88
      %p90 = scmp.eq.s32.totalorder %s22, 0
      %p91 = por %p89, %p90
      %s93 = sadd.s32 %s92, 1
      %p96 = scmp.eq.s32.totalorder %s16, 1
      %p97 = scmp.ne.s32.totalorder %s92, %s94
      %p98 = scmp.eq.s32.totalorder %s16, 0
      %p99 = por %p97, %p98
      %p100 = scmp.ne.s32.totalorder %s92, %s94
      %p101 = scmp.eq.s32.totalorder %s21, 1
      %p102 = por %p100, %p101
      %p103 = scmp.ne.s32.totalorder %s94, %s95
      %p104 = scmp.eq.s32.totalorder %s21, 0
      %p105 = por %p103, %p104
      %p106 = scmp.ne.s32.totalorder %s94, %s95
      %p107 = scmp.eq.s32.totalorder %s22, 1
      %p108 = por %p106, %p107
      %p110 = scmp.ne.s32.totalorder %s95, %s109
      %p111 = scmp.eq.s32.totalorder %s22, 0
      %p112 = por %p110, %p111
      %s114 = sadd.s32 %s113, 1
      %p117 = scmp.eq.s32.totalorder %s16, 1
      %p118 = scmp.ne.s32.totalorder %s113, %s115
      %p119 = scmp.eq.s32.totalorder %s16, 0
      %p120 = por %p118, %p119
      %p121 = scmp.ne.s32.totalorder %s113, %s115
      %p122 = scmp.eq.s32.totalorder %s21, 1
      %p123 = por %p121, %p122
      %p124 = scmp.ne.s32.totalorder %s115, %s116
      %p125 = scmp.eq.s32.totalorder %s21, 0
      %p126 = por %p124, %p125
      %p127 = scmp.ne.s32.totalorder %s115, %s116
      %p128 = scmp.eq.s32.totalorder %s22, 1
      %p129 = por %p127, %p128
      %p131 = scmp.ne.s32.totalorder %s116, %s130
      %p132 = scmp.eq.s32.totalorder %s22, 0
      %p133 = por %p131, %p132
      %s135 = sadd.s32 %s134, 1
      %p138 = scmp.eq.s32.totalorder %s16, 1
      %p139 = scmp.ne.s32.totalorder %s134, %s136
      %p140 = scmp.eq.s32.totalorder %s16, 0
      %p141 = por %p139, %p140
      %p142 = scmp.ne.s32.totalorder %s134, %s136
      %p143 = scmp.eq.s32.totalorder %s21, 1
      %p144 = por %p142, %p143
      %p145 = scmp.ne.s32.totalorder %s136, %s137
      %p146 = scmp.eq.s32.totalorder %s21, 0
      %p147 = por %p145, %p146
      %p148 = scmp.ne.s32.totalorder %s136, %s137
      %p149 = scmp.eq.s32.totalorder %s22, 1
      %p150 = por %p148, %p149
      %p152 = scmp.ne.s32.totalorder %s137, %s151
      %p153 = scmp.eq.s32.totalorder %s22, 0
      %p154 = por %p152, %p153
      %s156 = sadd.s32 %s155, 1
      %p159 = scmp.eq.s32.totalorder %s16, 1
      %p160 = scmp.ne.s32.totalorder %s155, %s157
      %p161 = scmp.eq.s32.totalorder %s16, 0
      %p162 = por %p160, %p161
      %p163 = scmp.ne.s32.totalorder %s155, %s157
      %p164 = scmp.eq.s32.totalorder %s21, 1
      %p165 = por %p163, %p164
      %p166 = scmp.ne.s32.totalorder %s157, %s158
      %p167 = scmp.eq.s32.totalorder %s21, 0
      %p168 = por %p166, %p167
      %p169 = scmp.ne.s32.totalorder %s157, %s158
      %p170 = scmp.eq.s32.totalorder %s22, 1
      %p171 = por %p169, %p170
      %p173 = scmp.ne.s32.totalorder %s158, %s172
      %p174 = scmp.eq.s32.totalorder %s22, 0
      %p175 = por %p173, %p174
      %s176 = ssub.s32 %s16, %s23
      %p177 = scmp.eq.s32.totalorder %s176, 0
      %s179 = sadd.s32 %s178, 1
      %s180 = scalar_select %p177, %s178, %s179
      %p183 = pneg %p177
      %p184 = scmp.eq.s32.totalorder %s16, 1
      %p185 = por %p183, %p184
      %p186 = scmp.ne.s32.totalorder %s178, %s181
      %p187 = scmp.eq.s32.totalorder %s16, 0
      %p188 = por %p186, %p187
      %p189 = scmp.ne.s32.totalorder %s178, %s181
      %p190 = scmp.eq.s32.totalorder %s21, 1
      %p191 = por %p189, %p190
      %p192 = scmp.ne.s32.totalorder %s181, %s182
      %p193 = scmp.eq.s32.totalorder %s21, 0
      %p194 = por %p192, %p193
      %p195 = scmp.ne.s32.totalorder %s181, %s182
      %p196 = scmp.eq.s32.totalorder %s22, 1
      %p197 = por %p195, %p196
      %p199 = scmp.ne.s32.totalorder %s182, %s198
      %p200 = scmp.eq.s32.totalorder %s22, 0
      %p201 = por %p199, %p200
      %p202 = scmp.le.s32.totalorder 1, %s16
      %p203 = scmp.lt.s32.totalorder %s16, 3
      %p204 = pnand %p202, %p203
      %p205 = pneg %p204
      // Predicated region
      $region9: #{d_block_forward.1} parent=5 // pred_check
        _
      $region10: #{d_block_forward.1} parent=5 // pred_check_branch
        %207 = sbr.rel (%p204) target = $region12
      $region11: #{d_block_forward.1} parent=5 // pred_region
        %s208 = ssub.s32 %s16, 1
        // Predicated region
        $region13: #{d_block_forward.1} parent=11 // pred_check
          %p209 = pneg %p63
        $region14: #{d_block_forward.1} parent=11 // pred_check_branch
          %211 = sbr.rel (%p209) target = $region16
        $region15: #{d_block_forward.1} parent=11 // pred_region
          _
        $region16: #{d_block_forward.1} parent=11 // pred_fallthru
          _
        // Predicated region
        $region17: #{d_block_forward.1} parent=11 // pred_check
          %p212 = pneg %p84
        $region18: #{d_block_forward.1} parent=11 // pred_check_branch
          %214 = sbr.rel (%p212) target = $region20
        $region19: #{d_block_forward.1} parent=11 // pred_region
          _
        $region20: #{d_block_forward.1} parent=11 // pred_fallthru
          _
        // Predicated region
        $region21: #{d_block_forward.1} parent=11 // pred_check
          %p215 = pneg %p105
        $region22: #{d_block_forward.1} parent=11 // pred_check_branch
          %217 = sbr.rel (%p215) target = $region24
        $region23: #{d_block_forward.1} parent=11 // pred_region
          _
        $region24: #{d_block_forward.1} parent=11 // pred_fallthru
          _
        // Predicated region
        $region25: #{d_block_forward.1} parent=11 // pred_check
          %p218 = pneg %p126
        $region26: #{d_block_forward.1} parent=11 // pred_check_branch
          %220 = sbr.rel (%p218) target = $region28
        $region27: #{d_block_forward.1} parent=11 // pred_region
          _
        $region28: #{d_block_forward.1} parent=11 // pred_fallthru
          _
        // Predicated region
        $region29: #{d_block_forward.1} parent=11 // pred_check
          %p221 = pneg %p147
        $region30: #{d_block_forward.1} parent=11 // pred_check_branch
          %223 = sbr.rel (%p221) target = $region32
        $region31: #{d_block_forward.1} parent=11 // pred_region
          _
        $region32: #{d_block_forward.1} parent=11 // pred_fallthru
          _
        // Predicated region
        $region33: #{d_block_forward.1} parent=11 // pred_check
          %p224 = pneg %p168
        $region34: #{d_block_forward.1} parent=11 // pred_check_branch
          %226 = sbr.rel (%p224) target = $region36
        $region35: #{d_block_forward.1} parent=11 // pred_region
          _
        $region36: #{d_block_forward.1} parent=11 // pred_fallthru
          _
      $region12: #{d_block_forward.1} parent=5 // pred_fallthru
        _
      %p227 = scmp.lt.s32.totalorder %s16, 2
      // Predicated region
      $region37: #{d_block_forward.1} parent=5 // pred_check
        %p228 = pneg %p227
      $region38: #{d_block_forward.1} parent=5 // pred_check_branch
        %230 = sbr.rel (%p228) target = $region40
      $region39: #{d_block_forward.1} parent=5 // pred_region
        // Predicated region
        $region41: #{d_block_forward.1} parent=39 // pred_check
          %p231 = pneg %p36
        $region42: #{d_block_forward.1} parent=39 // pred_check_branch
          %233 = sbr.rel (%p231) target = $region44
        $region43: #{d_block_forward.1} parent=39 // pred_region
          %p234 = scmp.lt.s32.totalorder %s16, 1
          %s235 = scalar_select %p234, %s16, 1
          %s236 = smul.addr %s235, 60
          %s237 = smul.addr %s236, 8
          %s238 = scalar_lea.vmem %s0, %s237
        $region44: #{d_block_forward.1} parent=39 // pred_fallthru
          _
      $region40: #{d_block_forward.1} parent=5 // pred_fallthru
        _
      %p239 = scmp.le.s32.totalorder 1, %s16
      %p240 = scmp.lt.s32.totalorder %s16, 3
      %p241 = pnand %p239, %p240
      %p242 = pneg %p241
      // Predicated region
      $region45: #{d_block_forward.1} parent=5 // pred_check
        _
      $region46: #{d_block_forward.1} parent=5 // pred_check_branch
        %244 = sbr.rel (%p241) target = $region48
      $region47: #{d_block_forward.1} parent=5 // pred_region
        %s245 = ssub.s32 %s16, 1
        %p246 = scmp.lt.s32.totalorder %s21, 1
        %s247 = scalar_select %p246, %s21, 1
        %s248 = smul.addr %s247, 60
        %s249 = smul.addr %s248, 8
        %s250 = scalar_lea.vmem %s0, %s249
        %p251 = pneg %p42
        %p252 = pneg %p39
        %p253 = pneg %p63
        %p254 = pneg %p60
        %p255 = pneg %p84
        %p256 = pneg %p81
        %p257 = pneg %p105
        %p258 = pneg %p102
        %p259 = pneg %p126
        %p260 = pneg %p123
        %p261 = pneg %p147
        %p262 = pneg %p144
        %p263 = pneg %p168
        %p264 = pneg %p165
        %p265 = pneg %p194
        %p266 = pneg %p191
        %s267 = sand.u32 %s181, 1
        %s268 = scalar_lea.sflag [#allocation4], %s267
        %s269 = sand.u32 %s181, 1
        %s270 = smul.addr %s269, 256
        %s271 = scalar_lea.vmem [#allocation3], %s270
        %p272 = scmp.lt.s32.totalorder %s21, 1
        %s273 = scalar_select %p272, %s21, 1
        %s274 = smul.addr %s273, 60
        %s275 = smul.addr %s274, 8
        %s276 = scalar_lea.vmem %s0, %s275
        %v278 = vld [vmem:[%s276] sm:$0xff]
        %v279 = vld [vmem:[%s276 + $0x8] sm:$0xff]
        %v280 = vld [vmem:[%s276 + $0x10] sm:$0xf]
        %v281 = vld [vmem:[%s276 + $0x18] sm:$0xff]
        %v282 = vld [vmem:[%s276 + $0x20] sm:$0xff]
        %v283 = vld [vmem:[%s276 + $0x28] sm:$0xf]
        %v284 = vld [vmem:[%s276 + $0x30] sm:$0xff]
        %v285 = vld [vmem:[%s276 + $0x38] sm:$0xff]
        %v286 = vld [vmem:[%s276 + $0x40] sm:$0xf]
        %v287 = vld [vmem:[%s276 + $0x48] sm:$0xff]
        %v288 = vld [vmem:[%s276 + $0x50] sm:$0xff]
        %v289 = vld [vmem:[%s276 + $0x58] sm:$0xf]
        %v290 = vld [vmem:[%s276 + $0x60] sm:$0xff]
        %v291 = vld [vmem:[%s276 + $0x68] sm:$0xff]
        %v292 = vld [vmem:[%s276 + $0x70] sm:$0xf]
        %v293 = vld [vmem:[%s276 + $0x78] sm:$0xff]
        %v294 = vld [vmem:[%s276 + $0x80] sm:$0xff]
        %v295 = vld [vmem:[%s276 + $0x88] sm:$0xf]
        %v296 = vld [vmem:[%s276 + $0x90] sm:$0xff]
        %v297 = vld [vmem:[%s276 + $0x98] sm:$0xff]
        %v298 = vld [vmem:[%s276 + $0xa0] sm:$0xf]
        %v299 = vld [vmem:[%s276 + $0xa8] sm:$0xff]
        %v300 = vld [vmem:[%s276 + $0xb0] sm:$0xff]
        %v301 = vld [vmem:[%s276 + $0xb8] sm:$0xf]
        %v302 = vld [vmem:[%s276 + $0xc0] sm:$0xff]
        %v303 = vld [vmem:[%s276 + $0xc8] sm:$0xff]
        %v304 = vld [vmem:[%s276 + $0xd0] sm:$0xf]
        %v305 = vld [vmem:[%s276 + $0xd8] sm:$0xff]
        %v306 = vld [vmem:[%s276 + $0xe0] sm:$0xff]
        %v307 = vld [vmem:[%s276 + $0xe8] sm:$0xf]
        %v308 = vld [vmem:[%s276 + $0xf0] sm:$0xff]
        %v309 = vld [vmem:[%s276 + $0xf8] sm:$0xff]
        %v310 = vld [vmem:[%s276 + $0x100] sm:$0xf]
        %v311 = vld [vmem:[%s276 + $0x108] sm:$0xff]
        %v312 = vld [vmem:[%s276 + $0x110] sm:$0xff]
        %v313 = vld [vmem:[%s276 + $0x118] sm:$0xf]
        %v314 = vld [vmem:[%s276 + $0x120] sm:$0xff]
        %v315 = vld [vmem:[%s276 + $0x128] sm:$0xff]
        %v316 = vld [vmem:[%s276 + $0x130] sm:$0xf]
        %v317 = vld [vmem:[%s276 + $0x138] sm:$0xff]
        %v318 = vld [vmem:[%s276 + $0x140] sm:$0xff]
        %v319 = vld [vmem:[%s276 + $0x148] sm:$0xf]
        %v320 = vld [vmem:[%s276 + $0x150] sm:$0xff]
        %v321 = vld [vmem:[%s276 + $0x158] sm:$0xff]
        %v322 = vld [vmem:[%s276 + $0x160] sm:$0xf]
        %v323 = vld [vmem:[%s276 + $0x168] sm:$0xff]
        %v324 = vld [vmem:[%s276 + $0x170] sm:$0xff]
        %v325 = vld [vmem:[%s276 + $0x178] sm:$0xf]
        %v326 = vld [vmem:[%s276 + $0x180] sm:$0xff]
        %v327 = vld [vmem:[%s276 + $0x188] sm:$0xff]
        %v328 = vld [vmem:[%s276 + $0x190] sm:$0xf]
        %v329 = vld [vmem:[%s276 + $0x198] sm:$0xff]
        %v330 = vld [vmem:[%s276 + $0x1a0] sm:$0xff]
        %v331 = vld [vmem:[%s276 + $0x1a8] sm:$0xf]
        %v332 = vld [vmem:[%s276 + $0x1b0] sm:$0xff]
        %v333 = vld [vmem:[%s276 + $0x1b8] sm:$0xff]
        %v334 = vld [vmem:[%s276 + $0x1c0] sm:$0xf]
        %v335 = vld [vmem:[%s276 + $0x1c8] sm:$0xff]
        %v336 = vld [vmem:[%s276 + $0x1d0] sm:$0xff]
        %v337 = vld [vmem:[%s276 + $0x1d8] sm:$0xf]
        %vm386 = vcmask 1045504
        %v387 = vrot.slane %v278, 2
        %v388 = vrot.slane %v279, 2
        %v389 = vsel %vm386, %v387, %v388
        %v390 = vrot.slane %v280, 2
        %v391 = vsel %vm386, %v388, %v390
        %v392 = vrot.slane %v281, 2
        %v393 = vrot.slane %v282, 2
        %v394 = vsel %vm386, %v392, %v393
        %v395 = vrot.slane %v283, 2
        %v396 = vsel %vm386, %v393, %v395
        %v397 = vrot.slane %v284, 2
        %v398 = vrot.slane %v285, 2
        %v399 = vsel %vm386, %v397, %v398
        %v400 = vrot.slane %v286, 2
        %v401 = vsel %vm386, %v398, %v400
        %v402 = vrot.slane %v287, 2
        %v403 = vrot.slane %v288, 2
        %v404 = vsel %vm386, %v402, %v403
        %v405 = vrot.slane %v289, 2
        %v406 = vsel %vm386, %v403, %v405
        %v407 = vrot.slane %v290, 2
        %v408 = vrot.slane %v291, 2
        %v409 = vsel %vm386, %v407, %v408
        %v410 = vrot.slane %v292, 2
        %v411 = vsel %vm386, %v408, %v410
        %v412 = vrot.slane %v293, 2
        %v413 = vrot.slane %v294, 2
        %v414 = vsel %vm386, %v412, %v413
        %v415 = vrot.slane %v295, 2
        %v416 = vsel %vm386, %v413, %v415
        %v417 = vrot.slane %v296, 2
        %v418 = vrot.slane %v297, 2
        %v419 = vsel %vm386, %v417, %v418
        %v420 = vrot.slane %v298, 2
        %v421 = vsel %vm386, %v418, %v420
        %v422 = vrot.slane %v299, 2
        %v423 = vrot.slane %v300, 2
        %v424 = vsel %vm386, %v422, %v423
        %v425 = vrot.slane %v301, 2
        %v426 = vsel %vm386, %v423, %v425
        %v427 = vrot.slane %v302, 2
        %v428 = vrot.slane %v303, 2
        %v429 = vsel %vm386, %v427, %v428
        %v430 = vrot.slane %v304, 2
        %v431 = vsel %vm386, %v428, %v430
        %v432 = vrot.slane %v305, 2
        %v433 = vrot.slane %v306, 2
        %v434 = vsel %vm386, %v432, %v433
        %v435 = vrot.slane %v307, 2
        %v436 = vsel %vm386, %v433, %v435
        %v437 = vrot.slane %v308, 2
        %v438 = vrot.slane %v309, 2
        %v439 = vsel %vm386, %v437, %v438
        %v440 = vrot.slane %v310, 2
        %v441 = vsel %vm386, %v438, %v440
        %v442 = vrot.slane %v311, 2
        %v443 = vrot.slane %v312, 2
        %v444 = vsel %vm386, %v442, %v443
        %v445 = vrot.slane %v313, 2
        %v446 = vsel %vm386, %v443, %v445
        %v447 = vrot.slane %v314, 2
        %v448 = vrot.slane %v315, 2
        %v449 = vsel %vm386, %v447, %v448
        %v450 = vrot.slane %v316, 2
        %v451 = vsel %vm386, %v448, %v450
        %v452 = vrot.slane %v317, 2
        %v453 = vrot.slane %v318, 2
        %v454 = vsel %vm386, %v452, %v453
        %v455 = vrot.slane %v319, 2
        %v456 = vsel %vm386, %v453, %v455
        %v457 = vrot.slane %v320, 2
        %v458 = vrot.slane %v321, 2
        %v459 = vsel %vm386, %v457, %v458
        %v460 = vrot.slane %v322, 2
        %v461 = vsel %vm386, %v458, %v460
        %v462 = vrot.slane %v323, 2
        %v463 = vrot.slane %v324, 2
        %v464 = vsel %vm386, %v462, %v463
        %v465 = vrot.slane %v325, 2
        %v466 = vsel %vm386, %v463, %v465
        %vm467 = vcmask 1043456
        %v468 = vrot.slane %v278, 4
        %v469 = vrot.slane %v279, 4
        %v470 = vsel %vm467, %v468, %v469
        %v471 = vrot.slane %v280, 4
        %v472 = vsel %vm467, %v469, %v471
        %v473 = vrot.slane %v281, 4
        %v474 = vrot.slane %v282, 4
        %v475 = vsel %vm467, %v473, %v474
        %v476 = vrot.slane %v283, 4
        %v477 = vsel %vm467, %v474, %v476
        %v478 = vrot.slane %v284, 4
        %v479 = vrot.slane %v285, 4
        %v480 = vsel %vm467, %v478, %v479
        %v481 = vrot.slane %v286, 4
        %v482 = vsel %vm467, %v479, %v481
        %v483 = vrot.slane %v287, 4
        %v484 = vrot.slane %v288, 4
        %v485 = vsel %vm467, %v483, %v484
        %v486 = vrot.slane %v289, 4
        %v487 = vsel %vm467, %v484, %v486
        %v488 = vrot.slane %v290, 4
        %v489 = vrot.slane %v291, 4
        %v490 = vsel %vm467, %v488, %v489
        %v491 = vrot.slane %v292, 4
        %v492 = vsel %vm467, %v489, %v491
        %v493 = vrot.slane %v293, 4
        %v494 = vrot.slane %v294, 4
        %v495 = vsel %vm467, %v493, %v494
        %v496 = vrot.slane %v295, 4
        %v497 = vsel %vm467, %v494, %v496
        %v498 = vrot.slane %v296, 4
        %v499 = vrot.slane %v297, 4
        %v500 = vsel %vm467, %v498, %v499
        %v501 = vrot.slane %v298, 4
        %v502 = vsel %vm467, %v499, %v501
        %v503 = vrot.slane %v299, 4
        %v504 = vrot.slane %v300, 4
        %v505 = vsel %vm467, %v503, %v504
        %v506 = vrot.slane %v301, 4
        %v507 = vsel %vm467, %v504, %v506
        %v508 = vrot.slane %v302, 4
        %v509 = vrot.slane %v303, 4
        %v510 = vsel %vm467, %v508, %v509
        %v511 = vrot.slane %v304, 4
        %v512 = vsel %vm467, %v509, %v511
        %v513 = vrot.slane %v305, 4
        %v514 = vrot.slane %v306, 4
        %v515 = vsel %vm467, %v513, %v514
        %v516 = vrot.slane %v307, 4
        %v517 = vsel %vm467, %v514, %v516
        %v518 = vrot.slane %v308, 4
        %v519 = vrot.slane %v309, 4
        %v520 = vsel %vm467, %v518, %v519
        %v521 = vrot.slane %v310, 4
        %v522 = vsel %vm467, %v519, %v521
        %v523 = vrot.slane %v311, 4
        %v524 = vrot.slane %v312, 4
        %v525 = vsel %vm467, %v523, %v524
        %v526 = vrot.slane %v313, 4
        %v527 = vsel %vm467, %v524, %v526
        %v528 = vrot.slane %v314, 4
        %v529 = vrot.slane %v315, 4
        %v530 = vsel %vm467, %v528, %v529
        %v531 = vrot.slane %v316, 4
        %v532 = vsel %vm467, %v529, %v531
        %v533 = vrot.slane %v317, 4
        %v534 = vrot.slane %v318, 4
        %v535 = vsel %vm467, %v533, %v534
        %v536 = vrot.slane %v319, 4
        %v537 = vsel %vm467, %v534, %v536
        %v538 = vrot.slane %v320, 4
        %v539 = vrot.slane %v321, 4
        %v540 = vsel %vm467, %v538, %v539
        %v541 = vrot.slane %v322, 4
        %v542 = vsel %vm467, %v539, %v541
        %v543 = vrot.slane %v323, 4
        %v544 = vrot.slane %v324, 4
        %v545 = vsel %vm467, %v543, %v544
        %v546 = vrot.slane %v325, 4
        %v547 = vsel %vm467, %v544, %v546
        %v586 = vrot.slane %v326, 2
        %v587 = vrot.slane %v327, 2
        %v588 = vsel %vm386, %v586, %v587
        %v589 = vrot.slane %v328, 2
        %v590 = vsel %vm386, %v587, %v589
        %v591 = vrot.slane %v329, 2
        %v592 = vrot.slane %v330, 2
        %v593 = vsel %vm386, %v591, %v592
        %v594 = vrot.slane %v331, 2
        %v595 = vsel %vm386, %v592, %v594
        %v628 = vrot.slane %v326, 4
        %v629 = vrot.slane %v327, 4
        %v630 = vsel %vm467, %v628, %v629
        %v631 = vrot.slane %v328, 4
        %v632 = vsel %vm467, %v629, %v631
        %v633 = vrot.slane %v329, 4
        %v634 = vrot.slane %v330, 4
        %v635 = vsel %vm467, %v633, %v634
        %v636 = vrot.slane %v331, 4
        %v637 = vsel %vm467, %v634, %v636
        %v644 = vrot.slane %v332, 2
        %v645 = vrot.slane %v333, 2
        %v646 = vsel %vm386, %v644, %v645
        %v647 = vrot.slane %v334, 2
        %v648 = vsel %vm386, %v645, %v647
        %v649 = vrot.slane %v335, 2
        %v650 = vrot.slane %v336, 2
        %v651 = vsel %vm386, %v649, %v650
        %v652 = vrot.slane %v337, 2
        %v653 = vsel %vm386, %v650, %v652
        %v654 = vrot.slane %v332, 4
        %v655 = vrot.slane %v333, 4
        %v656 = vsel %vm467, %v654, %v655
        %v657 = vrot.slane %v334, 4
        %v658 = vsel %vm467, %v655, %v657
        %v659 = vrot.slane %v335, 4
        %v660 = vrot.slane %v336, 4
        %v661 = vsel %vm467, %v659, %v660
        %v662 = vrot.slane %v337, 4
        %v663 = vsel %vm467, %v660, %v662
        %672 = vrot.lane.b32.xlu0 %v389, 64
        %v673 = vpop.permute.xlu0 %672
        %674 = vrot.lane.b32.xlu0 %v391, 64
        %v675 = vpop.permute.xlu0 %674
        %676 = vrot.lane.b32.xlu0 %v394, 64
        %v677 = vpop.permute.xlu0 %676
        %678 = vrot.lane.b32.xlu0 %v396, 64
        %v679 = vpop.permute.xlu0 %678
        %680 = vrot.lane.b32.xlu0 %v399, 64
        %v681 = vpop.permute.xlu0 %680
        %682 = vrot.lane.b32.xlu0 %v401, 64
        %v683 = vpop.permute.xlu0 %682
        %684 = vrot.lane.b32.xlu0 %v404, 64
        %v685 = vpop.permute.xlu0 %684
        %686 = vrot.lane.b32.xlu0 %v406, 64
        %v687 = vpop.permute.xlu0 %686
        %688 = vrot.lane.b32.xlu0 %v409, 64
        %v689 = vpop.permute.xlu0 %688
        %690 = vrot.lane.b32.xlu0 %v411, 64
        %v691 = vpop.permute.xlu0 %690
        %692 = vrot.lane.b32.xlu0 %v414, 64
        %v693 = vpop.permute.xlu0 %692
        %694 = vrot.lane.b32.xlu0 %v416, 64
        %v695 = vpop.permute.xlu0 %694
        %696 = vrot.lane.b32.xlu0 %v419, 64
        %v697 = vpop.permute.xlu0 %696
        %698 = vrot.lane.b32.xlu0 %v421, 64
        %v699 = vpop.permute.xlu0 %698
        %700 = vrot.lane.b32.xlu0 %v424, 64
        %v701 = vpop.permute.xlu0 %700
        %702 = vrot.lane.b32.xlu0 %v426, 64
        %v703 = vpop.permute.xlu0 %702
        %704 = vrot.lane.b32.xlu0 %v429, 64
        %v705 = vpop.permute.xlu0 %704
        %706 = vrot.lane.b32.xlu0 %v431, 64
        %v707 = vpop.permute.xlu0 %706
        %708 = vrot.lane.b32.xlu0 %v434, 64
        %v709 = vpop.permute.xlu0 %708
        %710 = vrot.lane.b32.xlu0 %v436, 64
        %v711 = vpop.permute.xlu0 %710
        %712 = vrot.lane.b32.xlu0 %v439, 64
        %v713 = vpop.permute.xlu0 %712
        %714 = vrot.lane.b32.xlu0 %v441, 64
        %v715 = vpop.permute.xlu0 %714
        %716 = vrot.lane.b32.xlu0 %v444, 64
        %v717 = vpop.permute.xlu0 %716
        %718 = vrot.lane.b32.xlu0 %v446, 64
        %v719 = vpop.permute.xlu0 %718
        %720 = vrot.lane.b32.xlu0 %v449, 64
        %v721 = vpop.permute.xlu0 %720
        %722 = vrot.lane.b32.xlu0 %v451, 64
        %v723 = vpop.permute.xlu0 %722
        %724 = vrot.lane.b32.xlu0 %v454, 64
        %v725 = vpop.permute.xlu0 %724
        %726 = vrot.lane.b32.xlu0 %v456, 64
        %v727 = vpop.permute.xlu0 %726
        %728 = vrot.lane.b32.xlu0 %v459, 64
        %v729 = vpop.permute.xlu0 %728
        %730 = vrot.lane.b32.xlu0 %v461, 64
        %v731 = vpop.permute.xlu0 %730
        %732 = vrot.lane.b32.xlu0 %v464, 64
        %v733 = vpop.permute.xlu0 %732
        %734 = vrot.lane.b32.xlu0 %v466, 64
        %v735 = vpop.permute.xlu0 %734
        %768 = vrot.lane.b32.xlu0 %v284, 64
        %v769 = vpop.permute.xlu0 %768
        %770 = vrot.lane.b32.xlu0 %v285, 64
        %v771 = vpop.permute.xlu0 %770
        %772 = vrot.lane.b32.xlu0 %v287, 64
        %v773 = vpop.permute.xlu0 %772
        %774 = vrot.lane.b32.xlu0 %v288, 64
        %v775 = vpop.permute.xlu0 %774
        %776 = vrot.lane.b32.xlu0 %v290, 64
        %v777 = vpop.permute.xlu0 %776
        %778 = vrot.lane.b32.xlu0 %v291, 64
        %v779 = vpop.permute.xlu0 %778
        %780 = vrot.lane.b32.xlu0 %v293, 64
        %v781 = vpop.permute.xlu0 %780
        %782 = vrot.lane.b32.xlu0 %v294, 64
        %v783 = vpop.permute.xlu0 %782
        %784 = vrot.lane.b32.xlu0 %v296, 64
        %v785 = vpop.permute.xlu0 %784
        %786 = vrot.lane.b32.xlu0 %v297, 64
        %v787 = vpop.permute.xlu0 %786
        %788 = vrot.lane.b32.xlu0 %v299, 64
        %v789 = vpop.permute.xlu0 %788
        %790 = vrot.lane.b32.xlu0 %v300, 64
        %v791 = vpop.permute.xlu0 %790
        %792 = vrot.lane.b32.xlu0 %v302, 64
        %v793 = vpop.permute.xlu0 %792
        %794 = vrot.lane.b32.xlu0 %v303, 64
        %v795 = vpop.permute.xlu0 %794
        %796 = vrot.lane.b32.xlu0 %v305, 64
        %v797 = vpop.permute.xlu0 %796
        %798 = vrot.lane.b32.xlu0 %v306, 64
        %v799 = vpop.permute.xlu0 %798
        %800 = vrot.lane.b32.xlu0 %v308, 64
        %v801 = vpop.permute.xlu0 %800
        %802 = vrot.lane.b32.xlu0 %v309, 64
        %v803 = vpop.permute.xlu0 %802
        %804 = vrot.lane.b32.xlu0 %v311, 64
        %v805 = vpop.permute.xlu0 %804
        %806 = vrot.lane.b32.xlu0 %v312, 64
        %v807 = vpop.permute.xlu0 %806
        %808 = vrot.lane.b32.xlu0 %v314, 64
        %v809 = vpop.permute.xlu0 %808
        %810 = vrot.lane.b32.xlu0 %v315, 64
        %v811 = vpop.permute.xlu0 %810
        %812 = vrot.lane.b32.xlu0 %v317, 64
        %v813 = vpop.permute.xlu0 %812
        %814 = vrot.lane.b32.xlu0 %v318, 64
        %v815 = vpop.permute.xlu0 %814
        %816 = vrot.lane.b32.xlu0 %v320, 64
        %v817 = vpop.permute.xlu0 %816
        %818 = vrot.lane.b32.xlu0 %v321, 64
        %v819 = vpop.permute.xlu0 %818
        %820 = vrot.lane.b32.xlu0 %v323, 64
        %v821 = vpop.permute.xlu0 %820
        %822 = vrot.lane.b32.xlu0 %v324, 64
        %v823 = vpop.permute.xlu0 %822
        %824 = vrot.lane.b32.xlu0 %v326, 64
        %v825 = vpop.permute.xlu0 %824
        %826 = vrot.lane.b32.xlu0 %v327, 64
        %v827 = vpop.permute.xlu0 %826
        %828 = vrot.lane.b32.xlu0 %v329, 64
        %v829 = vpop.permute.xlu0 %828
        %830 = vrot.lane.b32.xlu0 %v330, 64
        %v831 = vpop.permute.xlu0 %830
        %864 = vrot.lane.b32.xlu0 %v480, 64
        %v865 = vpop.permute.xlu0 %864
        %866 = vrot.lane.b32.xlu0 %v482, 64
        %v867 = vpop.permute.xlu0 %866
        %868 = vrot.lane.b32.xlu0 %v485, 64
        %v869 = vpop.permute.xlu0 %868
        %870 = vrot.lane.b32.xlu0 %v487, 64
        %v871 = vpop.permute.xlu0 %870
        %872 = vrot.lane.b32.xlu0 %v490, 64
        %v873 = vpop.permute.xlu0 %872
        %874 = vrot.lane.b32.xlu0 %v492, 64
        %v875 = vpop.permute.xlu0 %874
        %876 = vrot.lane.b32.xlu0 %v495, 64
        %v877 = vpop.permute.xlu0 %876
        %878 = vrot.lane.b32.xlu0 %v497, 64
        %v879 = vpop.permute.xlu0 %878
        %880 = vrot.lane.b32.xlu0 %v500, 64
        %v881 = vpop.permute.xlu0 %880
        %882 = vrot.lane.b32.xlu0 %v502, 64
        %v883 = vpop.permute.xlu0 %882
        %884 = vrot.lane.b32.xlu0 %v505, 64
        %v885 = vpop.permute.xlu0 %884
        %886 = vrot.lane.b32.xlu0 %v507, 64
        %v887 = vpop.permute.xlu0 %886
        %888 = vrot.lane.b32.xlu0 %v510, 64
        %v889 = vpop.permute.xlu0 %888
        %890 = vrot.lane.b32.xlu0 %v512, 64
        %v891 = vpop.permute.xlu0 %890
        %892 = vrot.lane.b32.xlu0 %v515, 64
        %v893 = vpop.permute.xlu0 %892
        %894 = vrot.lane.b32.xlu0 %v517, 64
        %v895 = vpop.permute.xlu0 %894
        %896 = vrot.lane.b32.xlu0 %v520, 64
        %v897 = vpop.permute.xlu0 %896
        %898 = vrot.lane.b32.xlu0 %v522, 64
        %v899 = vpop.permute.xlu0 %898
        %900 = vrot.lane.b32.xlu0 %v525, 64
        %v901 = vpop.permute.xlu0 %900
        %902 = vrot.lane.b32.xlu0 %v527, 64
        %v903 = vpop.permute.xlu0 %902
        %904 = vrot.lane.b32.xlu0 %v530, 64
        %v905 = vpop.permute.xlu0 %904
        %906 = vrot.lane.b32.xlu0 %v532, 64
        %v907 = vpop.permute.xlu0 %906
        %908 = vrot.lane.b32.xlu0 %v535, 64
        %v909 = vpop.permute.xlu0 %908
        %910 = vrot.lane.b32.xlu0 %v537, 64
        %v911 = vpop.permute.xlu0 %910
        %912 = vrot.lane.b32.xlu0 %v540, 64
        %v913 = vpop.permute.xlu0 %912
        %914 = vrot.lane.b32.xlu0 %v542, 64
        %v915 = vpop.permute.xlu0 %914
        %916 = vrot.lane.b32.xlu0 %v545, 64
        %v917 = vpop.permute.xlu0 %916
        %918 = vrot.lane.b32.xlu0 %v547, 64
        %v919 = vpop.permute.xlu0 %918
        %920 = vrot.lane.b32.xlu0 %v630, 64
        %v921 = vpop.permute.xlu0 %920
        %922 = vrot.lane.b32.xlu0 %v632, 64
        %v923 = vpop.permute.xlu0 %922
        %924 = vrot.lane.b32.xlu0 %v635, 64
        %v925 = vpop.permute.xlu0 %924
        %926 = vrot.lane.b32.xlu0 %v637, 64
        %v927 = vpop.permute.xlu0 %926
        %960 = vrot.lane.b32.xlu0 %v588, 64
        %v961 = vpop.permute.xlu0 %960
        %962 = vrot.lane.b32.xlu0 %v590, 64
        %v963 = vpop.permute.xlu0 %962
        %964 = vrot.lane.b32.xlu0 %v593, 64
        %v965 = vpop.permute.xlu0 %964
        %966 = vrot.lane.b32.xlu0 %v595, 64
        %v967 = vpop.permute.xlu0 %966
        %968 = vrot.lane.b32.xlu0 %v646, 64
        %v969 = vpop.permute.xlu0 %968
        %970 = vrot.lane.b32.xlu0 %v648, 64
        %v971 = vpop.permute.xlu0 %970
        %972 = vrot.lane.b32.xlu0 %v651, 64
        %v973 = vpop.permute.xlu0 %972
        %974 = vrot.lane.b32.xlu0 %v653, 64
        %v975 = vpop.permute.xlu0 %974
        %vm984 = vcmask 523264
        %v985 = vsel %vm984, %v278, %v673
        %v986 = vsel %vm984, %v279, %v675
        %v987 = vsel %vm984, %v281, %v677
        %v988 = vsel %vm984, %v282, %v679
        %v989 = vsel %vm984, %v284, %v681
        %v990 = vsel %vm984, %v285, %v683
        %v991 = vsel %vm984, %v287, %v685
        %v992 = vsel %vm984, %v288, %v687
        %v993 = vsel %vm984, %v290, %v689
        %v994 = vsel %vm984, %v291, %v691
        %v995 = vsel %vm984, %v293, %v693
        %v996 = vsel %vm984, %v294, %v695
        %v997 = vsel %vm984, %v296, %v697
        %v998 = vsel %vm984, %v297, %v699
        %v999 = vsel %vm984, %v299, %v701
        %v1000 = vsel %vm984, %v300, %v703
        %v1001 = vsel %vm984, %v302, %v705
        %v1002 = vsel %vm984, %v303, %v707
        %v1003 = vsel %vm984, %v305, %v709
        %v1004 = vsel %vm984, %v306, %v711
        %v1005 = vsel %vm984, %v308, %v713
        %v1006 = vsel %vm984, %v309, %v715
        %v1007 = vsel %vm984, %v311, %v717
        %v1008 = vsel %vm984, %v312, %v719
        %v1009 = vsel %vm984, %v314, %v721
        %v1010 = vsel %vm984, %v315, %v723
        %v1011 = vsel %vm984, %v317, %v725
        %v1012 = vsel %vm984, %v318, %v727
        %v1013 = vsel %vm984, %v320, %v729
        %v1014 = vsel %vm984, %v321, %v731
        %v1015 = vsel %vm984, %v323, %v733
        %v1016 = vsel %vm984, %v324, %v735
        %v1017 = vsel %vm984, %v470, %v769
        %v1018 = vsel %vm984, %v472, %v771
        %v1019 = vsel %vm984, %v475, %v773
        %v1020 = vsel %vm984, %v477, %v775
        %v1021 = vsel %vm984, %v480, %v777
        %v1022 = vsel %vm984, %v482, %v779
        %v1023 = vsel %vm984, %v485, %v781
        %v1024 = vsel %vm984, %v487, %v783
        %v1025 = vsel %vm984, %v490, %v785
        %v1026 = vsel %vm984, %v492, %v787
        %v1027 = vsel %vm984, %v495, %v789
        %v1028 = vsel %vm984, %v497, %v791
        %v1029 = vsel %vm984, %v500, %v793
        %v1030 = vsel %vm984, %v502, %v795
        %v1031 = vsel %vm984, %v505, %v797
        %v1032 = vsel %vm984, %v507, %v799
        %v1033 = vsel %vm984, %v510, %v801
        %v1034 = vsel %vm984, %v512, %v803
        %v1035 = vsel %vm984, %v515, %v805
        %v1036 = vsel %vm984, %v517, %v807
        %v1037 = vsel %vm984, %v520, %v809
        %v1038 = vsel %vm984, %v522, %v811
        %v1039 = vsel %vm984, %v525, %v813
        %v1040 = vsel %vm984, %v527, %v815
        %v1041 = vsel %vm984, %v530, %v817
        %v1042 = vsel %vm984, %v532, %v819
        %v1043 = vsel %vm984, %v535, %v821
        %v1044 = vsel %vm984, %v537, %v823
        %v1045 = vsel %vm984, %v540, %v825
        %v1046 = vsel %vm984, %v542, %v827
        %v1047 = vsel %vm984, %v545, %v829
        %v1048 = vsel %vm984, %v547, %v831
        %v1049 = vsel %vm984, %v399, %v865
        %v1050 = vsel %vm984, %v401, %v867
        %v1051 = vsel %vm984, %v404, %v869
        %v1052 = vsel %vm984, %v406, %v871
        %v1053 = vsel %vm984, %v409, %v873
        %v1054 = vsel %vm984, %v411, %v875
        %v1055 = vsel %vm984, %v414, %v877
        %v1056 = vsel %vm984, %v416, %v879
        %v1057 = vsel %vm984, %v419, %v881
        %v1058 = vsel %vm984, %v421, %v883
        %v1059 = vsel %vm984, %v424, %v885
        %v1060 = vsel %vm984, %v426, %v887
        %v1061 = vsel %vm984, %v429, %v889
        %v1062 = vsel %vm984, %v431, %v891
        %v1063 = vsel %vm984, %v434, %v893
        %v1064 = vsel %vm984, %v436, %v895
        %v1065 = vsel %vm984, %v439, %v897
        %v1066 = vsel %vm984, %v441, %v899
        %v1067 = vsel %vm984, %v444, %v901
        %v1068 = vsel %vm984, %v446, %v903
        %v1069 = vsel %vm984, %v449, %v905
        %v1070 = vsel %vm984, %v451, %v907
        %v1071 = vsel %vm984, %v454, %v909
        %v1072 = vsel %vm984, %v456, %v911
        %v1073 = vsel %vm984, %v459, %v913
        %v1074 = vsel %vm984, %v461, %v915
        %v1075 = vsel %vm984, %v464, %v917
        %v1076 = vsel %vm984, %v466, %v919
        %v1077 = vsel %vm984, %v588, %v921
        %v1078 = vsel %vm984, %v590, %v923
        %v1079 = vsel %vm984, %v593, %v925
        %v1080 = vsel %vm984, %v595, %v927
        %v1081 = vsel %vm984, %v326, %v961
        %v1082 = vsel %vm984, %v327, %v963
        %v1083 = vsel %vm984, %v329, %v965
        %v1084 = vsel %vm984, %v330, %v967
        %v1085 = vsel %vm984, %v332, %v969
        %v1086 = vsel %vm984, %v333, %v971
        %v1087 = vsel %vm984, %v335, %v973
        %v1088 = vsel %vm984, %v336, %v975
        %v1089 = vpack.c.bf16 %v986, %v985
        %v1090 = vpack.c.bf16 %v1018, %v1017
        %v1091 = vpack.c.bf16 %v1050, %v1049
        %v1092 = vpack.c.bf16 %v994, %v993
        %v1093 = vpack.c.bf16 %v492, %v490
        %v1094 = vpack.c.bf16 %v988, %v987
        %v1095 = vpack.c.bf16 %v1020, %v1019
        %v1096 = vpack.c.bf16 %v1052, %v1051
        %v1097 = vpack.c.bf16 %v996, %v995
        %v1098 = vpack.c.bf16 %v497, %v495
        %v1099 = vpack.c.bf16 %v990, %v989
        %v1100 = vpack.c.bf16 %v1022, %v1021
        %v1101 = vpack.c.bf16 %v1054, %v1053
        %v1102 = vpack.c.bf16 %v998, %v997
        %v1103 = vpack.c.bf16 %v502, %v500
        %v1104 = vpack.c.bf16 %v992, %v991
        %v1105 = vpack.c.bf16 %v1024, %v1023
        %v1106 = vpack.c.bf16 %v1056, %v1055
        %v1107 = vpack.c.bf16 %v1000, %v999
        %v1108 = vpack.c.bf16 %v507, %v505
        %v1109 = vpack.c.bf16 %v1026, %v1025
        %v1110 = vpack.c.bf16 %v1058, %v1057
        %v1111 = vpack.c.bf16 %v1002, %v1001
        %v1112 = vpack.c.bf16 %v512, %v510
        %v1113 = vpack.c.bf16 %v1028, %v1027
        %v1114 = vpack.c.bf16 %v1060, %v1059
        %v1115 = vpack.c.bf16 %v1004, %v1003
        %v1116 = vpack.c.bf16 %v517, %v515
        %v1117 = vpack.c.bf16 %v1030, %v1029
        %v1118 = vpack.c.bf16 %v1062, %v1061
        %v1119 = vpack.c.bf16 %v1006, %v1005
        %v1120 = vpack.c.bf16 %v522, %v520
        %v1121 = vpack.c.bf16 %v1032, %v1031
        %v1122 = vpack.c.bf16 %v1064, %v1063
        %v1123 = vpack.c.bf16 %v1008, %v1007
        %v1124 = vpack.c.bf16 %v527, %v525
        %v1125 = vpack.c.bf16 %v1034, %v1033
        %v1126 = vpack.c.bf16 %v1066, %v1065
        %v1127 = vpack.c.bf16 %v1010, %v1009
        %v1128 = vpack.c.bf16 %v532, %v530
        %v1129 = vpack.c.bf16 %v1036, %v1035
        %v1130 = vpack.c.bf16 %v1068, %v1067
        %v1131 = vpack.c.bf16 %v1012, %v1011
        %v1132 = vpack.c.bf16 %v537, %v535
        %v1133 = vpack.c.bf16 %v1038, %v1037
        %v1134 = vpack.c.bf16 %v1070, %v1069
        %v1135 = vpack.c.bf16 %v1014, %v1013
        %v1136 = vpack.c.bf16 %v542, %v540
        %v1137 = vpack.c.bf16 %v1040, %v1039
        %v1138 = vpack.c.bf16 %v1072, %v1071
        %v1139 = vpack.c.bf16 %v1016, %v1015
        %v1140 = vpack.c.bf16 %v547, %v545
        %v1141 = vpack.c.bf16 %v1042, %v1041
        %v1142 = vpack.c.bf16 %v1074, %v1073
        %v1143 = vpack.c.bf16 %v1082, %v1081
        %v1144 = vpack.c.bf16 %v632, %v630
        %v1145 = vpack.c.bf16 %v1044, %v1043
        %v1146 = vpack.c.bf16 %v1076, %v1075
        %v1147 = vpack.c.bf16 %v1084, %v1083
        %v1148 = vpack.c.bf16 %v637, %v635
        %v1149 = vpack.c.bf16 %v1046, %v1045
        %v1150 = vpack.c.bf16 %v1078, %v1077
        %v1151 = vpack.c.bf16 %v1086, %v1085
        %v1152 = vpack.c.bf16 %v658, %v656
        %v1153 = vpack.c.bf16 %v1048, %v1047
        %v1154 = vpack.c.bf16 %v1080, %v1079
        %v1155 = vpack.c.bf16 %v1088, %v1087
        %v1156 = vpack.c.bf16 %v663, %v661
        %v1157 = vld [vmem:[%s1] sm:$0xf]
        %v1158 = vld [vmem:[%s1 + $0x4] sm:$0xf]
        %v1159 = vld [vmem:[%s1 + $0x8] sm:$0xf]
        %v1160 = vld [vmem:[%s1 + $0xc] sm:$0xf]
        %v1161 = vld [vmem:[%s1 + $0x10] sm:$0xf]
        %v1162 = vld [vmem:[%s1 + $0x14] sm:$0xf]
        %v1163 = vld [vmem:[%s1 + $0x18] sm:$0xf]
        %v1164 = vld [vmem:[%s1 + $0x1c] sm:$0xf]
        %v1165 = vld [vmem:[%s1 + $0x20] sm:$0xf]
        %v1166 = vld [vmem:[%s1 + $0x24] sm:$0xf]
        %v1167 = vld [vmem:[%s1 + $0x28] sm:$0xf]
        %v1168 = vld [vmem:[%s1 + $0x2c] sm:$0xf]
        %v1169 = vld [vmem:[%s1 + $0x30] sm:$0xf]
        %v1170 = vld [vmem:[%s1 + $0x34] sm:$0xf]
        %v1171 = vld [vmem:[%s1 + $0x38] sm:$0xf]
        %v1172 = vld [vmem:[%s1 + $0x3c] sm:$0xf]
        %v1173 = vld [vmem:[%s1 + $0x40] sm:$0xf]
        %v1174 = vld [vmem:[%s1 + $0x44] sm:$0xf]
        %v1175 = vld [vmem:[%s1 + $0x48] sm:$0xf]
        %v1176 = vld [vmem:[%s1 + $0x4c] sm:$0xf]
        %v1177 = vld [vmem:[%s1 + $0x50] sm:$0xf]
        %v1178 = vld [vmem:[%s1 + $0x54] sm:$0xf]
        %v1179 = vld [vmem:[%s1 + $0x58] sm:$0xf]
        %v1180 = vld [vmem:[%s1 + $0x5c] sm:$0xf]
        %v1181 = vld [vmem:[%s1 + $0x60] sm:$0xf]
        %v1182 = vld [vmem:[%s1 + $0x64] sm:$0xf]
        %v1183 = vld [vmem:[%s1 + $0x68] sm:$0xf]
        %v1184 = vld [vmem:[%s1 + $0x6c] sm:$0xf]
        %v1185 = vld [vmem:[%s1 + $0x70] sm:$0xf]
        %v1186 = vld [vmem:[%s1 + $0x74] sm:$0xf]
        %v1187 = vld [vmem:[%s1 + $0x78] sm:$0xf]
        %v1188 = vld [vmem:[%s1 + $0x7c] sm:$0xf]
        %v1189 = vld [vmem:[%s1 + $0x80] sm:$0xf]
        %v1190 = vld [vmem:[%s1 + $0x84] sm:$0xf]
        %v1191 = vld [vmem:[%s1 + $0x88] sm:$0xf]
        %v1192 = vld [vmem:[%s1 + $0x8c] sm:$0xf]
        %v1193 = vld [vmem:[%s1 + $0x90] sm:$0xf]
        %v1194 = vld [vmem:[%s1 + $0x94] sm:$0xf]
        %v1195 = vld [vmem:[%s1 + $0x98] sm:$0xf]
        %v1196 = vld [vmem:[%s1 + $0x9c] sm:$0xf]
        %v1197 = vld [vmem:[%s1 + $0xa0] sm:$0xf]
        %v1198 = vld [vmem:[%s1 + $0xa4] sm:$0xf]
        %v1199 = vld [vmem:[%s1 + $0xa8] sm:$0xf]
        %v1200 = vld [vmem:[%s1 + $0xac] sm:$0xf]
        %v1201 = vld [vmem:[%s1 + $0xb0] sm:$0xf]
        %v1202 = vld [vmem:[%s1 + $0xb4] sm:$0xf]
        %v1203 = vld [vmem:[%s1 + $0xb8] sm:$0xf]
        %v1204 = vld [vmem:[%s1 + $0xbc] sm:$0xf]
        %v1205 = vld [vmem:[%s1 + $0xc0] sm:$0xf]
        %v1206 = vld [vmem:[%s1 + $0xc4] sm:$0xf]
        %v1207 = vld [vmem:[%s1 + $0xc8] sm:$0xf]
        %v1208 = vld [vmem:[%s1 + $0xcc] sm:$0xf]
        %v1209 = vld [vmem:[%s1 + $0xd0] sm:$0xf]
        %v1210 = vld [vmem:[%s1 + $0xd4] sm:$0xf]
        %v1211 = vld [vmem:[%s1 + $0xd8] sm:$0xf]
        %v1212 = vld [vmem:[%s1 + $0xdc] sm:$0xf]
        %v1213 = vld [vmem:[%s1 + $0xe0] sm:$0xf]
        %v1214 = vld [vmem:[%s1 + $0xe4] sm:$0xf]
        %v1215 = vld [vmem:[%s1 + $0xe8] sm:$0xf]
        %v1216 = vld [vmem:[%s1 + $0xec] sm:$0xf]
        %v1217 = vld [vmem:[%s1 + $0xf0] sm:$0xf]
        %v1218 = vld [vmem:[%s1 + $0xf4] sm:$0xf]
        %v1219 = vld [vmem:[%s1 + $0xf8] sm:$0xf]
        %v1220 = vld [vmem:[%s1 + $0xfc] sm:$0xf]
        %v1221 = vld [vmem:[%s1 + $0x100] sm:$0xf]
        %v1222 = vld [vmem:[%s1 + $0x104] sm:$0xf]
        %v1223 = vld [vmem:[%s1 + $0x108] sm:$0xf]
        %v1224 = vld [vmem:[%s1 + $0x10c] sm:$0xf]
        %v1225 = vld [vmem:[%s1 + $0x110] sm:$0xf]
        %v1226 = vld [vmem:[%s1 + $0x114] sm:$0xf]
        %v1227 = vld [vmem:[%s1 + $0x118] sm:$0xf]
        %v1228 = vld [vmem:[%s1 + $0x11c] sm:$0xf]
        %v1301 = vunpack.c.l.b16 %v1157
        %v1302 = vunpack.c.l.b16 %v1158
        %v1303 = vunpack.c.l.b16 %v1159
        %v1304 = vunpack.c.l.b16 %v1160
        %v1305 = vunpack.c.l.b16 %v1161
        %v1306 = vunpack.c.l.b16 %v1162
        %v1307 = vunpack.c.l.b16 %v1163
        %v1308 = vunpack.c.l.b16 %v1164
        %v1309 = vunpack.c.l.b16 %v1165
        %v1310 = vunpack.c.l.b16 %v1166
        %v1311 = vunpack.c.l.b16 %v1167
        %v1312 = vunpack.c.l.b16 %v1168
        %v1313 = vunpack.c.l.b16 %v1169
        %v1314 = vunpack.c.l.b16 %v1170
        %v1315 = vunpack.c.l.b16 %v1171
        %v1316 = vunpack.c.l.b16 %v1172
        %v1317 = vunpack.c.l.b16 %v1173
        %v1318 = vunpack.c.l.b16 %v1174
        %v1319 = vunpack.c.l.b16 %v1175
        %v1320 = vunpack.c.l.b16 %v1176
        %v1321 = vunpack.c.l.b16 %v1177
        %v1322 = vunpack.c.l.b16 %v1178
        %v1323 = vunpack.c.l.b16 %v1179
        %v1324 = vunpack.c.l.b16 %v1180
        %v1325 = vunpack.c.l.b16 %v1181
        %v1326 = vunpack.c.l.b16 %v1182
        %v1327 = vunpack.c.l.b16 %v1183
        %v1328 = vunpack.c.l.b16 %v1184
        %v1329 = vunpack.c.l.b16 %v1185
        %v1330 = vunpack.c.l.b16 %v1186
        %v1331 = vunpack.c.l.b16 %v1187
        %v1332 = vunpack.c.l.b16 %v1188
        %v1333 = vunpack.c.l.b16 %v1189
        %v1334 = vunpack.c.l.b16 %v1190
        %v1335 = vunpack.c.l.b16 %v1191
        %v1336 = vunpack.c.l.b16 %v1192
        %v1337 = vunpack.c.l.b16 %v1193
        %v1338 = vunpack.c.l.b16 %v1194
        %v1339 = vunpack.c.l.b16 %v1195
        %v1340 = vunpack.c.l.b16 %v1196
        %v1341 = vunpack.c.l.b16 %v1197
        %v1342 = vunpack.c.l.b16 %v1198
        %v1343 = vunpack.c.l.b16 %v1199
        %v1344 = vunpack.c.l.b16 %v1200
        %v1345 = vunpack.c.l.b16 %v1201
        %v1346 = vunpack.c.l.b16 %v1202
        %v1347 = vunpack.c.l.b16 %v1203
        %v1348 = vunpack.c.l.b16 %v1204
        %v1349 = vunpack.c.l.b16 %v1205
        %v1350 = vunpack.c.l.b16 %v1206
        %v1351 = vunpack.c.l.b16 %v1207
        %v1352 = vunpack.c.l.b16 %v1208
        %v1353 = vunpack.c.l.b16 %v1209
        %v1354 = vunpack.c.l.b16 %v1210
        %v1355 = vunpack.c.l.b16 %v1211
        %v1356 = vunpack.c.l.b16 %v1212
        %v1357 = vunpack.c.l.b16 %v1213
        %v1358 = vunpack.c.l.b16 %v1214
        %v1359 = vunpack.c.l.b16 %v1215
        %v1360 = vunpack.c.l.b16 %v1216
        %v1361 = vunpack.c.l.b16 %v1217
        %v1362 = vunpack.c.l.b16 %v1218
        %v1363 = vunpack.c.l.b16 %v1219
        %v1364 = vunpack.c.l.b16 %v1220
        %v1365 = vunpack.c.l.b16 %v1221
        %v1366 = vunpack.c.l.b16 %v1222
        %v1367 = vunpack.c.l.b16 %v1223
        %v1368 = vunpack.c.l.b16 %v1224
        %v1369 = vunpack.c.l.b16 %v1225
        %v1370 = vunpack.c.l.b16 %v1226
        %v1371 = vunpack.c.l.b16 %v1227
        %v1372 = vunpack.c.l.b16 %v1228
        %v1373 = vpack.c.b16 %v1302, %v1301
        %v1374 = vpack.c.b16 %v1304, %v1303
        %v1375 = vpack.c.b16 %v1306, %v1305
        %v1376 = vpack.c.b16 %v1308, %v1307
        %v1377 = vpack.c.b16 %v1310, %v1309
        %v1378 = vpack.c.b16 %v1312, %v1311
        %v1379 = vpack.c.b16 %v1314, %v1313
        %v1380 = vpack.c.b16 %v1316, %v1315
        %v1381 = vpack.c.b16 %v1318, %v1317
        %v1382 = vpack.c.b16 %v1320, %v1319
        %v1383 = vpack.c.b16 %v1322, %v1321
        %v1384 = vpack.c.b16 %v1324, %v1323
        %v1385 = vpack.c.b16 %v1326, %v1325
        %v1386 = vpack.c.b16 %v1328, %v1327
        %v1387 = vpack.c.b16 %v1330, %v1329
        %v1388 = vpack.c.b16 %v1332, %v1331
        %v1389 = vpack.c.b16 %v1334, %v1333
        %v1390 = vpack.c.b16 %v1336, %v1335
        %v1391 = vpack.c.b16 %v1338, %v1337
        %v1392 = vpack.c.b16 %v1340, %v1339
        %v1393 = vpack.c.b16 %v1342, %v1341
        %v1394 = vpack.c.b16 %v1344, %v1343
        %v1395 = vpack.c.b16 %v1346, %v1345
        %v1396 = vpack.c.b16 %v1348, %v1347
        %v1397 = vpack.c.b16 %v1350, %v1349
        %v1398 = vpack.c.b16 %v1352, %v1351
        %v1399 = vpack.c.b16 %v1354, %v1353
        %v1400 = vpack.c.b16 %v1356, %v1355
        %v1401 = vpack.c.b16 %v1358, %v1357
        %v1402 = vpack.c.b16 %v1360, %v1359
        %v1403 = vpack.c.b16 %v1362, %v1361
        %v1404 = vpack.c.b16 %v1364, %v1363
        %v1405 = vpack.c.b16 %v1366, %v1365
        %v1406 = vpack.c.b16 %v1368, %v1367
        %v1407 = vpack.c.b16 %v1370, %v1369
        %v1408 = vpack.c.b16 %v1372, %v1371
        %v1446 = vsel %vm984, %v1093, 0
        %v1449 = vsel %vm984, %v1098, 0
        %v1452 = vsel %vm984, %v1103, 0
        %v1455 = vsel %vm984, %v1108, 0
        %v1458 = vsel %vm984, %v1112, 0
        %v1461 = vsel %vm984, %v1116, 0
        %v1464 = vsel %vm984, %v1120, 0
        %v1467 = vsel %vm984, %v1124, 0
        %v1470 = vsel %vm984, %v1128, 0
        %v1473 = vsel %vm984, %v1132, 0
        %v1476 = vsel %vm984, %v1136, 0
        %v1479 = vsel %vm984, %v1140, 0
        %v1482 = vsel %vm984, %v1144, 0
        %v1485 = vsel %vm984, %v1148, 0
        %v1488 = vsel %vm984, %v1152, 0
        %v1491 = vsel %vm984, %v1156, 0
        %1493 = vmatpush.bf16.msra.mxu0 %v1380
        %1494 = vmatpush.bf16.msra.mxu0 %v1379
        %1495 = vmatpush.bf16.msra.mxu0 %v1378
        %1496 = vmatpush.bf16.msra.mxu0 %v1377
        %1497 = vmatpush.bf16.msra.mxu0 %v1376
        %1498 = vmatpush.bf16.msra.mxu0 %v1375
        %1499 = vmatpush.bf16.msra.mxu0 %v1374
        %1500 = vmatpush.bf16.msra.mxu0 %v1373
        %1501 = vmatmul.bf16.gmra.mxu0 %v1089
        %v1502 = vpop.f32.mrf.mxu0
        %v1503 = vadd.f32 0.0, %v1502
        %v1504 = vpop.f32.mrf.mxu0
        %v1505 = vadd.f32 0.0, %v1504
        %1506 = vmatmul.bf16.gmra.mxu0 %v1094
        %v1507 = vpop.f32.mrf.mxu0
        %v1508 = vadd.f32 0.0, %v1507
        %v1509 = vpop.f32.mrf.mxu0
        %v1510 = vadd.f32 0.0, %v1509
        %1511 = vmatmul.bf16.gmra.mxu0 %v1099
        %v1512 = vpop.f32.mrf.mxu0
        %v1513 = vadd.f32 0.0, %v1512
        %v1514 = vpop.f32.mrf.mxu0
        %v1515 = vadd.f32 0.0, %v1514
        %1516 = vmatmul.bf16.gmra.mxu0 %v1104
        %v1517 = vpop.f32.mrf.mxu0
        %v1518 = vadd.f32 0.0, %v1517
        %v1519 = vpop.f32.mrf.mxu0
        %v1520 = vadd.f32 0.0, %v1519
        %1521 = vmatmul.bf16.gmra.mxu0 %v1092
        %v1522 = vpop.f32.mrf.mxu0
        %v1523 = vadd.f32 0.0, %v1522
        %v1524 = vpop.f32.mrf.mxu0
        %v1525 = vadd.f32 0.0, %v1524
        %1526 = vmatmul.bf16.gmra.mxu0 %v1097
        %v1527 = vpop.f32.mrf.mxu0
        %v1528 = vadd.f32 0.0, %v1527
        %v1529 = vpop.f32.mrf.mxu0
        %v1530 = vadd.f32 0.0, %v1529
        %1531 = vmatmul.bf16.gmra.mxu0 %v1102
        %v1532 = vpop.f32.mrf.mxu0
        %v1533 = vadd.f32 0.0, %v1532
        %v1534 = vpop.f32.mrf.mxu0
        %v1535 = vadd.f32 0.0, %v1534
        %1536 = vmatmul.bf16.gmra.mxu0 %v1107
        %v1537 = vpop.f32.mrf.mxu0
        %v1538 = vadd.f32 0.0, %v1537
        %v1539 = vpop.f32.mrf.mxu0
        %v1540 = vadd.f32 0.0, %v1539
        %1541 = vmatmul.bf16.gmra.mxu0 %v1111
        %v1542 = vpop.f32.mrf.mxu0
        %v1543 = vadd.f32 0.0, %v1542
        %v1544 = vpop.f32.mrf.mxu0
        %v1545 = vadd.f32 0.0, %v1544
        %1546 = vmatmul.bf16.gmra.mxu0 %v1115
        %v1547 = vpop.f32.mrf.mxu0
        %v1548 = vadd.f32 0.0, %v1547
        %v1549 = vpop.f32.mrf.mxu0
        %v1550 = vadd.f32 0.0, %v1549
        %1551 = vmatmul.bf16.gmra.mxu0 %v1119
        %v1552 = vpop.f32.mrf.mxu0
        %v1553 = vadd.f32 0.0, %v1552
        %v1554 = vpop.f32.mrf.mxu0
        %v1555 = vadd.f32 0.0, %v1554
        %1556 = vmatmul.bf16.gmra.mxu0 %v1123
        %v1557 = vpop.f32.mrf.mxu0
        %v1558 = vadd.f32 0.0, %v1557
        %v1559 = vpop.f32.mrf.mxu0
        %v1560 = vadd.f32 0.0, %v1559
        %1561 = vmatmul.bf16.gmra.mxu0 %v1127
        %v1562 = vpop.f32.mrf.mxu0
        %v1563 = vadd.f32 0.0, %v1562
        %v1564 = vpop.f32.mrf.mxu0
        %v1565 = vadd.f32 0.0, %v1564
        %1566 = vmatmul.bf16.gmra.mxu0 %v1131
        %v1567 = vpop.f32.mrf.mxu0
        %v1568 = vadd.f32 0.0, %v1567
        %v1569 = vpop.f32.mrf.mxu0
        %v1570 = vadd.f32 0.0, %v1569
        %1571 = vmatmul.bf16.gmra.mxu0 %v1135
        %v1572 = vpop.f32.mrf.mxu0
        %v1573 = vadd.f32 0.0, %v1572
        %v1574 = vpop.f32.mrf.mxu0
        %v1575 = vadd.f32 0.0, %v1574
        %1576 = vmatmul.bf16.gmra.mxu0 %v1139
        %v1577 = vpop.f32.mrf.mxu0
        %v1578 = vadd.f32 0.0, %v1577
        %v1579 = vpop.f32.mrf.mxu0
        %v1580 = vadd.f32 0.0, %v1579
        %1581 = vdwg.mxu0
        %1582 = vmatpush.bf16.msra.mxu0 %v1388
        %1583 = vmatpush.bf16.msra.mxu0 %v1387
        %1584 = vmatpush.bf16.msra.mxu0 %v1386
        %1585 = vmatpush.bf16.msra.mxu0 %v1385
        %1586 = vmatpush.bf16.msra.mxu0 %v1384
        %1587 = vmatpush.bf16.msra.mxu0 %v1383
        %1588 = vmatpush.bf16.msra.mxu0 %v1382
        %1589 = vmatpush.bf16.msra.mxu0 %v1381
        %1590 = vmatmul.bf16.gmra.mxu0 %v1090
        %v1591 = vpop.f32.mrf.mxu0
        %v1592 = vadd.f32 %v1503, %v1591
        %v1593 = vpop.f32.mrf.mxu0
        %v1594 = vadd.f32 %v1505, %v1593
        %1595 = vmatmul.bf16.gmra.mxu0 %v1095
        %v1596 = vpop.f32.mrf.mxu0
        %v1597 = vadd.f32 %v1508, %v1596
        %v1598 = vpop.f32.mrf.mxu0
        %v1599 = vadd.f32 %v1510, %v1598
        %1600 = vmatmul.bf16.gmra.mxu0 %v1100
        %v1601 = vpop.f32.mrf.mxu0
        %v1602 = vadd.f32 %v1513, %v1601
        %v1603 = vpop.f32.mrf.mxu0
        %v1604 = vadd.f32 %v1515, %v1603
        %1605 = vmatmul.bf16.gmra.mxu0 %v1105
        %v1606 = vpop.f32.mrf.mxu0
        %v1607 = vadd.f32 %v1518, %v1606
        %v1608 = vpop.f32.mrf.mxu0
        %v1609 = vadd.f32 %v1520, %v1608
        %1610 = vmatmul.bf16.gmra.mxu0 %v1109
        %v1611 = vpop.f32.mrf.mxu0
        %v1612 = vadd.f32 %v1523, %v1611
        %v1613 = vpop.f32.mrf.mxu0
        %v1614 = vadd.f32 %v1525, %v1613
        %1615 = vmatmul.bf16.gmra.mxu0 %v1113
        %v1616 = vpop.f32.mrf.mxu0
        %v1617 = vadd.f32 %v1528, %v1616
        %v1618 = vpop.f32.mrf.mxu0
        %v1619 = vadd.f32 %v1530, %v1618
        %1620 = vmatmul.bf16.gmra.mxu0 %v1117
        %v1621 = vpop.f32.mrf.mxu0
        %v1622 = vadd.f32 %v1533, %v1621
        %v1623 = vpop.f32.mrf.mxu0
        %v1624 = vadd.f32 %v1535, %v1623
        %1625 = vmatmul.bf16.gmra.mxu0 %v1121
        %v1626 = vpop.f32.mrf.mxu0
        %v1627 = vadd.f32 %v1538, %v1626
        %v1628 = vpop.f32.mrf.mxu0
        %v1629 = vadd.f32 %v1540, %v1628
        %1630 = vmatmul.bf16.gmra.mxu0 %v1125
        %v1631 = vpop.f32.mrf.mxu0
        %v1632 = vadd.f32 %v1543, %v1631
        %v1633 = vpop.f32.mrf.mxu0
        %v1634 = vadd.f32 %v1545, %v1633
        %1635 = vmatmul.bf16.gmra.mxu0 %v1129
        %v1636 = vpop.f32.mrf.mxu0
        %v1637 = vadd.f32 %v1548, %v1636
        %v1638 = vpop.f32.mrf.mxu0
        %v1639 = vadd.f32 %v1550, %v1638
        %1640 = vmatmul.bf16.gmra.mxu0 %v1133
        %v1641 = vpop.f32.mrf.mxu0
        %v1642 = vadd.f32 %v1553, %v1641
        %v1643 = vpop.f32.mrf.mxu0
        %v1644 = vadd.f32 %v1555, %v1643
        %1645 = vmatmul.bf16.gmra.mxu0 %v1137
        %v1646 = vpop.f32.mrf.mxu0
        %v1647 = vadd.f32 %v1558, %v1646
        %v1648 = vpop.f32.mrf.mxu0
        %v1649 = vadd.f32 %v1560, %v1648
        %1650 = vmatmul.bf16.gmra.mxu0 %v1141
        %v1651 = vpop.f32.mrf.mxu0
        %v1652 = vadd.f32 %v1563, %v1651
        %v1653 = vpop.f32.mrf.mxu0
        %v1654 = vadd.f32 %v1565, %v1653
        %1655 = vmatmul.bf16.gmra.mxu0 %v1145
        %v1656 = vpop.f32.mrf.mxu0
        %v1657 = vadd.f32 %v1568, %v1656
        %v1658 = vpop.f32.mrf.mxu0
        %v1659 = vadd.f32 %v1570, %v1658
        %1660 = vmatmul.bf16.gmra.mxu0 %v1149
        %v1661 = vpop.f32.mrf.mxu0
        %v1662 = vadd.f32 %v1573, %v1661
        %v1663 = vpop.f32.mrf.mxu0
        %v1664 = vadd.f32 %v1575, %v1663
        %1665 = vmatmul.bf16.gmra.mxu0 %v1153
        %v1666 = vpop.f32.mrf.mxu0
        %v1667 = vadd.f32 %v1578, %v1666
        %v1668 = vpop.f32.mrf.mxu0
        %v1669 = vadd.f32 %v1580, %v1668
        %1670 = vdwg.mxu0
        %1671 = vmatpush.bf16.msra.mxu0 %v1396
        %1672 = vmatpush.bf16.msra.mxu0 %v1395
        %1673 = vmatpush.bf16.msra.mxu0 %v1394
        %1674 = vmatpush.bf16.msra.mxu0 %v1393
        %1675 = vmatpush.bf16.msra.mxu0 %v1392
        %1676 = vmatpush.bf16.msra.mxu0 %v1391
        %1677 = vmatpush.bf16.msra.mxu0 %v1390
        %1678 = vmatpush.bf16.msra.mxu0 %v1389
        %1679 = vmatmul.bf16.gmra.mxu0 %v1091
        %v1680 = vpop.f32.mrf.mxu0
        %v1681 = vadd.f32 %v1592, %v1680
        %v1682 = vpop.f32.mrf.mxu0
        %v1683 = vadd.f32 %v1594, %v1682
        %1684 = vmatmul.bf16.gmra.mxu0 %v1096
        %v1685 = vpop.f32.mrf.mxu0
        %v1686 = vadd.f32 %v1597, %v1685
        %v1687 = vpop.f32.mrf.mxu0
        %v1688 = vadd.f32 %v1599, %v1687
        %1689 = vmatmul.bf16.gmra.mxu0 %v1101
        %v1690 = vpop.f32.mrf.mxu0
        %v1691 = vadd.f32 %v1602, %v1690
        %v1692 = vpop.f32.mrf.mxu0
        %v1693 = vadd.f32 %v1604, %v1692
        %1694 = vmatmul.bf16.gmra.mxu0 %v1106
        %v1695 = vpop.f32.mrf.mxu0
        %v1696 = vadd.f32 %v1607, %v1695
        %v1697 = vpop.f32.mrf.mxu0
        %v1698 = vadd.f32 %v1609, %v1697
        %1699 = vmatmul.bf16.gmra.mxu0 %v1110
        %v1700 = vpop.f32.mrf.mxu0
        %v1701 = vadd.f32 %v1612, %v1700
        %v1702 = vpop.f32.mrf.mxu0
        %v1703 = vadd.f32 %v1614, %v1702
        %1704 = vmatmul.bf16.gmra.mxu0 %v1114
        %v1705 = vpop.f32.mrf.mxu0
        %v1706 = vadd.f32 %v1617, %v1705
        %v1707 = vpop.f32.mrf.mxu0
        %v1708 = vadd.f32 %v1619, %v1707
        %1709 = vmatmul.bf16.gmra.mxu0 %v1118
        %v1710 = vpop.f32.mrf.mxu0
        %v1711 = vadd.f32 %v1622, %v1710
        %v1712 = vpop.f32.mrf.mxu0
        %v1713 = vadd.f32 %v1624, %v1712
        %1714 = vmatmul.bf16.gmra.mxu0 %v1122
        %v1715 = vpop.f32.mrf.mxu0
        %v1716 = vadd.f32 %v1627, %v1715
        %v1717 = vpop.f32.mrf.mxu0
        %v1718 = vadd.f32 %v1629, %v1717
        %1719 = vmatmul.bf16.gmra.mxu0 %v1126
        %v1720 = vpop.f32.mrf.mxu0
        %v1721 = vadd.f32 %v1632, %v1720
        %v1722 = vpop.f32.mrf.mxu0
        %v1723 = vadd.f32 %v1634, %v1722
        %1724 = vmatmul.bf16.gmra.mxu0 %v1130
        %v1725 = vpop.f32.mrf.mxu0
        %v1726 = vadd.f32 %v1637, %v1725
        %v1727 = vpop.f32.mrf.mxu0
        %v1728 = vadd.f32 %v1639, %v1727
        %1729 = vmatmul.bf16.gmra.mxu0 %v1134
        %v1730 = vpop.f32.mrf.mxu0
        %v1731 = vadd.f32 %v1642, %v1730
        %v1732 = vpop.f32.mrf.mxu0
        %v1733 = vadd.f32 %v1644, %v1732
        %1734 = vmatmul.bf16.gmra.mxu0 %v1138
        %v1735 = vpop.f32.mrf.mxu0
        %v1736 = vadd.f32 %v1647, %v1735
        %v1737 = vpop.f32.mrf.mxu0
        %v1738 = vadd.f32 %v1649, %v1737
        %1739 = vmatmul.bf16.gmra.mxu0 %v1142
        %v1740 = vpop.f32.mrf.mxu0
        %v1741 = vadd.f32 %v1652, %v1740
        %v1742 = vpop.f32.mrf.mxu0
        %v1743 = vadd.f32 %v1654, %v1742
        %1744 = vmatmul.bf16.gmra.mxu0 %v1146
        %v1745 = vpop.f32.mrf.mxu0
        %v1746 = vadd.f32 %v1657, %v1745
        %v1747 = vpop.f32.mrf.mxu0
        %v1748 = vadd.f32 %v1659, %v1747
        %1749 = vmatmul.bf16.gmra.mxu0 %v1150
        %v1750 = vpop.f32.mrf.mxu0
        %v1751 = vadd.f32 %v1662, %v1750
        %v1752 = vpop.f32.mrf.mxu0
        %v1753 = vadd.f32 %v1664, %v1752
        %1754 = vmatmul.bf16.gmra.mxu0 %v1154
        %v1755 = vpop.f32.mrf.mxu0
        %v1756 = vadd.f32 %v1667, %v1755
        %v1757 = vpop.f32.mrf.mxu0
        %v1758 = vadd.f32 %v1669, %v1757
        %1759 = vdwg.mxu0
        %1760 = vmatpush.bf16.msra.mxu0 %v1404
        %1761 = vmatpush.bf16.msra.mxu0 %v1403
        %1762 = vmatpush.bf16.msra.mxu0 %v1402
        %1763 = vmatpush.bf16.msra.mxu0 %v1401
        %1764 = vmatpush.bf16.msra.mxu0 %v1400
        %1765 = vmatpush.bf16.msra.mxu0 %v1399
        %1766 = vmatpush.bf16.msra.mxu0 %v1398
        %1767 = vmatpush.bf16.msra.mxu0 %v1397
        %1768 = vmatmul.bf16.gmra.mxu0 %v1092
        %v1769 = vpop.f32.mrf.mxu0
        %v1770 = vadd.f32 %v1681, %v1769
        %v1771 = vpop.f32.mrf.mxu0
        %v1772 = vadd.f32 %v1683, %v1771
        %1773 = vmatmul.bf16.gmra.mxu0 %v1097
        %v1774 = vpop.f32.mrf.mxu0
        %v1775 = vadd.f32 %v1686, %v1774
        %v1776 = vpop.f32.mrf.mxu0
        %v1777 = vadd.f32 %v1688, %v1776
        %1778 = vmatmul.bf16.gmra.mxu0 %v1102
        %v1779 = vpop.f32.mrf.mxu0
        %v1780 = vadd.f32 %v1691, %v1779
        %v1781 = vpop.f32.mrf.mxu0
        %v1782 = vadd.f32 %v1693, %v1781
        %1783 = vmatmul.bf16.gmra.mxu0 %v1107
        %v1784 = vpop.f32.mrf.mxu0
        %v1785 = vadd.f32 %v1696, %v1784
        %v1786 = vpop.f32.mrf.mxu0
        %v1787 = vadd.f32 %v1698, %v1786
        %1788 = vmatmul.bf16.gmra.mxu0 %v1111
        %v1789 = vpop.f32.mrf.mxu0
        %v1790 = vadd.f32 %v1701, %v1789
        %v1791 = vpop.f32.mrf.mxu0
        %v1792 = vadd.f32 %v1703, %v1791
        %1793 = vmatmul.bf16.gmra.mxu0 %v1115
        %v1794 = vpop.f32.mrf.mxu0
        %v1795 = vadd.f32 %v1706, %v1794
        %v1796 = vpop.f32.mrf.mxu0
        %v1797 = vadd.f32 %v1708, %v1796
        %1798 = vmatmul.bf16.gmra.mxu0 %v1119
        %v1799 = vpop.f32.mrf.mxu0
        %v1800 = vadd.f32 %v1711, %v1799
        %v1801 = vpop.f32.mrf.mxu0
        %v1802 = vadd.f32 %v1713, %v1801
        %1803 = vmatmul.bf16.gmra.mxu0 %v1123
        %v1804 = vpop.f32.mrf.mxu0
        %v1805 = vadd.f32 %v1716, %v1804
        %v1806 = vpop.f32.mrf.mxu0
        %v1807 = vadd.f32 %v1718, %v1806
        %1808 = vmatmul.bf16.gmra.mxu0 %v1127
        %v1809 = vpop.f32.mrf.mxu0
        %v1810 = vadd.f32 %v1721, %v1809
        %v1811 = vpop.f32.mrf.mxu0
        %v1812 = vadd.f32 %v1723, %v1811
        %1813 = vmatmul.bf16.gmra.mxu0 %v1131
        %v1814 = vpop.f32.mrf.mxu0
        %v1815 = vadd.f32 %v1726, %v1814
        %v1816 = vpop.f32.mrf.mxu0
        %v1817 = vadd.f32 %v1728, %v1816
        %1818 = vmatmul.bf16.gmra.mxu0 %v1135
        %v1819 = vpop.f32.mrf.mxu0
        %v1820 = vadd.f32 %v1731, %v1819
        %v1821 = vpop.f32.mrf.mxu0
        %v1822 = vadd.f32 %v1733, %v1821
        %1823 = vmatmul.bf16.gmra.mxu0 %v1139
        %v1824 = vpop.f32.mrf.mxu0
        %v1825 = vadd.f32 %v1736, %v1824
        %v1826 = vpop.f32.mrf.mxu0
        %v1827 = vadd.f32 %v1738, %v1826
        %1828 = vmatmul.bf16.gmra.mxu0 %v1143
        %v1829 = vpop.f32.mrf.mxu0
        %v1830 = vadd.f32 %v1741, %v1829
        %v1831 = vpop.f32.mrf.mxu0
        %v1832 = vadd.f32 %v1743, %v1831
        %1833 = vmatmul.bf16.gmra.mxu0 %v1147
        %v1834 = vpop.f32.mrf.mxu0
        %v1835 = vadd.f32 %v1746, %v1834
        %v1836 = vpop.f32.mrf.mxu0
        %v1837 = vadd.f32 %v1748, %v1836
        %1838 = vmatmul.bf16.gmra.mxu0 %v1151
        %v1839 = vpop.f32.mrf.mxu0
        %v1840 = vadd.f32 %v1751, %v1839
        %v1841 = vpop.f32.mrf.mxu0
        %v1842 = vadd.f32 %v1753, %v1841
        %1843 = vmatmul.bf16.gmra.mxu0 %v1155
        %v1844 = vpop.f32.mrf.mxu0
        %v1845 = vadd.f32 %v1756, %v1844
        %v1846 = vpop.f32.mrf.mxu0
        %v1847 = vadd.f32 %v1758, %v1846
        %1848 = vdwg.mxu0
        %1849 = vmatpush.bf16.msra.mxu0 0
        %1850 = vmatpush.bf16.msra.mxu0 0
        %1851 = vmatpush.bf16.msra.mxu0 0
        %1852 = vmatpush.bf16.msra.mxu0 0
        %1853 = vmatpush.bf16.msra.mxu0 %v1408
        %1854 = vmatpush.bf16.msra.mxu0 %v1407
        %1855 = vmatpush.bf16.msra.mxu0 %v1406
        %1856 = vmatpush.bf16.msra.mxu0 %v1405
        %1857 = vmatmul.bf16.gmra.mxu0 %v1446
        %v1858 = vpop.f32.mrf.mxu0
        %v1859 = vadd.f32 %v1770, %v1858
        %v1860 = vpop.f32.mrf.mxu0
        %v1861 = vadd.f32 %v1772, %v1860
        %1862 = vmatmul.bf16.gmra.mxu0 %v1449
        %v1863 = vpop.f32.mrf.mxu0
        %v1864 = vadd.f32 %v1775, %v1863
        %v1865 = vpop.f32.mrf.mxu0
        %v1866 = vadd.f32 %v1777, %v1865
        %1867 = vmatmul.bf16.gmra.mxu0 %v1452
        %v1868 = vpop.f32.mrf.mxu0
        %v1869 = vadd.f32 %v1780, %v1868
        %v1870 = vpop.f32.mrf.mxu0
        %v1871 = vadd.f32 %v1782, %v1870
        %1872 = vmatmul.bf16.gmra.mxu0 %v1455
        %v1873 = vpop.f32.mrf.mxu0
        %v1874 = vadd.f32 %v1785, %v1873
        %v1875 = vpop.f32.mrf.mxu0
        %v1876 = vadd.f32 %v1787, %v1875
        %1877 = vmatmul.bf16.gmra.mxu0 %v1458
        %v1878 = vpop.f32.mrf.mxu0
        %v1879 = vadd.f32 %v1790, %v1878
        %v1880 = vpop.f32.mrf.mxu0
        %v1881 = vadd.f32 %v1792, %v1880
        %1882 = vmatmul.bf16.gmra.mxu0 %v1461
        %v1883 = vpop.f32.mrf.mxu0
        %v1884 = vadd.f32 %v1795, %v1883
        %v1885 = vpop.f32.mrf.mxu0
        %v1886 = vadd.f32 %v1797, %v1885
        %1887 = vmatmul.bf16.gmra.mxu0 %v1464
        %v1888 = vpop.f32.mrf.mxu0
        %v1889 = vadd.f32 %v1800, %v1888
        %v1890 = vpop.f32.mrf.mxu0
        %v1891 = vadd.f32 %v1802, %v1890
        %1892 = vmatmul.bf16.gmra.mxu0 %v1467
        %v1893 = vpop.f32.mrf.mxu0
        %v1894 = vadd.f32 %v1805, %v1893
        %v1895 = vpop.f32.mrf.mxu0
        %v1896 = vadd.f32 %v1807, %v1895
        %1897 = vmatmul.bf16.gmra.mxu0 %v1470
        %v1898 = vpop.f32.mrf.mxu0
        %v1899 = vadd.f32 %v1810, %v1898
        %v1900 = vpop.f32.mrf.mxu0
        %v1901 = vadd.f32 %v1812, %v1900
        %1902 = vmatmul.bf16.gmra.mxu0 %v1473
        %v1903 = vpop.f32.mrf.mxu0
        %v1904 = vadd.f32 %v1815, %v1903
        %v1905 = vpop.f32.mrf.mxu0
        %v1906 = vadd.f32 %v1817, %v1905
        %1907 = vmatmul.bf16.gmra.mxu0 %v1476
        %v1908 = vpop.f32.mrf.mxu0
        %v1909 = vadd.f32 %v1820, %v1908
        %v1910 = vpop.f32.mrf.mxu0
        %v1911 = vadd.f32 %v1822, %v1910
        %1912 = vmatmul.bf16.gmra.mxu0 %v1479
        %v1913 = vpop.f32.mrf.mxu0
        %v1914 = vadd.f32 %v1825, %v1913
        %v1915 = vpop.f32.mrf.mxu0
        %v1916 = vadd.f32 %v1827, %v1915
        %1917 = vmatmul.bf16.gmra.mxu0 %v1482
        %v1918 = vpop.f32.mrf.mxu0
        %v1919 = vadd.f32 %v1830, %v1918
        %v1920 = vpop.f32.mrf.mxu0
        %v1921 = vadd.f32 %v1832, %v1920
        %1922 = vmatmul.bf16.gmra.mxu0 %v1485
        %v1923 = vpop.f32.mrf.mxu0
        %v1924 = vadd.f32 %v1835, %v1923
        %v1925 = vpop.f32.mrf.mxu0
        %v1926 = vadd.f32 %v1837, %v1925
        %1927 = vmatmul.bf16.gmra.mxu0 %v1488
        %v1928 = vpop.f32.mrf.mxu0
        %v1929 = vadd.f32 %v1840, %v1928
        %v1930 = vpop.f32.mrf.mxu0
        %v1931 = vadd.f32 %v1842, %v1930
        %1932 = vmatmul.bf16.gmra.mxu0 %v1491
        %v1933 = vpop.f32.mrf.mxu0
        %v1934 = vadd.f32 %v1845, %v1933
        %v1935 = vpop.f32.mrf.mxu0
        %v1936 = vadd.f32 %v1847, %v1935
        %1937 = vdwg.mxu0
        %v1938 = vld [vmem:[%s3] sm:$0x1]
        %v1940 = vperm.slane %v1938, 0
        %v1942 = vmul.f32 %v1859, %v1940
        %v1943 = vmul.f32 %v1861, %v1940
        %v1944 = vmul.f32 %v1864, %v1940
        %v1945 = vmul.f32 %v1866, %v1940
        %v1946 = vmul.f32 %v1869, %v1940
        %v1947 = vmul.f32 %v1871, %v1940
        %v1948 = vmul.f32 %v1874, %v1940
        %v1949 = vmul.f32 %v1876, %v1940
        %v1950 = vmul.f32 %v1879, %v1940
        %v1951 = vmul.f32 %v1881, %v1940
        %v1952 = vmul.f32 %v1884, %v1940
        %v1953 = vmul.f32 %v1886, %v1940
        %v1954 = vmul.f32 %v1889, %v1940
        %v1955 = vmul.f32 %v1891, %v1940
        %v1956 = vmul.f32 %v1894, %v1940
        %v1957 = vmul.f32 %v1896, %v1940
        %v1958 = vmul.f32 %v1899, %v1940
        %v1959 = vmul.f32 %v1901, %v1940
        %v1960 = vmul.f32 %v1904, %v1940
        %v1961 = vmul.f32 %v1906, %v1940
        %v1962 = vmul.f32 %v1909, %v1940
        %v1963 = vmul.f32 %v1911, %v1940
        %v1964 = vmul.f32 %v1914, %v1940
        %v1965 = vmul.f32 %v1916, %v1940
        %v1966 = vmul.f32 %v1919, %v1940
        %v1967 = vmul.f32 %v1921, %v1940
        %v1968 = vmul.f32 %v1924, %v1940
        %v1969 = vmul.f32 %v1926, %v1940
        %v1970 = vmul.f32 %v1929, %v1940
        %v1971 = vmul.f32 %v1931, %v1940
        %v1972 = vmul.f32 %v1934, %v1940
        %v1973 = vmul.f32 %v1936, %v1940
        %v1974 = vld [vmem:[%s4] sm:$0x1]
        %v1976 = vperm.slane %v1974, 0
        %v1978 = vadd.f32 %v1942, %v1976
        %v1979 = vadd.f32 %v1943, %v1976
        %v1980 = vadd.f32 %v1944, %v1976
        %v1981 = vadd.f32 %v1945, %v1976
        %v1982 = vadd.f32 %v1946, %v1976
        %v1983 = vadd.f32 %v1947, %v1976
        %v1984 = vadd.f32 %v1948, %v1976
        %v1985 = vadd.f32 %v1949, %v1976
        %v1986 = vadd.f32 %v1950, %v1976
        %v1987 = vadd.f32 %v1951, %v1976
        %v1988 = vadd.f32 %v1952, %v1976
        %v1989 = vadd.f32 %v1953, %v1976
        %v1990 = vadd.f32 %v1954, %v1976
        %v1991 = vadd.f32 %v1955, %v1976
        %v1992 = vadd.f32 %v1956, %v1976
        %v1993 = vadd.f32 %v1957, %v1976
        %v1994 = vadd.f32 %v1958, %v1976
        %v1995 = vadd.f32 %v1959, %v1976
        %v1996 = vadd.f32 %v1960, %v1976
        %v1997 = vadd.f32 %v1961, %v1976
        %v1998 = vadd.f32 %v1962, %v1976
        %v1999 = vadd.f32 %v1963, %v1976
        %v2000 = vadd.f32 %v1964, %v1976
        %v2001 = vadd.f32 %v1965, %v1976
        %v2002 = vadd.f32 %v1966, %v1976
        %v2003 = vadd.f32 %v1967, %v1976
        %v2004 = vadd.f32 %v1968, %v1976
        %v2005 = vadd.f32 %v1969, %v1976
        %v2006 = vadd.f32 %v1970, %v1976
        %v2007 = vadd.f32 %v1971, %v1976
        %v2008 = vadd.f32 %v1972, %v1976
        %v2009 = vadd.f32 %v1973, %v1976
        %v2010 = vmax.f32 %v1978, 0.0
        %v2011 = vmax.f32 %v1979, 0.0
        %v2012 = vmax.f32 %v1980, 0.0
        %v2013 = vmax.f32 %v1981, 0.0
        %v2014 = vmax.f32 %v1982, 0.0
        %v2015 = vmax.f32 %v1983, 0.0
        %v2016 = vmax.f32 %v1984, 0.0
        %v2017 = vmax.f32 %v1985, 0.0
        %v2018 = vmax.f32 %v1986, 0.0
        %v2019 = vmax.f32 %v1987, 0.0
        %v2020 = vmax.f32 %v1988, 0.0
        %v2021 = vmax.f32 %v1989, 0.0
        %v2022 = vmax.f32 %v1990, 0.0
        %v2023 = vmax.f32 %v1991, 0.0
        %v2024 = vmax.f32 %v1992, 0.0
        %v2025 = vmax.f32 %v1993, 0.0
        %v2026 = vmax.f32 %v1994, 0.0
        %v2027 = vmax.f32 %v1995, 0.0
        %v2028 = vmax.f32 %v1996, 0.0
        %v2029 = vmax.f32 %v1997, 0.0
        %v2030 = vmax.f32 %v1998, 0.0
        %v2031 = vmax.f32 %v1999, 0.0
        %v2032 = vmax.f32 %v2000, 0.0
        %v2033 = vmax.f32 %v2001, 0.0
        %v2034 = vmax.f32 %v2002, 0.0
        %v2035 = vmax.f32 %v2003, 0.0
        %v2036 = vmax.f32 %v2004, 0.0
        %v2037 = vmax.f32 %v2005, 0.0
        %v2038 = vmax.f32 %v2006, 0.0
        %v2039 = vmax.f32 %v2007, 0.0
        %v2040 = vmax.f32 %v2008, 0.0
        %v2041 = vmax.f32 %v2009, 0.0
        %2042 = vst.msk [vmem:[#allocation2] sm:$0xff] %vm984, 0.0
        %2043 = vst.msk [vmem:[#allocation2 + $0x8] sm:$0xff] %vm984, 0.0
        %vm2044 = vcmask 519168
        %2045 = vst.msk [vmem:[#allocation2 + $0x10] sm:$0xf] %vm2044, 0.0
        %2046 = vst.msk [vmem:[#allocation2 + $0x18] sm:$0xff] %vm984, 0.0
        %2047 = vst.msk [vmem:[#allocation2 + $0x20] sm:$0xff] %vm984, 0.0
        %2048 = vst.msk [vmem:[#allocation2 + $0x28] sm:$0xf] %vm2044, 0.0
        %2049 = vst.msk [vmem:[#allocation2 + $0x30] sm:$0xff] %vm984, 0.0
        %2050 = vst.msk [vmem:[#allocation2 + $0x38] sm:$0xff] %vm984, 0.0
        %2051 = vst.msk [vmem:[#allocation2 + $0x40] sm:$0xf] %vm2044, 0.0
        %2052 = vst.msk [vmem:[#allocation2 + $0x48] sm:$0xff] %vm984, 0.0
        %2053 = vst.msk [vmem:[#allocation2 + $0x50] sm:$0xff] %vm984, 0.0
        %2054 = vst.msk [vmem:[#allocation2 + $0x58] sm:$0xf] %vm2044, 0.0
        %2055 = vst.msk [vmem:[#allocation2 + $0x60] sm:$0xff] %vm984, 0.0
        %2056 = vst.msk [vmem:[#allocation2 + $0x68] sm:$0xff] %vm984, 0.0
        %2057 = vst.msk [vmem:[#allocation2 + $0x70] sm:$0xf] %vm2044, 0.0
        %2058 = vst.msk [vmem:[#allocation2 + $0x78] sm:$0xff] %vm984, 0.0
        %2059 = vst.msk [vmem:[#allocation2 + $0x80] sm:$0xff] %vm984, 0.0
        %2060 = vst.msk [vmem:[#allocation2 + $0x88] sm:$0xf] %vm2044, 0.0
        %2061 = vst.msk [vmem:[#allocation2 + $0x90] sm:$0xff] %vm984, 0.0
        %2062 = vst.msk [vmem:[#allocation2 + $0x98] sm:$0xff] %vm984, 0.0
        %2063 = vst.msk [vmem:[#allocation2 + $0xa0] sm:$0xf] %vm2044, 0.0
        %2064 = vst.msk [vmem:[#allocation2 + $0xa8] sm:$0xff] %vm984, 0.0
        %2065 = vst.msk [vmem:[#allocation2 + $0xb0] sm:$0xff] %vm984, 0.0
        %2066 = vst.msk [vmem:[#allocation2 + $0xb8] sm:$0xf] %vm2044, 0.0
        %2067 = vst.msk [vmem:[#allocation2 + $0xc0] sm:$0xff] %vm984, 0.0
        %2068 = vst.msk [vmem:[#allocation2 + $0xc8] sm:$0xff] %vm984, 0.0
        %2069 = vst.msk [vmem:[#allocation2 + $0xd0] sm:$0xf] %vm2044, 0.0
        %2070 = vst.msk [vmem:[#allocation2 + $0xd8] sm:$0xff] %vm984, 0.0
        %2071 = vst.msk [vmem:[#allocation2 + $0xe0] sm:$0xff] %vm984, 0.0
        %2072 = vst.msk [vmem:[#allocation2 + $0xe8] sm:$0xf] %vm2044, 0.0
        %2073 = vst.msk [vmem:[#allocation2 + $0xf0] sm:$0xff] %vm984, 0.0
        %2074 = vst.msk [vmem:[#allocation2 + $0xf8] sm:$0xff] %vm984, 0.0
        %2075 = vst.msk [vmem:[#allocation2 + $0x100] sm:$0xf] %vm2044, 0.0
        %2076 = vst.msk [vmem:[#allocation2 + $0x108] sm:$0xff] %vm984, 0.0
        %2077 = vst.msk [vmem:[#allocation2 + $0x110] sm:$0xff] %vm984, 0.0
        %2078 = vst.msk [vmem:[#allocation2 + $0x118] sm:$0xf] %vm2044, 0.0
        %2079 = vst.msk [vmem:[#allocation2 + $0x120] sm:$0xff] %vm984, 0.0
        %2080 = vst.msk [vmem:[#allocation2 + $0x128] sm:$0xff] %vm984, 0.0
        %2081 = vst.msk [vmem:[#allocation2 + $0x130] sm:$0xf] %vm2044, 0.0
        %2082 = vst.msk [vmem:[#allocation2 + $0x138] sm:$0xff] %vm984, 0.0
        %2083 = vst.msk [vmem:[#allocation2 + $0x140] sm:$0xff] %vm984, 0.0
        %2084 = vst.msk [vmem:[#allocation2 + $0x148] sm:$0xf] %vm2044, 0.0
        %2085 = vst.msk [vmem:[#allocation2 + $0x150] sm:$0xff] %vm984, 0.0
        %2086 = vst.msk [vmem:[#allocation2 + $0x158] sm:$0xff] %vm984, 0.0
        %2087 = vst.msk [vmem:[#allocation2 + $0x160] sm:$0xf] %vm2044, 0.0
        %2088 = vst.msk [vmem:[#allocation2 + $0x168] sm:$0xff] %vm984, 0.0
        %2089 = vst.msk [vmem:[#allocation2 + $0x170] sm:$0xff] %vm984, 0.0
        %2090 = vst.msk [vmem:[#allocation2 + $0x178] sm:$0xf] %vm2044, 0.0
        %2091 = vst.msk [vmem:[#allocation2 + $0x180] sm:$0xff] %vm984, 0.0
        %2092 = vst.msk [vmem:[#allocation2 + $0x188] sm:$0xff] %vm984, 0.0
        %2093 = vst.msk [vmem:[#allocation2 + $0x190] sm:$0xf] %vm2044, 0.0
        %2094 = vst.msk [vmem:[#allocation2 + $0x198] sm:$0xff] %vm984, 0.0
        %2095 = vst.msk [vmem:[#allocation2 + $0x1a0] sm:$0xff] %vm984, 0.0
        %2096 = vst.msk [vmem:[#allocation2 + $0x1a8] sm:$0xf] %vm2044, 0.0
        %2097 = vst.msk [vmem:[#allocation2 + $0x1b0] sm:$0xff] %vm984, 0.0
        %2098 = vst.msk [vmem:[#allocation2 + $0x1b8] sm:$0xff] %vm984, 0.0
        %2099 = vst.msk [vmem:[#allocation2 + $0x1c0] sm:$0xf] %vm2044, 0.0
        %2100 = vst.msk [vmem:[#allocation2 + $0x1c8] sm:$0xff] %vm984, 0.0
        %2101 = vst.msk [vmem:[#allocation2 + $0x1d0] sm:$0xff] %vm984, 0.0
        %2102 = vst.msk [vmem:[#allocation2 + $0x1d8] sm:$0xf] %vm2044, 0.0
        %s2103 = scalar_lea.vmem [#allocation2], 48
        %2104 = vst.msk [vmem:[%s2103 + $0x2] sm:$0xff] %vm984, %v2010
        %2105 = vst.msk [vmem:[%s2103 + $0xa] sm:$0xff] %vm984, %v2011
        %2106 = vst.msk [vmem:[%s2103 + $0x1a] sm:$0xff] %vm984, %v2012
        %2107 = vst.msk [vmem:[%s2103 + $0x22] sm:$0xff] %vm984, %v2013
        %2108 = vst.msk [vmem:[%s2103 + $0x32] sm:$0xff] %vm984, %v2014
        %2109 = vst.msk [vmem:[%s2103 + $0x3a] sm:$0xff] %vm984, %v2015
        %2110 = vst.msk [vmem:[%s2103 + $0x4a] sm:$0xff] %vm984, %v2016
        %2111 = vst.msk [vmem:[%s2103 + $0x52] sm:$0xff] %vm984, %v2017
        %2112 = vst.msk [vmem:[%s2103 + $0x62] sm:$0xff] %vm984, %v2018
        %2113 = vst.msk [vmem:[%s2103 + $0x6a] sm:$0xff] %vm984, %v2019
        %2114 = vst.msk [vmem:[%s2103 + $0x7a] sm:$0xff] %vm984, %v2020
        %2115 = vst.msk [vmem:[%s2103 + $0x82] sm:$0xff] %vm984, %v2021
        %2116 = vst.msk [vmem:[%s2103 + $0x92] sm:$0xff] %vm984, %v2022
        %2117 = vst.msk [vmem:[%s2103 + $0x9a] sm:$0xff] %vm984, %v2023
        %2118 = vst.msk [vmem:[%s2103 + $0xaa] sm:$0xff] %vm984, %v2024
        %2119 = vst.msk [vmem:[%s2103 + $0xb2] sm:$0xff] %vm984, %v2025
        %2120 = vst.msk [vmem:[%s2103 + $0xc2] sm:$0xff] %vm984, %v2026
        %2121 = vst.msk [vmem:[%s2103 + $0xca] sm:$0xff] %vm984, %v2027
        %2122 = vst.msk [vmem:[%s2103 + $0xda] sm:$0xff] %vm984, %v2028
        %2123 = vst.msk [vmem:[%s2103 + $0xe2] sm:$0xff] %vm984, %v2029
        %2124 = vst.msk [vmem:[%s2103 + $0xf2] sm:$0xff] %vm984, %v2030
        %2125 = vst.msk [vmem:[%s2103 + $0xfa] sm:$0xff] %vm984, %v2031
        %2126 = vst.msk [vmem:[%s2103 + $0x10a] sm:$0xff] %vm984, %v2032
        %2127 = vst.msk [vmem:[%s2103 + $0x112] sm:$0xff] %vm984, %v2033
        %2128 = vst.msk [vmem:[%s2103 + $0x122] sm:$0xff] %vm984, %v2034
        %2129 = vst.msk [vmem:[%s2103 + $0x12a] sm:$0xff] %vm984, %v2035
        %2130 = vst.msk [vmem:[%s2103 + $0x13a] sm:$0xff] %vm984, %v2036
        %2131 = vst.msk [vmem:[%s2103 + $0x142] sm:$0xff] %vm984, %v2037
        %2132 = vst.msk [vmem:[%s2103 + $0x152] sm:$0xff] %vm984, %v2038
        %2133 = vst.msk [vmem:[%s2103 + $0x15a] sm:$0xff] %vm984, %v2039
        %2134 = vst.msk [vmem:[%s2103 + $0x16a] sm:$0xff] %vm984, %v2040
        %2135 = vst.msk [vmem:[%s2103 + $0x172] sm:$0xff] %vm984, %v2041
        %v2136 = vld [vmem:[#allocation2] sm:$0xff]
        %v2137 = vld [vmem:[#allocation2 + $0x8] sm:$0xff]
        %v2138 = vld [vmem:[#allocation2 + $0x10] sm:$0xf]
        %v2139 = vld [vmem:[#allocation2 + $0x18] sm:$0xff]
        %v2140 = vld [vmem:[#allocation2 + $0x20] sm:$0xff]
        %v2141 = vld [vmem:[#allocation2 + $0x28] sm:$0xf]
        %v2142 = vld [vmem:[#allocation2 + $0x30] sm:$0xff]
        %v2143 = vld [vmem:[#allocation2 + $0x38] sm:$0xff]
        %v2144 = vld [vmem:[#allocation2 + $0x40] sm:$0xf]
        %v2145 = vld [vmem:[#allocation2 + $0x48] sm:$0xff]
        %v2146 = vld [vmem:[#allocation2 + $0x50] sm:$0xff]
        %v2147 = vld [vmem:[#allocation2 + $0x58] sm:$0xf]
        %v2148 = vld [vmem:[#allocation2 + $0x60] sm:$0xff]
        %v2149 = vld [vmem:[#allocation2 + $0x68] sm:$0xff]
        %v2150 = vld [vmem:[#allocation2 + $0x70] sm:$0xf]
        %v2151 = vld [vmem:[#allocation2 + $0x78] sm:$0xff]
        %v2152 = vld [vmem:[#allocation2 + $0x80] sm:$0xff]
        %v2153 = vld [vmem:[#allocation2 + $0x88] sm:$0xf]
        %v2154 = vld [vmem:[#allocation2 + $0x90] sm:$0xff]
        %v2155 = vld [vmem:[#allocation2 + $0x98] sm:$0xff]
        %v2156 = vld [vmem:[#allocation2 + $0xa0] sm:$0xf]
        %v2157 = vld [vmem:[#allocation2 + $0xa8] sm:$0xff]
        %v2158 = vld [vmem:[#allocation2 + $0xb0] sm:$0xff]
        %v2159 = vld [vmem:[#allocation2 + $0xb8] sm:$0xf]
        %v2160 = vld [vmem:[#allocation2 + $0xc0] sm:$0xff]
        %v2161 = vld [vmem:[#allocation2 + $0xc8] sm:$0xff]
        %v2162 = vld [vmem:[#allocation2 + $0xd0] sm:$0xf]
        %v2163 = vld [vmem:[#allocation2 + $0xd8] sm:$0xff]
        %v2164 = vld [vmem:[#allocation2 + $0xe0] sm:$0xff]
        %v2165 = vld [vmem:[#allocation2 + $0xe8] sm:$0xf]
        %v2166 = vld [vmem:[#allocation2 + $0xf0] sm:$0xff]
        %v2167 = vld [vmem:[#allocation2 + $0xf8] sm:$0xff]
        %v2168 = vld [vmem:[#allocation2 + $0x100] sm:$0xf]
        %v2169 = vld [vmem:[#allocation2 + $0x108] sm:$0xff]
        %v2170 = vld [vmem:[#allocation2 + $0x110] sm:$0xff]
        %v2171 = vld [vmem:[#allocation2 + $0x118] sm:$0xf]
        %v2172 = vld [vmem:[#allocation2 + $0x120] sm:$0xff]
        %v2173 = vld [vmem:[#allocation2 + $0x128] sm:$0xff]
        %v2174 = vld [vmem:[#allocation2 + $0x130] sm:$0xf]
        %v2175 = vld [vmem:[#allocation2 + $0x138] sm:$0xff]
        %v2176 = vld [vmem:[#allocation2 + $0x140] sm:$0xff]
        %v2177 = vld [vmem:[#allocation2 + $0x148] sm:$0xf]
        %v2178 = vld [vmem:[#allocation2 + $0x150] sm:$0xff]
        %v2179 = vld [vmem:[#allocation2 + $0x158] sm:$0xff]
        %v2180 = vld [vmem:[#allocation2 + $0x160] sm:$0xf]
        %v2181 = vld [vmem:[#allocation2 + $0x168] sm:$0xff]
        %v2182 = vld [vmem:[#allocation2 + $0x170] sm:$0xff]
        %v2183 = vld [vmem:[#allocation2 + $0x178] sm:$0xf]
        %v2184 = vld [vmem:[#allocation2 + $0x180] sm:$0xff]
        %v2185 = vld [vmem:[#allocation2 + $0x188] sm:$0xff]
        %v2186 = vld [vmem:[#allocation2 + $0x190] sm:$0xf]
        %v2187 = vld [vmem:[#allocation2 + $0x198] sm:$0xff]
        %v2188 = vld [vmem:[#allocation2 + $0x1a0] sm:$0xff]
        %v2189 = vld [vmem:[#allocation2 + $0x1a8] sm:$0xf]
        %v2190 = vld [vmem:[#allocation2 + $0x1b0] sm:$0xff]
        %v2191 = vld [vmem:[#allocation2 + $0x1b8] sm:$0xff]
        %v2192 = vld [vmem:[#allocation2 + $0x1c0] sm:$0xf]
        %v2193 = vld [vmem:[#allocation2 + $0x1c8] sm:$0xff]
        %v2194 = vld [vmem:[#allocation2 + $0x1d0] sm:$0xff]
        %v2195 = vld [vmem:[#allocation2 + $0x1d8] sm:$0xf]
        %v2244 = vrot.slane %v2136, 2
        %v2245 = vrot.slane %v2137, 2
        %v2246 = vsel %vm386, %v2244, %v2245
        %v2247 = vrot.slane %v2138, 2
        %v2248 = vsel %vm386, %v2245, %v2247
        %v2249 = vrot.slane %v2139, 2
        %v2250 = vrot.slane %v2140, 2
        %v2251 = vsel %vm386, %v2249, %v2250
        %v2252 = vrot.slane %v2141, 2
        %v2253 = vsel %vm386, %v2250, %v2252
        %v2254 = vrot.slane %v2142, 2
        %v2255 = vrot.slane %v2143, 2
        %v2256 = vsel %vm386, %v2254, %v2255
        %v2257 = vrot.slane %v2144, 2
        %v2258 = vsel %vm386, %v2255, %v2257
        %v2259 = vrot.slane %v2145, 2
        %v2260 = vrot.slane %v2146, 2
        %v2261 = vsel %vm386, %v2259, %v2260
        %v2262 = vrot.slane %v2147, 2
        %v2263 = vsel %vm386, %v2260, %v2262
        %v2264 = vrot.slane %v2148, 2
        %v2265 = vrot.slane %v2149, 2
        %v2266 = vsel %vm386, %v2264, %v2265
        %v2267 = vrot.slane %v2150, 2
        %v2268 = vsel %vm386, %v2265, %v2267
        %v2269 = vrot.slane %v2151, 2
        %v2270 = vrot.slane %v2152, 2
        %v2271 = vsel %vm386, %v2269, %v2270
        %v2272 = vrot.slane %v2153, 2
        %v2273 = vsel %vm386, %v2270, %v2272
        %v2274 = vrot.slane %v2154, 2
        %v2275 = vrot.slane %v2155, 2
        %v2276 = vsel %vm386, %v2274, %v2275
        %v2277 = vrot.slane %v2156, 2
        %v2278 = vsel %vm386, %v2275, %v2277
        %v2279 = vrot.slane %v2157, 2
        %v2280 = vrot.slane %v2158, 2
        %v2281 = vsel %vm386, %v2279, %v2280
        %v2282 = vrot.slane %v2159, 2
        %v2283 = vsel %vm386, %v2280, %v2282
        %v2284 = vrot.slane %v2160, 2
        %v2285 = vrot.slane %v2161, 2
        %v2286 = vsel %vm386, %v2284, %v2285
        %v2287 = vrot.slane %v2162, 2
        %v2288 = vsel %vm386, %v2285, %v2287
        %v2289 = vrot.slane %v2163, 2
        %v2290 = vrot.slane %v2164, 2
        %v2291 = vsel %vm386, %v2289, %v2290
        %v2292 = vrot.slane %v2165, 2
        %v2293 = vsel %vm386, %v2290, %v2292
        %v2294 = vrot.slane %v2166, 2
        %v2295 = vrot.slane %v2167, 2
        %v2296 = vsel %vm386, %v2294, %v2295
        %v2297 = vrot.slane %v2168, 2
        %v2298 = vsel %vm386, %v2295, %v2297
        %v2299 = vrot.slane %v2169, 2
        %v2300 = vrot.slane %v2170, 2
        %v2301 = vsel %vm386, %v2299, %v2300
        %v2302 = vrot.slane %v2171, 2
        %v2303 = vsel %vm386, %v2300, %v2302
        %v2304 = vrot.slane %v2172, 2
        %v2305 = vrot.slane %v2173, 2
        %v2306 = vsel %vm386, %v2304, %v2305
        %v2307 = vrot.slane %v2174, 2
        %v2308 = vsel %vm386, %v2305, %v2307
        %v2309 = vrot.slane %v2175, 2
        %v2310 = vrot.slane %v2176, 2
        %v2311 = vsel %vm386, %v2309, %v2310
        %v2312 = vrot.slane %v2177, 2
        %v2313 = vsel %vm386, %v2310, %v2312
        %v2314 = vrot.slane %v2178, 2
        %v2315 = vrot.slane %v2179, 2
        %v2316 = vsel %vm386, %v2314, %v2315
        %v2317 = vrot.slane %v2180, 2
        %v2318 = vsel %vm386, %v2315, %v2317
        %v2319 = vrot.slane %v2181, 2
        %v2320 = vrot.slane %v2182, 2
        %v2321 = vsel %vm386, %v2319, %v2320
        %v2322 = vrot.slane %v2183, 2
        %v2323 = vsel %vm386, %v2320, %v2322
        %v2324 = vrot.slane %v2136, 4
        %v2325 = vrot.slane %v2137, 4
        %v2326 = vsel %vm467, %v2324, %v2325
        %v2327 = vrot.slane %v2138, 4
        %v2328 = vsel %vm467, %v2325, %v2327
        %v2329 = vrot.slane %v2139, 4
        %v2330 = vrot.slane %v2140, 4
        %v2331 = vsel %vm467, %v2329, %v2330
        %v2332 = vrot.slane %v2141, 4
        %v2333 = vsel %vm467, %v2330, %v2332
        %v2334 = vrot.slane %v2142, 4
        %v2335 = vrot.slane %v2143, 4
        %v2336 = vsel %vm467, %v2334, %v2335
        %v2337 = vrot.slane %v2144, 4
        %v2338 = vsel %vm467, %v2335, %v2337
        %v2339 = vrot.slane %v2145, 4
        %v2340 = vrot.slane %v2146, 4
        %v2341 = vsel %vm467, %v2339, %v2340
        %v2342 = vrot.slane %v2147, 4
        %v2343 = vsel %vm467, %v2340, %v2342
        %v2344 = vrot.slane %v2148, 4
        %v2345 = vrot.slane %v2149, 4
        %v2346 = vsel %vm467, %v2344, %v2345
        %v2347 = vrot.slane %v2150, 4
        %v2348 = vsel %vm467, %v2345, %v2347
        %v2349 = vrot.slane %v2151, 4
        %v2350 = vrot.slane %v2152, 4
        %v2351 = vsel %vm467, %v2349, %v2350
        %v2352 = vrot.slane %v2153, 4
        %v2353 = vsel %vm467, %v2350, %v2352
        %v2354 = vrot.slane %v2154, 4
        %v2355 = vrot.slane %v2155, 4
        %v2356 = vsel %vm467, %v2354, %v2355
        %v2357 = vrot.slane %v2156, 4
        %v2358 = vsel %vm467, %v2355, %v2357
        %v2359 = vrot.slane %v2157, 4
        %v2360 = vrot.slane %v2158, 4
        %v2361 = vsel %vm467, %v2359, %v2360
        %v2362 = vrot.slane %v2159, 4
        %v2363 = vsel %vm467, %v2360, %v2362
        %v2364 = vrot.slane %v2160, 4
        %v2365 = vrot.slane %v2161, 4
        %v2366 = vsel %vm467, %v2364, %v2365
        %v2367 = vrot.slane %v2162, 4
        %v2368 = vsel %vm467, %v2365, %v2367
        %v2369 = vrot.slane %v2163, 4
        %v2370 = vrot.slane %v2164, 4
        %v2371 = vsel %vm467, %v2369, %v2370
        %v2372 = vrot.slane %v2165, 4
        %v2373 = vsel %vm467, %v2370, %v2372
        %v2374 = vrot.slane %v2166, 4
        %v2375 = vrot.slane %v2167, 4
        %v2376 = vsel %vm467, %v2374, %v2375
        %v2377 = vrot.slane %v2168, 4
        %v2378 = vsel %vm467, %v2375, %v2377
        %v2379 = vrot.slane %v2169, 4
        %v2380 = vrot.slane %v2170, 4
        %v2381 = vsel %vm467, %v2379, %v2380
        %v2382 = vrot.slane %v2171, 4
        %v2383 = vsel %vm467, %v2380, %v2382
        %v2384 = vrot.slane %v2172, 4
        %v2385 = vrot.slane %v2173, 4
        %v2386 = vsel %vm467, %v2384, %v2385
        %v2387 = vrot.slane %v2174, 4
        %v2388 = vsel %vm467, %v2385, %v2387
        %v2389 = vrot.slane %v2175, 4
        %v2390 = vrot.slane %v2176, 4
        %v2391 = vsel %vm467, %v2389, %v2390
        %v2392 = vrot.slane %v2177, 4
        %v2393 = vsel %vm467, %v2390, %v2392
        %v2394 = vrot.slane %v2178, 4
        %v2395 = vrot.slane %v2179, 4
        %v2396 = vsel %vm467, %v2394, %v2395
        %v2397 = vrot.slane %v2180, 4
        %v2398 = vsel %vm467, %v2395, %v2397
        %v2399 = vrot.slane %v2181, 4
        %v2400 = vrot.slane %v2182, 4
        %v2401 = vsel %vm467, %v2399, %v2400
        %v2402 = vrot.slane %v2183, 4
        %v2403 = vsel %vm467, %v2400, %v2402
        %v2442 = vrot.slane %v2184, 2
        %v2443 = vrot.slane %v2185, 2
        %v2444 = vsel %vm386, %v2442, %v2443
        %v2445 = vrot.slane %v2186, 2
        %v2446 = vsel %vm386, %v2443, %v2445
        %v2447 = vrot.slane %v2187, 2
        %v2448 = vrot.slane %v2188, 2
        %v2449 = vsel %vm386, %v2447, %v2448
        %v2450 = vrot.slane %v2189, 2
        %v2451 = vsel %vm386, %v2448, %v2450
        %v2484 = vrot.slane %v2184, 4
        %v2485 = vrot.slane %v2185, 4
        %v2486 = vsel %vm467, %v2484, %v2485
        %v2487 = vrot.slane %v2186, 4
        %v2488 = vsel %vm467, %v2485, %v2487
        %v2489 = vrot.slane %v2187, 4
        %v2490 = vrot.slane %v2188, 4
        %v2491 = vsel %vm467, %v2489, %v2490
        %v2492 = vrot.slane %v2189, 4
        %v2493 = vsel %vm467, %v2490, %v2492
        %v2500 = vrot.slane %v2190, 2
        %v2501 = vrot.slane %v2191, 2
        %v2502 = vsel %vm386, %v2500, %v2501
        %v2503 = vrot.slane %v2192, 2
        %v2504 = vsel %vm386, %v2501, %v2503
        %v2505 = vrot.slane %v2193, 2
        %v2506 = vrot.slane %v2194, 2
        %v2507 = vsel %vm386, %v2505, %v2506
        %v2508 = vrot.slane %v2195, 2
        %v2509 = vsel %vm386, %v2506, %v2508
        %v2510 = vrot.slane %v2190, 4
        %v2511 = vrot.slane %v2191, 4
        %v2512 = vsel %vm467, %v2510, %v2511
        %v2513 = vrot.slane %v2192, 4
        %v2514 = vsel %vm467, %v2511, %v2513
        %v2515 = vrot.slane %v2193, 4
        %v2516 = vrot.slane %v2194, 4
        %v2517 = vsel %vm467, %v2515, %v2516
        %v2518 = vrot.slane %v2195, 4
        %v2519 = vsel %vm467, %v2516, %v2518
        %2528 = vrot.lane.b32.xlu0 %v2246, 64
        %v2529 = vpop.permute.xlu0 %2528
        %2530 = vrot.lane.b32.xlu0 %v2248, 64
        %v2531 = vpop.permute.xlu0 %2530
        %2532 = vrot.lane.b32.xlu0 %v2251, 64
        %v2533 = vpop.permute.xlu0 %2532
        %2534 = vrot.lane.b32.xlu0 %v2253, 64
        %v2535 = vpop.permute.xlu0 %2534
        %2536 = vrot.lane.b32.xlu0 %v2256, 64
        %v2537 = vpop.permute.xlu0 %2536
        %2538 = vrot.lane.b32.xlu0 %v2258, 64
        %v2539 = vpop.permute.xlu0 %2538
        %2540 = vrot.lane.b32.xlu0 %v2261, 64
        %v2541 = vpop.permute.xlu0 %2540
        %2542 = vrot.lane.b32.xlu0 %v2263, 64
        %v2543 = vpop.permute.xlu0 %2542
        %2544 = vrot.lane.b32.xlu0 %v2266, 64
        %v2545 = vpop.permute.xlu0 %2544
        %2546 = vrot.lane.b32.xlu0 %v2268, 64
        %v2547 = vpop.permute.xlu0 %2546
        %2548 = vrot.lane.b32.xlu0 %v2271, 64
        %v2549 = vpop.permute.xlu0 %2548
        %2550 = vrot.lane.b32.xlu0 %v2273, 64
        %v2551 = vpop.permute.xlu0 %2550
        %2552 = vrot.lane.b32.xlu0 %v2276, 64
        %v2553 = vpop.permute.xlu0 %2552
        %2554 = vrot.lane.b32.xlu0 %v2278, 64
        %v2555 = vpop.permute.xlu0 %2554
        %2556 = vrot.lane.b32.xlu0 %v2281, 64
        %v2557 = vpop.permute.xlu0 %2556
        %2558 = vrot.lane.b32.xlu0 %v2283, 64
        %v2559 = vpop.permute.xlu0 %2558
        %2560 = vrot.lane.b32.xlu0 %v2286, 64
        %v2561 = vpop.permute.xlu0 %2560
        %2562 = vrot.lane.b32.xlu0 %v2288, 64
        %v2563 = vpop.permute.xlu0 %2562
        %2564 = vrot.lane.b32.xlu0 %v2291, 64
        %v2565 = vpop.permute.xlu0 %2564
        %2566 = vrot.lane.b32.xlu0 %v2293, 64
        %v2567 = vpop.permute.xlu0 %2566
        %2568 = vrot.lane.b32.xlu0 %v2296, 64
        %v2569 = vpop.permute.xlu0 %2568
        %2570 = vrot.lane.b32.xlu0 %v2298, 64
        %v2571 = vpop.permute.xlu0 %2570
        %2572 = vrot.lane.b32.xlu0 %v2301, 64
        %v2573 = vpop.permute.xlu0 %2572
        %2574 = vrot.lane.b32.xlu0 %v2303, 64
        %v2575 = vpop.permute.xlu0 %2574
        %2576 = vrot.lane.b32.xlu0 %v2306, 64
        %v2577 = vpop.permute.xlu0 %2576
        %2578 = vrot.lane.b32.xlu0 %v2308, 64
        %v2579 = vpop.permute.xlu0 %2578
        %2580 = vrot.lane.b32.xlu0 %v2311, 64
        %v2581 = vpop.permute.xlu0 %2580
        %2582 = vrot.lane.b32.xlu0 %v2313, 64
        %v2583 = vpop.permute.xlu0 %2582
        %2584 = vrot.lane.b32.xlu0 %v2316, 64
        %v2585 = vpop.permute.xlu0 %2584
        %2586 = vrot.lane.b32.xlu0 %v2318, 64
        %v2587 = vpop.permute.xlu0 %2586
        %2588 = vrot.lane.b32.xlu0 %v2321, 64
        %v2589 = vpop.permute.xlu0 %2588
        %2590 = vrot.lane.b32.xlu0 %v2323, 64
        %v2591 = vpop.permute.xlu0 %2590
        %2624 = vrot.lane.b32.xlu0 %v2142, 64
        %v2625 = vpop.permute.xlu0 %2624
        %2626 = vrot.lane.b32.xlu0 %v2143, 64
        %v2627 = vpop.permute.xlu0 %2626
        %2628 = vrot.lane.b32.xlu0 %v2145, 64
        %v2629 = vpop.permute.xlu0 %2628
        %2630 = vrot.lane.b32.xlu0 %v2146, 64
        %v2631 = vpop.permute.xlu0 %2630
        %2632 = vrot.lane.b32.xlu0 %v2148, 64
        %v2633 = vpop.permute.xlu0 %2632
        %2634 = vrot.lane.b32.xlu0 %v2149, 64
        %v2635 = vpop.permute.xlu0 %2634
        %2636 = vrot.lane.b32.xlu0 %v2151, 64
        %v2637 = vpop.permute.xlu0 %2636
        %2638 = vrot.lane.b32.xlu0 %v2152, 64
        %v2639 = vpop.permute.xlu0 %2638
        %2640 = vrot.lane.b32.xlu0 %v2154, 64
        %v2641 = vpop.permute.xlu0 %2640
        %2642 = vrot.lane.b32.xlu0 %v2155, 64
        %v2643 = vpop.permute.xlu0 %2642
        %2644 = vrot.lane.b32.xlu0 %v2157, 64
        %v2645 = vpop.permute.xlu0 %2644
        %2646 = vrot.lane.b32.xlu0 %v2158, 64
        %v2647 = vpop.permute.xlu0 %2646
        %2648 = vrot.lane.b32.xlu0 %v2160, 64
        %v2649 = vpop.permute.xlu0 %2648
        %2650 = vrot.lane.b32.xlu0 %v2161, 64
        %v2651 = vpop.permute.xlu0 %2650
        %2652 = vrot.lane.b32.xlu0 %v2163, 64
        %v2653 = vpop.permute.xlu0 %2652
        %2654 = vrot.lane.b32.xlu0 %v2164, 64
        %v2655 = vpop.permute.xlu0 %2654
        %2656 = vrot.lane.b32.xlu0 %v2166, 64
        %v2657 = vpop.permute.xlu0 %2656
        %2658 = vrot.lane.b32.xlu0 %v2167, 64
        %v2659 = vpop.permute.xlu0 %2658
        %2660 = vrot.lane.b32.xlu0 %v2169, 64
        %v2661 = vpop.permute.xlu0 %2660
        %2662 = vrot.lane.b32.xlu0 %v2170, 64
        %v2663 = vpop.permute.xlu0 %2662
        %2664 = vrot.lane.b32.xlu0 %v2172, 64
        %v2665 = vpop.permute.xlu0 %2664
        %2666 = vrot.lane.b32.xlu0 %v2173, 64
        %v2667 = vpop.permute.xlu0 %2666
        %2668 = vrot.lane.b32.xlu0 %v2175, 64
        %v2669 = vpop.permute.xlu0 %2668
        %2670 = vrot.lane.b32.xlu0 %v2176, 64
        %v2671 = vpop.permute.xlu0 %2670
        %2672 = vrot.lane.b32.xlu0 %v2178, 64
        %v2673 = vpop.permute.xlu0 %2672
        %2674 = vrot.lane.b32.xlu0 %v2179, 64
        %v2675 = vpop.permute.xlu0 %2674
        %2676 = vrot.lane.b32.xlu0 %v2181, 64
        %v2677 = vpop.permute.xlu0 %2676
        %2678 = vrot.lane.b32.xlu0 %v2182, 64
        %v2679 = vpop.permute.xlu0 %2678
        %2680 = vrot.lane.b32.xlu0 %v2184, 64
        %v2681 = vpop.permute.xlu0 %2680
        %2682 = vrot.lane.b32.xlu0 %v2185, 64
        %v2683 = vpop.permute.xlu0 %2682
        %2684 = vrot.lane.b32.xlu0 %v2187, 64
        %v2685 = vpop.permute.xlu0 %2684
        %2686 = vrot.lane.b32.xlu0 %v2188, 64
        %v2687 = vpop.permute.xlu0 %2686
        %2720 = vrot.lane.b32.xlu0 %v2336, 64
        %v2721 = vpop.permute.xlu0 %2720
        %2722 = vrot.lane.b32.xlu0 %v2338, 64
        %v2723 = vpop.permute.xlu0 %2722
        %2724 = vrot.lane.b32.xlu0 %v2341, 64
        %v2725 = vpop.permute.xlu0 %2724
        %2726 = vrot.lane.b32.xlu0 %v2343, 64
        %v2727 = vpop.permute.xlu0 %2726
        %2728 = vrot.lane.b32.xlu0 %v2346, 64
        %v2729 = vpop.permute.xlu0 %2728
        %2730 = vrot.lane.b32.xlu0 %v2348, 64
        %v2731 = vpop.permute.xlu0 %2730
        %2732 = vrot.lane.b32.xlu0 %v2351, 64
        %v2733 = vpop.permute.xlu0 %2732
        %2734 = vrot.lane.b32.xlu0 %v2353, 64
        %v2735 = vpop.permute.xlu0 %2734
        %2736 = vrot.lane.b32.xlu0 %v2356, 64
        %v2737 = vpop.permute.xlu0 %2736
        %2738 = vrot.lane.b32.xlu0 %v2358, 64
        %v2739 = vpop.permute.xlu0 %2738
        %2740 = vrot.lane.b32.xlu0 %v2361, 64
        %v2741 = vpop.permute.xlu0 %2740
        %2742 = vrot.lane.b32.xlu0 %v2363, 64
        %v2743 = vpop.permute.xlu0 %2742
        %2744 = vrot.lane.b32.xlu0 %v2366, 64
        %v2745 = vpop.permute.xlu0 %2744
        %2746 = vrot.lane.b32.xlu0 %v2368, 64
        %v2747 = vpop.permute.xlu0 %2746
        %2748 = vrot.lane.b32.xlu0 %v2371, 64
        %v2749 = vpop.permute.xlu0 %2748
        %2750 = vrot.lane.b32.xlu0 %v2373, 64
        %v2751 = vpop.permute.xlu0 %2750
        %2752 = vrot.lane.b32.xlu0 %v2376, 64
        %v2753 = vpop.permute.xlu0 %2752
        %2754 = vrot.lane.b32.xlu0 %v2378, 64
        %v2755 = vpop.permute.xlu0 %2754
        %2756 = vrot.lane.b32.xlu0 %v2381, 64
        %v2757 = vpop.permute.xlu0 %2756
        %2758 = vrot.lane.b32.xlu0 %v2383, 64
        %v2759 = vpop.permute.xlu0 %2758
        %2760 = vrot.lane.b32.xlu0 %v2386, 64
        %v2761 = vpop.permute.xlu0 %2760
        %2762 = vrot.lane.b32.xlu0 %v2388, 64
        %v2763 = vpop.permute.xlu0 %2762
        %2764 = vrot.lane.b32.xlu0 %v2391, 64
        %v2765 = vpop.permute.xlu0 %2764
        %2766 = vrot.lane.b32.xlu0 %v2393, 64
        %v2767 = vpop.permute.xlu0 %2766
        %2768 = vrot.lane.b32.xlu0 %v2396, 64
        %v2769 = vpop.permute.xlu0 %2768
        %2770 = vrot.lane.b32.xlu0 %v2398, 64
        %v2771 = vpop.permute.xlu0 %2770
        %2772 = vrot.lane.b32.xlu0 %v2401, 64
        %v2773 = vpop.permute.xlu0 %2772
        %2774 = vrot.lane.b32.xlu0 %v2403, 64
        %v2775 = vpop.permute.xlu0 %2774
        %2776 = vrot.lane.b32.xlu0 %v2486, 64
        %v2777 = vpop.permute.xlu0 %2776
        %2778 = vrot.lane.b32.xlu0 %v2488, 64
        %v2779 = vpop.permute.xlu0 %2778
        %2780 = vrot.lane.b32.xlu0 %v2491, 64
        %v2781 = vpop.permute.xlu0 %2780
        %2782 = vrot.lane.b32.xlu0 %v2493, 64
        %v2783 = vpop.permute.xlu0 %2782
        %2816 = vrot.lane.b32.xlu0 %v2444, 64
        %v2817 = vpop.permute.xlu0 %2816
        %2818 = vrot.lane.b32.xlu0 %v2446, 64
        %v2819 = vpop.permute.xlu0 %2818
        %2820 = vrot.lane.b32.xlu0 %v2449, 64
        %v2821 = vpop.permute.xlu0 %2820
        %2822 = vrot.lane.b32.xlu0 %v2451, 64
        %v2823 = vpop.permute.xlu0 %2822
        %2824 = vrot.lane.b32.xlu0 %v2502, 64
        %v2825 = vpop.permute.xlu0 %2824
        %2826 = vrot.lane.b32.xlu0 %v2504, 64
        %v2827 = vpop.permute.xlu0 %2826
        %2828 = vrot.lane.b32.xlu0 %v2507, 64
        %v2829 = vpop.permute.xlu0 %2828
        %2830 = vrot.lane.b32.xlu0 %v2509, 64
        %v2831 = vpop.permute.xlu0 %2830
        %v2840 = vsel %vm984, %v2136, %v2529
        %v2841 = vsel %vm984, %v2137, %v2531
        %v2842 = vsel %vm984, %v2139, %v2533
        %v2843 = vsel %vm984, %v2140, %v2535
        %v2844 = vsel %vm984, %v2142, %v2537
        %v2845 = vsel %vm984, %v2143, %v2539
        %v2846 = vsel %vm984, %v2145, %v2541
        %v2847 = vsel %vm984, %v2146, %v2543
        %v2848 = vsel %vm984, %v2148, %v2545
        %v2849 = vsel %vm984, %v2149, %v2547
        %v2850 = vsel %vm984, %v2151, %v2549
        %v2851 = vsel %vm984, %v2152, %v2551
        %v2852 = vsel %vm984, %v2154, %v2553
        %v2853 = vsel %vm984, %v2155, %v2555
        %v2854 = vsel %vm984, %v2157, %v2557
        %v2855 = vsel %vm984, %v2158, %v2559
        %v2856 = vsel %vm984, %v2160, %v2561
        %v2857 = vsel %vm984, %v2161, %v2563
        %v2858 = vsel %vm984, %v2163, %v2565
        %v2859 = vsel %vm984, %v2164, %v2567
        %v2860 = vsel %vm984, %v2166, %v2569
        %v2861 = vsel %vm984, %v2167, %v2571
        %v2862 = vsel %vm984, %v2169, %v2573
        %v2863 = vsel %vm984, %v2170, %v2575
        %v2864 = vsel %vm984, %v2172, %v2577
        %v2865 = vsel %vm984, %v2173, %v2579
        %v2866 = vsel %vm984, %v2175, %v2581
        %v2867 = vsel %vm984, %v2176, %v2583
        %v2868 = vsel %vm984, %v2178, %v2585
        %v2869 = vsel %vm984, %v2179, %v2587
        %v2870 = vsel %vm984, %v2181, %v2589
        %v2871 = vsel %vm984, %v2182, %v2591
        %v2872 = vsel %vm984, %v2326, %v2625
        %v2873 = vsel %vm984, %v2328, %v2627
        %v2874 = vsel %vm984, %v2331, %v2629
        %v2875 = vsel %vm984, %v2333, %v2631
        %v2876 = vsel %vm984, %v2336, %v2633
        %v2877 = vsel %vm984, %v2338, %v2635
        %v2878 = vsel %vm984, %v2341, %v2637
        %v2879 = vsel %vm984, %v2343, %v2639
        %v2880 = vsel %vm984, %v2346, %v2641
        %v2881 = vsel %vm984, %v2348, %v2643
        %v2882 = vsel %vm984, %v2351, %v2645
        %v2883 = vsel %vm984, %v2353, %v2647
        %v2884 = vsel %vm984, %v2356, %v2649
        %v2885 = vsel %vm984, %v2358, %v2651
        %v2886 = vsel %vm984, %v2361, %v2653
        %v2887 = vsel %vm984, %v2363, %v2655
        %v2888 = vsel %vm984, %v2366, %v2657
        %v2889 = vsel %vm984, %v2368, %v2659
        %v2890 = vsel %vm984, %v2371, %v2661
        %v2891 = vsel %vm984, %v2373, %v2663
        %v2892 = vsel %vm984, %v2376, %v2665
        %v2893 = vsel %vm984, %v2378, %v2667
        %v2894 = vsel %vm984, %v2381, %v2669
        %v2895 = vsel %vm984, %v2383, %v2671
        %v2896 = vsel %vm984, %v2386, %v2673
        %v2897 = vsel %vm984, %v2388, %v2675
        %v2898 = vsel %vm984, %v2391, %v2677
        %v2899 = vsel %vm984, %v2393, %v2679
        %v2900 = vsel %vm984, %v2396, %v2681
        %v2901 = vsel %vm984, %v2398, %v2683
        %v2902 = vsel %vm984, %v2401, %v2685
        %v2903 = vsel %vm984, %v2403, %v2687
        %v2904 = vsel %vm984, %v2256, %v2721
        %v2905 = vsel %vm984, %v2258, %v2723
        %v2906 = vsel %vm984, %v2261, %v2725
        %v2907 = vsel %vm984, %v2263, %v2727
        %v2908 = vsel %vm984, %v2266, %v2729
        %v2909 = vsel %vm984, %v2268, %v2731
        %v2910 = vsel %vm984, %v2271, %v2733
        %v2911 = vsel %vm984, %v2273, %v2735
        %v2912 = vsel %vm984, %v2276, %v2737
        %v2913 = vsel %vm984, %v2278, %v2739
        %v2914 = vsel %vm984, %v2281, %v2741
        %v2915 = vsel %vm984, %v2283, %v2743
        %v2916 = vsel %vm984, %v2286, %v2745
        %v2917 = vsel %vm984, %v2288, %v2747
        %v2918 = vsel %vm984, %v2291, %v2749
        %v2919 = vsel %vm984, %v2293, %v2751
        %v2920 = vsel %vm984, %v2296, %v2753
        %v2921 = vsel %vm984, %v2298, %v2755
        %v2922 = vsel %vm984, %v2301, %v2757
        %v2923 = vsel %vm984, %v2303, %v2759
        %v2924 = vsel %vm984, %v2306, %v2761
        %v2925 = vsel %vm984, %v2308, %v2763
        %v2926 = vsel %vm984, %v2311, %v2765
        %v2927 = vsel %vm984, %v2313, %v2767
        %v2928 = vsel %vm984, %v2316, %v2769
        %v2929 = vsel %vm984, %v2318, %v2771
        %v2930 = vsel %vm984, %v2321, %v2773
        %v2931 = vsel %vm984, %v2323, %v2775
        %v2932 = vsel %vm984, %v2444, %v2777
        %v2933 = vsel %vm984, %v2446, %v2779
        %v2934 = vsel %vm984, %v2449, %v2781
        %v2935 = vsel %vm984, %v2451, %v2783
        %v2936 = vsel %vm984, %v2184, %v2817
        %v2937 = vsel %vm984, %v2185, %v2819
        %v2938 = vsel %vm984, %v2187, %v2821
        %v2939 = vsel %vm984, %v2188, %v2823
        %v2940 = vsel %vm984, %v2190, %v2825
        %v2941 = vsel %vm984, %v2191, %v2827
        %v2942 = vsel %vm984, %v2193, %v2829
        %v2943 = vsel %vm984, %v2194, %v2831
        %v2944 = vpack.c.bf16 %v2841, %v2840
        %v2945 = vpack.c.bf16 %v2873, %v2872
        %v2946 = vpack.c.bf16 %v2905, %v2904
        %v2947 = vpack.c.bf16 %v2849, %v2848
        %v2948 = vpack.c.bf16 %v2348, %v2346
        %v2949 = vpack.c.bf16 %v2843, %v2842
        %v2950 = vpack.c.bf16 %v2875, %v2874
        %v2951 = vpack.c.bf16 %v2907, %v2906
        %v2952 = vpack.c.bf16 %v2851, %v2850
        %v2953 = vpack.c.bf16 %v2353, %v2351
        %v2954 = vpack.c.bf16 %v2845, %v2844
        %v2955 = vpack.c.bf16 %v2877, %v2876
        %v2956 = vpack.c.bf16 %v2909, %v2908
        %v2957 = vpack.c.bf16 %v2853, %v2852
        %v2958 = vpack.c.bf16 %v2358, %v2356
        %v2959 = vpack.c.bf16 %v2847, %v2846
        %v2960 = vpack.c.bf16 %v2879, %v2878
        %v2961 = vpack.c.bf16 %v2911, %v2910
        %v2962 = vpack.c.bf16 %v2855, %v2854
        %v2963 = vpack.c.bf16 %v2363, %v2361
        %v2964 = vpack.c.bf16 %v2881, %v2880
        %v2965 = vpack.c.bf16 %v2913, %v2912
        %v2966 = vpack.c.bf16 %v2857, %v2856
        %v2967 = vpack.c.bf16 %v2368, %v2366
        %v2968 = vpack.c.bf16 %v2883, %v2882
        %v2969 = vpack.c.bf16 %v2915, %v2914
        %v2970 = vpack.c.bf16 %v2859, %v2858
        %v2971 = vpack.c.bf16 %v2373, %v2371
        %v2972 = vpack.c.bf16 %v2885, %v2884
        %v2973 = vpack.c.bf16 %v2917, %v2916
        %v2974 = vpack.c.bf16 %v2861, %v2860
        %v2975 = vpack.c.bf16 %v2378, %v2376
        %v2976 = vpack.c.bf16 %v2887, %v2886
        %v2977 = vpack.c.bf16 %v2919, %v2918
        %v2978 = vpack.c.bf16 %v2863, %v2862
        %v2979 = vpack.c.bf16 %v2383, %v2381
        %v2980 = vpack.c.bf16 %v2889, %v2888
        %v2981 = vpack.c.bf16 %v2921, %v2920
        %v2982 = vpack.c.bf16 %v2865, %v2864
        %v2983 = vpack.c.bf16 %v2388, %v2386
        %v2984 = vpack.c.bf16 %v2891, %v2890
        %v2985 = vpack.c.bf16 %v2923, %v2922
        %v2986 = vpack.c.bf16 %v2867, %v2866
        %v2987 = vpack.c.bf16 %v2393, %v2391
        %v2988 = vpack.c.bf16 %v2893, %v2892
        %v2989 = vpack.c.bf16 %v2925, %v2924
        %v2990 = vpack.c.bf16 %v2869, %v2868
        %v2991 = vpack.c.bf16 %v2398, %v2396
        %v2992 = vpack.c.bf16 %v2895, %v2894
        %v2993 = vpack.c.bf16 %v2927, %v2926
        %v2994 = vpack.c.bf16 %v2871, %v2870
        %v2995 = vpack.c.bf16 %v2403, %v2401
        %v2996 = vpack.c.bf16 %v2897, %v2896
        %v2997 = vpack.c.bf16 %v2929, %v2928
        %v2998 = vpack.c.bf16 %v2937, %v2936
        %v2999 = vpack.c.bf16 %v2488, %v2486
        %v3000 = vpack.c.bf16 %v2899, %v2898
        %v3001 = vpack.c.bf16 %v2931, %v2930
        %v3002 = vpack.c.bf16 %v2939, %v2938
        %v3003 = vpack.c.bf16 %v2493, %v2491
        %v3004 = vpack.c.bf16 %v2901, %v2900
        %v3005 = vpack.c.bf16 %v2933, %v2932
        %v3006 = vpack.c.bf16 %v2941, %v2940
        %v3007 = vpack.c.bf16 %v2514, %v2512
        %v3008 = vpack.c.bf16 %v2903, %v2902
        %v3009 = vpack.c.bf16 %v2935, %v2934
        %v3010 = vpack.c.bf16 %v2943, %v2942
        %v3011 = vpack.c.bf16 %v2519, %v2517
        %v3012 = vld [vmem:[%s2] sm:$0xf]
        %v3013 = vld [vmem:[%s2 + $0x4] sm:$0xf]
        %v3014 = vld [vmem:[%s2 + $0x8] sm:$0xf]
        %v3015 = vld [vmem:[%s2 + $0xc] sm:$0xf]
        %v3016 = vld [vmem:[%s2 + $0x10] sm:$0xf]
        %v3017 = vld [vmem:[%s2 + $0x14] sm:$0xf]
        %v3018 = vld [vmem:[%s2 + $0x18] sm:$0xf]
        %v3019 = vld [vmem:[%s2 + $0x1c] sm:$0xf]
        %v3020 = vld [vmem:[%s2 + $0x20] sm:$0xf]
        %v3021 = vld [vmem:[%s2 + $0x24] sm:$0xf]
        %v3022 = vld [vmem:[%s2 + $0x28] sm:$0xf]
        %v3023 = vld [vmem:[%s2 + $0x2c] sm:$0xf]
        %v3024 = vld [vmem:[%s2 + $0x30] sm:$0xf]
        %v3025 = vld [vmem:[%s2 + $0x34] sm:$0xf]
        %v3026 = vld [vmem:[%s2 + $0x38] sm:$0xf]
        %v3027 = vld [vmem:[%s2 + $0x3c] sm:$0xf]
        %v3028 = vld [vmem:[%s2 + $0x40] sm:$0xf]
        %v3029 = vld [vmem:[%s2 + $0x44] sm:$0xf]
        %v3030 = vld [vmem:[%s2 + $0x48] sm:$0xf]
        %v3031 = vld [vmem:[%s2 + $0x4c] sm:$0xf]
        %v3032 = vld [vmem:[%s2 + $0x50] sm:$0xf]
        %v3033 = vld [vmem:[%s2 + $0x54] sm:$0xf]
        %v3034 = vld [vmem:[%s2 + $0x58] sm:$0xf]
        %v3035 = vld [vmem:[%s2 + $0x5c] sm:$0xf]
        %v3036 = vld [vmem:[%s2 + $0x60] sm:$0xf]
        %v3037 = vld [vmem:[%s2 + $0x64] sm:$0xf]
        %v3038 = vld [vmem:[%s2 + $0x68] sm:$0xf]
        %v3039 = vld [vmem:[%s2 + $0x6c] sm:$0xf]
        %v3040 = vld [vmem:[%s2 + $0x70] sm:$0xf]
        %v3041 = vld [vmem:[%s2 + $0x74] sm:$0xf]
        %v3042 = vld [vmem:[%s2 + $0x78] sm:$0xf]
        %v3043 = vld [vmem:[%s2 + $0x7c] sm:$0xf]
        %v3044 = vld [vmem:[%s2 + $0x80] sm:$0xf]
        %v3045 = vld [vmem:[%s2 + $0x84] sm:$0xf]
        %v3046 = vld [vmem:[%s2 + $0x88] sm:$0xf]
        %v3047 = vld [vmem:[%s2 + $0x8c] sm:$0xf]
        %v3048 = vld [vmem:[%s2 + $0x90] sm:$0xf]
        %v3049 = vld [vmem:[%s2 + $0x94] sm:$0xf]
        %v3050 = vld [vmem:[%s2 + $0x98] sm:$0xf]
        %v3051 = vld [vmem:[%s2 + $0x9c] sm:$0xf]
        %v3052 = vld [vmem:[%s2 + $0xa0] sm:$0xf]
        %v3053 = vld [vmem:[%s2 + $0xa4] sm:$0xf]
        %v3054 = vld [vmem:[%s2 + $0xa8] sm:$0xf]
        %v3055 = vld [vmem:[%s2 + $0xac] sm:$0xf]
        %v3056 = vld [vmem:[%s2 + $0xb0] sm:$0xf]
        %v3057 = vld [vmem:[%s2 + $0xb4] sm:$0xf]
        %v3058 = vld [vmem:[%s2 + $0xb8] sm:$0xf]
        %v3059 = vld [vmem:[%s2 + $0xbc] sm:$0xf]
        %v3060 = vld [vmem:[%s2 + $0xc0] sm:$0xf]
        %v3061 = vld [vmem:[%s2 + $0xc4] sm:$0xf]
        %v3062 = vld [vmem:[%s2 + $0xc8] sm:$0xf]
        %v3063 = vld [vmem:[%s2 + $0xcc] sm:$0xf]
        %v3064 = vld [vmem:[%s2 + $0xd0] sm:$0xf]
        %v3065 = vld [vmem:[%s2 + $0xd4] sm:$0xf]
        %v3066 = vld [vmem:[%s2 + $0xd8] sm:$0xf]
        %v3067 = vld [vmem:[%s2 + $0xdc] sm:$0xf]
        %v3068 = vld [vmem:[%s2 + $0xe0] sm:$0xf]
        %v3069 = vld [vmem:[%s2 + $0xe4] sm:$0xf]
        %v3070 = vld [vmem:[%s2 + $0xe8] sm:$0xf]
        %v3071 = vld [vmem:[%s2 + $0xec] sm:$0xf]
        %v3072 = vld [vmem:[%s2 + $0xf0] sm:$0xf]
        %v3073 = vld [vmem:[%s2 + $0xf4] sm:$0xf]
        %v3074 = vld [vmem:[%s2 + $0xf8] sm:$0xf]
        %v3075 = vld [vmem:[%s2 + $0xfc] sm:$0xf]
        %v3076 = vld [vmem:[%s2 + $0x100] sm:$0xf]
        %v3077 = vld [vmem:[%s2 + $0x104] sm:$0xf]
        %v3078 = vld [vmem:[%s2 + $0x108] sm:$0xf]
        %v3079 = vld [vmem:[%s2 + $0x10c] sm:$0xf]
        %v3080 = vld [vmem:[%s2 + $0x110] sm:$0xf]
        %v3081 = vld [vmem:[%s2 + $0x114] sm:$0xf]
        %v3082 = vld [vmem:[%s2 + $0x118] sm:$0xf]
        %v3083 = vld [vmem:[%s2 + $0x11c] sm:$0xf]
        %v3156 = vunpack.c.l.b16 %v3012
        %v3157 = vunpack.c.l.b16 %v3013
        %v3158 = vunpack.c.l.b16 %v3014
        %v3159 = vunpack.c.l.b16 %v3015
        %v3160 = vunpack.c.l.b16 %v3016
        %v3161 = vunpack.c.l.b16 %v3017
        %v3162 = vunpack.c.l.b16 %v3018
        %v3163 = vunpack.c.l.b16 %v3019
        %v3164 = vunpack.c.l.b16 %v3020
        %v3165 = vunpack.c.l.b16 %v3021
        %v3166 = vunpack.c.l.b16 %v3022
        %v3167 = vunpack.c.l.b16 %v3023
        %v3168 = vunpack.c.l.b16 %v3024
        %v3169 = vunpack.c.l.b16 %v3025
        %v3170 = vunpack.c.l.b16 %v3026
        %v3171 = vunpack.c.l.b16 %v3027
        %v3172 = vunpack.c.l.b16 %v3028
        %v3173 = vunpack.c.l.b16 %v3029
        %v3174 = vunpack.c.l.b16 %v3030
        %v3175 = vunpack.c.l.b16 %v3031
        %v3176 = vunpack.c.l.b16 %v3032
        %v3177 = vunpack.c.l.b16 %v3033
        %v3178 = vunpack.c.l.b16 %v3034
        %v3179 = vunpack.c.l.b16 %v3035
        %v3180 = vunpack.c.l.b16 %v3036
        %v3181 = vunpack.c.l.b16 %v3037
        %v3182 = vunpack.c.l.b16 %v3038
        %v3183 = vunpack.c.l.b16 %v3039
        %v3184 = vunpack.c.l.b16 %v3040
        %v3185 = vunpack.c.l.b16 %v3041
        %v3186 = vunpack.c.l.b16 %v3042
        %v3187 = vunpack.c.l.b16 %v3043
        %v3188 = vunpack.c.l.b16 %v3044
        %v3189 = vunpack.c.l.b16 %v3045
        %v3190 = vunpack.c.l.b16 %v3046
        %v3191 = vunpack.c.l.b16 %v3047
        %v3192 = vunpack.c.l.b16 %v3048
        %v3193 = vunpack.c.l.b16 %v3049
        %v3194 = vunpack.c.l.b16 %v3050
        %v3195 = vunpack.c.l.b16 %v3051
        %v3196 = vunpack.c.l.b16 %v3052
        %v3197 = vunpack.c.l.b16 %v3053
        %v3198 = vunpack.c.l.b16 %v3054
        %v3199 = vunpack.c.l.b16 %v3055
        %v3200 = vunpack.c.l.b16 %v3056
        %v3201 = vunpack.c.l.b16 %v3057
        %v3202 = vunpack.c.l.b16 %v3058
        %v3203 = vunpack.c.l.b16 %v3059
        %v3204 = vunpack.c.l.b16 %v3060
        %v3205 = vunpack.c.l.b16 %v3061
        %v3206 = vunpack.c.l.b16 %v3062
        %v3207 = vunpack.c.l.b16 %v3063
        %v3208 = vunpack.c.l.b16 %v3064
        %v3209 = vunpack.c.l.b16 %v3065
        %v3210 = vunpack.c.l.b16 %v3066
        %v3211 = vunpack.c.l.b16 %v3067
        %v3212 = vunpack.c.l.b16 %v3068
        %v3213 = vunpack.c.l.b16 %v3069
        %v3214 = vunpack.c.l.b16 %v3070
        %v3215 = vunpack.c.l.b16 %v3071
        %v3216 = vunpack.c.l.b16 %v3072
        %v3217 = vunpack.c.l.b16 %v3073
        %v3218 = vunpack.c.l.b16 %v3074
        %v3219 = vunpack.c.l.b16 %v3075
        %v3220 = vunpack.c.l.b16 %v3076
        %v3221 = vunpack.c.l.b16 %v3077
        %v3222 = vunpack.c.l.b16 %v3078
        %v3223 = vunpack.c.l.b16 %v3079
        %v3224 = vunpack.c.l.b16 %v3080
        %v3225 = vunpack.c.l.b16 %v3081
        %v3226 = vunpack.c.l.b16 %v3082
        %v3227 = vunpack.c.l.b16 %v3083
        %v3228 = vpack.c.b16 %v3157, %v3156
        %v3229 = vpack.c.b16 %v3159, %v3158
        %v3230 = vpack.c.b16 %v3161, %v3160
        %v3231 = vpack.c.b16 %v3163, %v3162
        %v3232 = vpack.c.b16 %v3165, %v3164
        %v3233 = vpack.c.b16 %v3167, %v3166
        %v3234 = vpack.c.b16 %v3169, %v3168
        %v3235 = vpack.c.b16 %v3171, %v3170
        %v3236 = vpack.c.b16 %v3173, %v3172
        %v3237 = vpack.c.b16 %v3175, %v3174
        %v3238 = vpack.c.b16 %v3177, %v3176
        %v3239 = vpack.c.b16 %v3179, %v3178
        %v3240 = vpack.c.b16 %v3181, %v3180
        %v3241 = vpack.c.b16 %v3183, %v3182
        %v3242 = vpack.c.b16 %v3185, %v3184
        %v3243 = vpack.c.b16 %v3187, %v3186
        %v3244 = vpack.c.b16 %v3189, %v3188
        %v3245 = vpack.c.b16 %v3191, %v3190
        %v3246 = vpack.c.b16 %v3193, %v3192
        %v3247 = vpack.c.b16 %v3195, %v3194
        %v3248 = vpack.c.b16 %v3197, %v3196
        %v3249 = vpack.c.b16 %v3199, %v3198
        %v3250 = vpack.c.b16 %v3201, %v3200
        %v3251 = vpack.c.b16 %v3203, %v3202
        %v3252 = vpack.c.b16 %v3205, %v3204
        %v3253 = vpack.c.b16 %v3207, %v3206
        %v3254 = vpack.c.b16 %v3209, %v3208
        %v3255 = vpack.c.b16 %v3211, %v3210
        %v3256 = vpack.c.b16 %v3213, %v3212
        %v3257 = vpack.c.b16 %v3215, %v3214
        %v3258 = vpack.c.b16 %v3217, %v3216
        %v3259 = vpack.c.b16 %v3219, %v3218
        %v3260 = vpack.c.b16 %v3221, %v3220
        %v3261 = vpack.c.b16 %v3223, %v3222
        %v3262 = vpack.c.b16 %v3225, %v3224
        %v3263 = vpack.c.b16 %v3227, %v3226
        %v3301 = vsel %vm984, %v2948, 0
        %v3304 = vsel %vm984, %v2953, 0
        %v3307 = vsel %vm984, %v2958, 0
        %v3310 = vsel %vm984, %v2963, 0
        %v3313 = vsel %vm984, %v2967, 0
        %v3316 = vsel %vm984, %v2971, 0
        %v3319 = vsel %vm984, %v2975, 0
        %v3322 = vsel %vm984, %v2979, 0
        %v3325 = vsel %vm984, %v2983, 0
        %v3328 = vsel %vm984, %v2987, 0
        %v3331 = vsel %vm984, %v2991, 0
        %v3334 = vsel %vm984, %v2995, 0
        %v3337 = vsel %vm984, %v2999, 0
        %v3340 = vsel %vm984, %v3003, 0
        %v3343 = vsel %vm984, %v3007, 0
        %v3346 = vsel %vm984, %v3011, 0
        %3348 = vmatpush.bf16.msra.mxu0 %v3235
        %3349 = vmatpush.bf16.msra.mxu0 %v3234
        %3350 = vmatpush.bf16.msra.mxu0 %v3233
        %3351 = vmatpush.bf16.msra.mxu0 %v3232
        %3352 = vmatpush.bf16.msra.mxu0 %v3231
        %3353 = vmatpush.bf16.msra.mxu0 %v3230
        %3354 = vmatpush.bf16.msra.mxu0 %v3229
        %3355 = vmatpush.bf16.msra.mxu0 %v3228
        %3356 = vmatmul.bf16.gmra.mxu0 %v2944
        %v3357 = vpop.f32.mrf.mxu0
        %v3358 = vadd.f32 0.0, %v3357
        %v3359 = vpop.f32.mrf.mxu0
        %v3360 = vadd.f32 0.0, %v3359
        %3361 = vmatmul.bf16.gmra.mxu0 %v2949
        %v3362 = vpop.f32.mrf.mxu0
        %v3363 = vadd.f32 0.0, %v3362
        %v3364 = vpop.f32.mrf.mxu0
        %v3365 = vadd.f32 0.0, %v3364
        %3366 = vmatmul.bf16.gmra.mxu0 %v2954
        %v3367 = vpop.f32.mrf.mxu0
        %v3368 = vadd.f32 0.0, %v3367
        %v3369 = vpop.f32.mrf.mxu0
        %v3370 = vadd.f32 0.0, %v3369
        %3371 = vmatmul.bf16.gmra.mxu0 %v2959
        %v3372 = vpop.f32.mrf.mxu0
        %v3373 = vadd.f32 0.0, %v3372
        %v3374 = vpop.f32.mrf.mxu0
        %v3375 = vadd.f32 0.0, %v3374
        %3376 = vmatmul.bf16.gmra.mxu0 %v2947
        %v3377 = vpop.f32.mrf.mxu0
        %v3378 = vadd.f32 0.0, %v3377
        %v3379 = vpop.f32.mrf.mxu0
        %v3380 = vadd.f32 0.0, %v3379
        %3381 = vmatmul.bf16.gmra.mxu0 %v2952
        %v3382 = vpop.f32.mrf.mxu0
        %v3383 = vadd.f32 0.0, %v3382
        %v3384 = vpop.f32.mrf.mxu0
        %v3385 = vadd.f32 0.0, %v3384
        %3386 = vmatmul.bf16.gmra.mxu0 %v2957
        %v3387 = vpop.f32.mrf.mxu0
        %v3388 = vadd.f32 0.0, %v3387
        %v3389 = vpop.f32.mrf.mxu0
        %v3390 = vadd.f32 0.0, %v3389
        %3391 = vmatmul.bf16.gmra.mxu0 %v2962
        %v3392 = vpop.f32.mrf.mxu0
        %v3393 = vadd.f32 0.0, %v3392
        %v3394 = vpop.f32.mrf.mxu0
        %v3395 = vadd.f32 0.0, %v3394
        %3396 = vmatmul.bf16.gmra.mxu0 %v2966
        %v3397 = vpop.f32.mrf.mxu0
        %v3398 = vadd.f32 0.0, %v3397
        %v3399 = vpop.f32.mrf.mxu0
        %v3400 = vadd.f32 0.0, %v3399
        %3401 = vmatmul.bf16.gmra.mxu0 %v2970
        %v3402 = vpop.f32.mrf.mxu0
        %v3403 = vadd.f32 0.0, %v3402
        %v3404 = vpop.f32.mrf.mxu0
        %v3405 = vadd.f32 0.0, %v3404
        %3406 = vmatmul.bf16.gmra.mxu0 %v2974
        %v3407 = vpop.f32.mrf.mxu0
        %v3408 = vadd.f32 0.0, %v3407
        %v3409 = vpop.f32.mrf.mxu0
        %v3410 = vadd.f32 0.0, %v3409
        %3411 = vmatmul.bf16.gmra.mxu0 %v2978
        %v3412 = vpop.f32.mrf.mxu0
        %v3413 = vadd.f32 0.0, %v3412
        %v3414 = vpop.f32.mrf.mxu0
        %v3415 = vadd.f32 0.0, %v3414
        %3416 = vmatmul.bf16.gmra.mxu0 %v2982
        %v3417 = vpop.f32.mrf.mxu0
        %v3418 = vadd.f32 0.0, %v3417
        %v3419 = vpop.f32.mrf.mxu0
        %v3420 = vadd.f32 0.0, %v3419
        %3421 = vmatmul.bf16.gmra.mxu0 %v2986
        %v3422 = vpop.f32.mrf.mxu0
        %v3423 = vadd.f32 0.0, %v3422
        %v3424 = vpop.f32.mrf.mxu0
        %v3425 = vadd.f32 0.0, %v3424
        %3426 = vmatmul.bf16.gmra.mxu0 %v2990
        %v3427 = vpop.f32.mrf.mxu0
        %v3428 = vadd.f32 0.0, %v3427
        %v3429 = vpop.f32.mrf.mxu0
        %v3430 = vadd.f32 0.0, %v3429
        %3431 = vmatmul.bf16.gmra.mxu0 %v2994
        %v3432 = vpop.f32.mrf.mxu0
        %v3433 = vadd.f32 0.0, %v3432
        %v3434 = vpop.f32.mrf.mxu0
        %v3435 = vadd.f32 0.0, %v3434
        %3436 = vdwg.mxu0
        %3437 = vmatpush.bf16.msra.mxu0 %v3243
        %3438 = vmatpush.bf16.msra.mxu0 %v3242
        %3439 = vmatpush.bf16.msra.mxu0 %v3241
        %3440 = vmatpush.bf16.msra.mxu0 %v3240
        %3441 = vmatpush.bf16.msra.mxu0 %v3239
        %3442 = vmatpush.bf16.msra.mxu0 %v3238
        %3443 = vmatpush.bf16.msra.mxu0 %v3237
        %3444 = vmatpush.bf16.msra.mxu0 %v3236
        %3445 = vmatmul.bf16.gmra.mxu0 %v2945
        %v3446 = vpop.f32.mrf.mxu0
        %v3447 = vadd.f32 %v3358, %v3446
        %v3448 = vpop.f32.mrf.mxu0
        %v3449 = vadd.f32 %v3360, %v3448
        %3450 = vmatmul.bf16.gmra.mxu0 %v2950
        %v3451 = vpop.f32.mrf.mxu0
        %v3452 = vadd.f32 %v3363, %v3451
        %v3453 = vpop.f32.mrf.mxu0
        %v3454 = vadd.f32 %v3365, %v3453
        %3455 = vmatmul.bf16.gmra.mxu0 %v2955
        %v3456 = vpop.f32.mrf.mxu0
        %v3457 = vadd.f32 %v3368, %v3456
        %v3458 = vpop.f32.mrf.mxu0
        %v3459 = vadd.f32 %v3370, %v3458
        %3460 = vmatmul.bf16.gmra.mxu0 %v2960
        %v3461 = vpop.f32.mrf.mxu0
        %v3462 = vadd.f32 %v3373, %v3461
        %v3463 = vpop.f32.mrf.mxu0
        %v3464 = vadd.f32 %v3375, %v3463
        %3465 = vmatmul.bf16.gmra.mxu0 %v2964
        %v3466 = vpop.f32.mrf.mxu0
        %v3467 = vadd.f32 %v3378, %v3466
        %v3468 = vpop.f32.mrf.mxu0
        %v3469 = vadd.f32 %v3380, %v3468
        %3470 = vmatmul.bf16.gmra.mxu0 %v2968
        %v3471 = vpop.f32.mrf.mxu0
        %v3472 = vadd.f32 %v3383, %v3471
        %v3473 = vpop.f32.mrf.mxu0
        %v3474 = vadd.f32 %v3385, %v3473
        %3475 = vmatmul.bf16.gmra.mxu0 %v2972
        %v3476 = vpop.f32.mrf.mxu0
        %v3477 = vadd.f32 %v3388, %v3476
        %v3478 = vpop.f32.mrf.mxu0
        %v3479 = vadd.f32 %v3390, %v3478
        %3480 = vmatmul.bf16.gmra.mxu0 %v2976
        %v3481 = vpop.f32.mrf.mxu0
        %v3482 = vadd.f32 %v3393, %v3481
        %v3483 = vpop.f32.mrf.mxu0
        %v3484 = vadd.f32 %v3395, %v3483
        %3485 = vmatmul.bf16.gmra.mxu0 %v2980
        %v3486 = vpop.f32.mrf.mxu0
        %v3487 = vadd.f32 %v3398, %v3486
        %v3488 = vpop.f32.mrf.mxu0
        %v3489 = vadd.f32 %v3400, %v3488
        %3490 = vmatmul.bf16.gmra.mxu0 %v2984
        %v3491 = vpop.f32.mrf.mxu0
        %v3492 = vadd.f32 %v3403, %v3491
        %v3493 = vpop.f32.mrf.mxu0
        %v3494 = vadd.f32 %v3405, %v3493
        %3495 = vmatmul.bf16.gmra.mxu0 %v2988
        %v3496 = vpop.f32.mrf.mxu0
        %v3497 = vadd.f32 %v3408, %v3496
        %v3498 = vpop.f32.mrf.mxu0
        %v3499 = vadd.f32 %v3410, %v3498
        %3500 = vmatmul.bf16.gmra.mxu0 %v2992
        %v3501 = vpop.f32.mrf.mxu0
        %v3502 = vadd.f32 %v3413, %v3501
        %v3503 = vpop.f32.mrf.mxu0
        %v3504 = vadd.f32 %v3415, %v3503
        %3505 = vmatmul.bf16.gmra.mxu0 %v2996
        %v3506 = vpop.f32.mrf.mxu0
        %v3507 = vadd.f32 %v3418, %v3506
        %v3508 = vpop.f32.mrf.mxu0
        %v3509 = vadd.f32 %v3420, %v3508
        %3510 = vmatmul.bf16.gmra.mxu0 %v3000
        %v3511 = vpop.f32.mrf.mxu0
        %v3512 = vadd.f32 %v3423, %v3511
        %v3513 = vpop.f32.mrf.mxu0
        %v3514 = vadd.f32 %v3425, %v3513
        %3515 = vmatmul.bf16.gmra.mxu0 %v3004
        %v3516 = vpop.f32.mrf.mxu0
        %v3517 = vadd.f32 %v3428, %v3516
        %v3518 = vpop.f32.mrf.mxu0
        %v3519 = vadd.f32 %v3430, %v3518
        %3520 = vmatmul.bf16.gmra.mxu0 %v3008
        %v3521 = vpop.f32.mrf.mxu0
        %v3522 = vadd.f32 %v3433, %v3521
        %v3523 = vpop.f32.mrf.mxu0
        %v3524 = vadd.f32 %v3435, %v3523
        %3525 = vdwg.mxu0
        %3526 = vmatpush.bf16.msra.mxu0 %v3251
        %3527 = vmatpush.bf16.msra.mxu0 %v3250
        %3528 = vmatpush.bf16.msra.mxu0 %v3249
        %3529 = vmatpush.bf16.msra.mxu0 %v3248
        %3530 = vmatpush.bf16.msra.mxu0 %v3247
        %3531 = vmatpush.bf16.msra.mxu0 %v3246
        %3532 = vmatpush.bf16.msra.mxu0 %v3245
        %3533 = vmatpush.bf16.msra.mxu0 %v3244
        %3534 = vmatmul.bf16.gmra.mxu0 %v2946
        %v3535 = vpop.f32.mrf.mxu0
        %v3536 = vadd.f32 %v3447, %v3535
        %v3537 = vpop.f32.mrf.mxu0
        %v3538 = vadd.f32 %v3449, %v3537
        %3539 = vmatmul.bf16.gmra.mxu0 %v2951
        %v3540 = vpop.f32.mrf.mxu0
        %v3541 = vadd.f32 %v3452, %v3540
        %v3542 = vpop.f32.mrf.mxu0
        %v3543 = vadd.f32 %v3454, %v3542
        %3544 = vmatmul.bf16.gmra.mxu0 %v2956
        %v3545 = vpop.f32.mrf.mxu0
        %v3546 = vadd.f32 %v3457, %v3545
        %v3547 = vpop.f32.mrf.mxu0
        %v3548 = vadd.f32 %v3459, %v3547
        %3549 = vmatmul.bf16.gmra.mxu0 %v2961
        %v3550 = vpop.f32.mrf.mxu0
        %v3551 = vadd.f32 %v3462, %v3550
        %v3552 = vpop.f32.mrf.mxu0
        %v3553 = vadd.f32 %v3464, %v3552
        %3554 = vmatmul.bf16.gmra.mxu0 %v2965
        %v3555 = vpop.f32.mrf.mxu0
        %v3556 = vadd.f32 %v3467, %v3555
        %v3557 = vpop.f32.mrf.mxu0
        %v3558 = vadd.f32 %v3469, %v3557
        %3559 = vmatmul.bf16.gmra.mxu0 %v2969
        %v3560 = vpop.f32.mrf.mxu0
        %v3561 = vadd.f32 %v3472, %v3560
        %v3562 = vpop.f32.mrf.mxu0
        %v3563 = vadd.f32 %v3474, %v3562
        %3564 = vmatmul.bf16.gmra.mxu0 %v2973
        %v3565 = vpop.f32.mrf.mxu0
        %v3566 = vadd.f32 %v3477, %v3565
        %v3567 = vpop.f32.mrf.mxu0
        %v3568 = vadd.f32 %v3479, %v3567
        %3569 = vmatmul.bf16.gmra.mxu0 %v2977
        %v3570 = vpop.f32.mrf.mxu0
        %v3571 = vadd.f32 %v3482, %v3570
        %v3572 = vpop.f32.mrf.mxu0
        %v3573 = vadd.f32 %v3484, %v3572
        %3574 = vmatmul.bf16.gmra.mxu0 %v2981
        %v3575 = vpop.f32.mrf.mxu0
        %v3576 = vadd.f32 %v3487, %v3575
        %v3577 = vpop.f32.mrf.mxu0
        %v3578 = vadd.f32 %v3489, %v3577
        %3579 = vmatmul.bf16.gmra.mxu0 %v2985
        %v3580 = vpop.f32.mrf.mxu0
        %v3581 = vadd.f32 %v3492, %v3580
        %v3582 = vpop.f32.mrf.mxu0
        %v3583 = vadd.f32 %v3494, %v3582
        %3584 = vmatmul.bf16.gmra.mxu0 %v2989
        %v3585 = vpop.f32.mrf.mxu0
        %v3586 = vadd.f32 %v3497, %v3585
        %v3587 = vpop.f32.mrf.mxu0
        %v3588 = vadd.f32 %v3499, %v3587
        %3589 = vmatmul.bf16.gmra.mxu0 %v2993
        %v3590 = vpop.f32.mrf.mxu0
        %v3591 = vadd.f32 %v3502, %v3590
        %v3592 = vpop.f32.mrf.mxu0
        %v3593 = vadd.f32 %v3504, %v3592
        %3594 = vmatmul.bf16.gmra.mxu0 %v2997
        %v3595 = vpop.f32.mrf.mxu0
        %v3596 = vadd.f32 %v3507, %v3595
        %v3597 = vpop.f32.mrf.mxu0
        %v3598 = vadd.f32 %v3509, %v3597
        %3599 = vmatmul.bf16.gmra.mxu0 %v3001
        %v3600 = vpop.f32.mrf.mxu0
        %v3601 = vadd.f32 %v3512, %v3600
        %v3602 = vpop.f32.mrf.mxu0
        %v3603 = vadd.f32 %v3514, %v3602
        %3604 = vmatmul.bf16.gmra.mxu0 %v3005
        %v3605 = vpop.f32.mrf.mxu0
        %v3606 = vadd.f32 %v3517, %v3605
        %v3607 = vpop.f32.mrf.mxu0
        %v3608 = vadd.f32 %v3519, %v3607
        %3609 = vmatmul.bf16.gmra.mxu0 %v3009
        %v3610 = vpop.f32.mrf.mxu0
        %v3611 = vadd.f32 %v3522, %v3610
        %v3612 = vpop.f32.mrf.mxu0
        %v3613 = vadd.f32 %v3524, %v3612
        %3614 = vdwg.mxu0
        %3615 = vmatpush.bf16.msra.mxu0 %v3259
        %3616 = vmatpush.bf16.msra.mxu0 %v3258
        %3617 = vmatpush.bf16.msra.mxu0 %v3257
        %3618 = vmatpush.bf16.msra.mxu0 %v3256
        %3619 = vmatpush.bf16.msra.mxu0 %v3255
        %3620 = vmatpush.bf16.msra.mxu0 %v3254
        %3621 = vmatpush.bf16.msra.mxu0 %v3253
        %3622 = vmatpush.bf16.msra.mxu0 %v3252
        %3623 = vmatmul.bf16.gmra.mxu0 %v2947
        %v3624 = vpop.f32.mrf.mxu0
        %v3625 = vadd.f32 %v3536, %v3624
        %v3626 = vpop.f32.mrf.mxu0
        %v3627 = vadd.f32 %v3538, %v3626
        %3628 = vmatmul.bf16.gmra.mxu0 %v2952
        %v3629 = vpop.f32.mrf.mxu0
        %v3630 = vadd.f32 %v3541, %v3629
        %v3631 = vpop.f32.mrf.mxu0
        %v3632 = vadd.f32 %v3543, %v3631
        %3633 = vmatmul.bf16.gmra.mxu0 %v2957
        %v3634 = vpop.f32.mrf.mxu0
        %v3635 = vadd.f32 %v3546, %v3634
        %v3636 = vpop.f32.mrf.mxu0
        %v3637 = vadd.f32 %v3548, %v3636
        %3638 = vmatmul.bf16.gmra.mxu0 %v2962
        %v3639 = vpop.f32.mrf.mxu0
        %v3640 = vadd.f32 %v3551, %v3639
        %v3641 = vpop.f32.mrf.mxu0
        %v3642 = vadd.f32 %v3553, %v3641
        %3643 = vmatmul.bf16.gmra.mxu0 %v2966
        %v3644 = vpop.f32.mrf.mxu0
        %v3645 = vadd.f32 %v3556, %v3644
        %v3646 = vpop.f32.mrf.mxu0
        %v3647 = vadd.f32 %v3558, %v3646
        %3648 = vmatmul.bf16.gmra.mxu0 %v2970
        %v3649 = vpop.f32.mrf.mxu0
        %v3650 = vadd.f32 %v3561, %v3649
        %v3651 = vpop.f32.mrf.mxu0
        %v3652 = vadd.f32 %v3563, %v3651
        %3653 = vmatmul.bf16.gmra.mxu0 %v2974
        %v3654 = vpop.f32.mrf.mxu0
        %v3655 = vadd.f32 %v3566, %v3654
        %v3656 = vpop.f32.mrf.mxu0
        %v3657 = vadd.f32 %v3568, %v3656
        %3658 = vmatmul.bf16.gmra.mxu0 %v2978
        %v3659 = vpop.f32.mrf.mxu0
        %v3660 = vadd.f32 %v3571, %v3659
        %v3661 = vpop.f32.mrf.mxu0
        %v3662 = vadd.f32 %v3573, %v3661
        %3663 = vmatmul.bf16.gmra.mxu0 %v2982
        %v3664 = vpop.f32.mrf.mxu0
        %v3665 = vadd.f32 %v3576, %v3664
        %v3666 = vpop.f32.mrf.mxu0
        %v3667 = vadd.f32 %v3578, %v3666
        %3668 = vmatmul.bf16.gmra.mxu0 %v2986
        %v3669 = vpop.f32.mrf.mxu0
        %v3670 = vadd.f32 %v3581, %v3669
        %v3671 = vpop.f32.mrf.mxu0
        %v3672 = vadd.f32 %v3583, %v3671
        %3673 = vmatmul.bf16.gmra.mxu0 %v2990
        %v3674 = vpop.f32.mrf.mxu0
        %v3675 = vadd.f32 %v3586, %v3674
        %v3676 = vpop.f32.mrf.mxu0
        %v3677 = vadd.f32 %v3588, %v3676
        %3678 = vmatmul.bf16.gmra.mxu0 %v2994
        %v3679 = vpop.f32.mrf.mxu0
        %v3680 = vadd.f32 %v3591, %v3679
        %v3681 = vpop.f32.mrf.mxu0
        %v3682 = vadd.f32 %v3593, %v3681
        %3683 = vmatmul.bf16.gmra.mxu0 %v2998
        %v3684 = vpop.f32.mrf.mxu0
        %v3685 = vadd.f32 %v3596, %v3684
        %v3686 = vpop.f32.mrf.mxu0
        %v3687 = vadd.f32 %v3598, %v3686
        %3688 = vmatmul.bf16.gmra.mxu0 %v3002
        %v3689 = vpop.f32.mrf.mxu0
        %v3690 = vadd.f32 %v3601, %v3689
        %v3691 = vpop.f32.mrf.mxu0
        %v3692 = vadd.f32 %v3603, %v3691
        %3693 = vmatmul.bf16.gmra.mxu0 %v3006
        %v3694 = vpop.f32.mrf.mxu0
        %v3695 = vadd.f32 %v3606, %v3694
        %v3696 = vpop.f32.mrf.mxu0
        %v3697 = vadd.f32 %v3608, %v3696
        %3698 = vmatmul.bf16.gmra.mxu0 %v3010
        %v3699 = vpop.f32.mrf.mxu0
        %v3700 = vadd.f32 %v3611, %v3699
        %v3701 = vpop.f32.mrf.mxu0
        %v3702 = vadd.f32 %v3613, %v3701
        %3703 = vdwg.mxu0
        %3704 = vmatpush.bf16.msra.mxu0 0
        %3705 = vmatpush.bf16.msra.mxu0 0
        %3706 = vmatpush.bf16.msra.mxu0 0
        %3707 = vmatpush.bf16.msra.mxu0 0
        %3708 = vmatpush.bf16.msra.mxu0 %v3263
        %3709 = vmatpush.bf16.msra.mxu0 %v3262
        %3710 = vmatpush.bf16.msra.mxu0 %v3261
        %3711 = vmatpush.bf16.msra.mxu0 %v3260
        %3712 = vmatmul.bf16.gmra.mxu0 %v3301
        %v3713 = vpop.f32.mrf.mxu0
        %v3714 = vadd.f32 %v3625, %v3713
        %v3715 = vpop.f32.mrf.mxu0
        %v3716 = vadd.f32 %v3627, %v3715
        %3717 = vmatmul.bf16.gmra.mxu0 %v3304
        %v3718 = vpop.f32.mrf.mxu0
        %v3719 = vadd.f32 %v3630, %v3718
        %v3720 = vpop.f32.mrf.mxu0
        %v3721 = vadd.f32 %v3632, %v3720
        %3722 = vmatmul.bf16.gmra.mxu0 %v3307
        %v3723 = vpop.f32.mrf.mxu0
        %v3724 = vadd.f32 %v3635, %v3723
        %v3725 = vpop.f32.mrf.mxu0
        %v3726 = vadd.f32 %v3637, %v3725
        %3727 = vmatmul.bf16.gmra.mxu0 %v3310
        %v3728 = vpop.f32.mrf.mxu0
        %v3729 = vadd.f32 %v3640, %v3728
        %v3730 = vpop.f32.mrf.mxu0
        %v3731 = vadd.f32 %v3642, %v3730
        %3732 = vmatmul.bf16.gmra.mxu0 %v3313
        %v3733 = vpop.f32.mrf.mxu0
        %v3734 = vadd.f32 %v3645, %v3733
        %v3735 = vpop.f32.mrf.mxu0
        %v3736 = vadd.f32 %v3647, %v3735
        %3737 = vmatmul.bf16.gmra.mxu0 %v3316
        %v3738 = vpop.f32.mrf.mxu0
        %v3739 = vadd.f32 %v3650, %v3738
        %v3740 = vpop.f32.mrf.mxu0
        %v3741 = vadd.f32 %v3652, %v3740
        %3742 = vmatmul.bf16.gmra.mxu0 %v3319
        %v3743 = vpop.f32.mrf.mxu0
        %v3744 = vadd.f32 %v3655, %v3743
        %v3745 = vpop.f32.mrf.mxu0
        %v3746 = vadd.f32 %v3657, %v3745
        %3747 = vmatmul.bf16.gmra.mxu0 %v3322
        %v3748 = vpop.f32.mrf.mxu0
        %v3749 = vadd.f32 %v3660, %v3748
        %v3750 = vpop.f32.mrf.mxu0
        %v3751 = vadd.f32 %v3662, %v3750
        %3752 = vmatmul.bf16.gmra.mxu0 %v3325
        %v3753 = vpop.f32.mrf.mxu0
        %v3754 = vadd.f32 %v3665, %v3753
        %v3755 = vpop.f32.mrf.mxu0
        %v3756 = vadd.f32 %v3667, %v3755
        %3757 = vmatmul.bf16.gmra.mxu0 %v3328
        %v3758 = vpop.f32.mrf.mxu0
        %v3759 = vadd.f32 %v3670, %v3758
        %v3760 = vpop.f32.mrf.mxu0
        %v3761 = vadd.f32 %v3672, %v3760
        %3762 = vmatmul.bf16.gmra.mxu0 %v3331
        %v3763 = vpop.f32.mrf.mxu0
        %v3764 = vadd.f32 %v3675, %v3763
        %v3765 = vpop.f32.mrf.mxu0
        %v3766 = vadd.f32 %v3677, %v3765
        %3767 = vmatmul.bf16.gmra.mxu0 %v3334
        %v3768 = vpop.f32.mrf.mxu0
        %v3769 = vadd.f32 %v3680, %v3768
        %v3770 = vpop.f32.mrf.mxu0
        %v3771 = vadd.f32 %v3682, %v3770
        %3772 = vmatmul.bf16.gmra.mxu0 %v3337
        %v3773 = vpop.f32.mrf.mxu0
        %v3774 = vadd.f32 %v3685, %v3773
        %v3775 = vpop.f32.mrf.mxu0
        %v3776 = vadd.f32 %v3687, %v3775
        %3777 = vmatmul.bf16.gmra.mxu0 %v3340
        %v3778 = vpop.f32.mrf.mxu0
        %v3779 = vadd.f32 %v3690, %v3778
        %v3780 = vpop.f32.mrf.mxu0
        %v3781 = vadd.f32 %v3692, %v3780
        %3782 = vmatmul.bf16.gmra.mxu0 %v3343
        %v3783 = vpop.f32.mrf.mxu0
        %v3784 = vadd.f32 %v3695, %v3783
        %v3785 = vpop.f32.mrf.mxu0
        %v3786 = vadd.f32 %v3697, %v3785
        %3787 = vmatmul.bf16.gmra.mxu0 %v3346
        %v3788 = vpop.f32.mrf.mxu0
        %v3789 = vadd.f32 %v3700, %v3788
        %v3790 = vpop.f32.mrf.mxu0
        %v3791 = vadd.f32 %v3702, %v3790
        %3792 = vdwg.mxu0
        %v3793 = vld [vmem:[%s5] sm:$0x1]
        %v3795 = vperm.slane %v3793, 0
        %v3797 = vmul.f32 %v3714, %v3795
        %v3798 = vmul.f32 %v3716, %v3795
        %v3799 = vmul.f32 %v3719, %v3795
        %v3800 = vmul.f32 %v3721, %v3795
        %v3801 = vmul.f32 %v3724, %v3795
        %v3802 = vmul.f32 %v3726, %v3795
        %v3803 = vmul.f32 %v3729, %v3795
        %v3804 = vmul.f32 %v3731, %v3795
        %v3805 = vmul.f32 %v3734, %v3795
        %v3806 = vmul.f32 %v3736, %v3795
        %v3807 = vmul.f32 %v3739, %v3795
        %v3808 = vmul.f32 %v3741, %v3795
        %v3809 = vmul.f32 %v3744, %v3795
        %v3810 = vmul.f32 %v3746, %v3795
        %v3811 = vmul.f32 %v3749, %v3795
        %v3812 = vmul.f32 %v3751, %v3795
        %v3813 = vmul.f32 %v3754, %v3795
        %v3814 = vmul.f32 %v3756, %v3795
        %v3815 = vmul.f32 %v3759, %v3795
        %v3816 = vmul.f32 %v3761, %v3795
        %v3817 = vmul.f32 %v3764, %v3795
        %v3818 = vmul.f32 %v3766, %v3795
        %v3819 = vmul.f32 %v3769, %v3795
        %v3820 = vmul.f32 %v3771, %v3795
        %v3821 = vmul.f32 %v3774, %v3795
        %v3822 = vmul.f32 %v3776, %v3795
        %v3823 = vmul.f32 %v3779, %v3795
        %v3824 = vmul.f32 %v3781, %v3795
        %v3825 = vmul.f32 %v3784, %v3795
        %v3826 = vmul.f32 %v3786, %v3795
        %v3827 = vmul.f32 %v3789, %v3795
        %v3828 = vmul.f32 %v3791, %v3795
        %v3829 = vld [vmem:[%s6] sm:$0x1]
        %v3831 = vperm.slane %v3829, 0
        %v3833 = vadd.f32 %v3797, %v3831
        %v3834 = vadd.f32 %v3798, %v3831
        %v3835 = vadd.f32 %v3799, %v3831
        %v3836 = vadd.f32 %v3800, %v3831
        %v3837 = vadd.f32 %v3801, %v3831
        %v3838 = vadd.f32 %v3802, %v3831
        %v3839 = vadd.f32 %v3803, %v3831
        %v3840 = vadd.f32 %v3804, %v3831
        %v3841 = vadd.f32 %v3805, %v3831
        %v3842 = vadd.f32 %v3806, %v3831
        %v3843 = vadd.f32 %v3807, %v3831
        %v3844 = vadd.f32 %v3808, %v3831
        %v3845 = vadd.f32 %v3809, %v3831
        %v3846 = vadd.f32 %v3810, %v3831
        %v3847 = vadd.f32 %v3811, %v3831
        %v3848 = vadd.f32 %v3812, %v3831
        %v3849 = vadd.f32 %v3813, %v3831
        %v3850 = vadd.f32 %v3814, %v3831
        %v3851 = vadd.f32 %v3815, %v3831
        %v3852 = vadd.f32 %v3816, %v3831
        %v3853 = vadd.f32 %v3817, %v3831
        %v3854 = vadd.f32 %v3818, %v3831
        %v3855 = vadd.f32 %v3819, %v3831
        %v3856 = vadd.f32 %v3820, %v3831
        %v3857 = vadd.f32 %v3821, %v3831
        %v3858 = vadd.f32 %v3822, %v3831
        %v3859 = vadd.f32 %v3823, %v3831
        %v3860 = vadd.f32 %v3824, %v3831
        %v3861 = vadd.f32 %v3825, %v3831
        %v3862 = vadd.f32 %v3826, %v3831
        %v3863 = vadd.f32 %v3827, %v3831
        %v3864 = vadd.f32 %v3828, %v3831
        %v3865 = vadd.f32 %v3833, %v399
        %v3866 = vadd.f32 %v3834, %v401
        %v3867 = vadd.f32 %v3835, %v404
        %v3868 = vadd.f32 %v3836, %v406
        %v3869 = vadd.f32 %v3837, %v409
        %v3870 = vadd.f32 %v3838, %v411
        %v3871 = vadd.f32 %v3839, %v414
        %v3872 = vadd.f32 %v3840, %v416
        %v3873 = vadd.f32 %v3841, %v419
        %v3874 = vadd.f32 %v3842, %v421
        %v3875 = vadd.f32 %v3843, %v424
        %v3876 = vadd.f32 %v3844, %v426
        %v3877 = vadd.f32 %v3845, %v429
        %v3878 = vadd.f32 %v3846, %v431
        %v3879 = vadd.f32 %v3847, %v434
        %v3880 = vadd.f32 %v3848, %v436
        %v3881 = vadd.f32 %v3849, %v439
        %v3882 = vadd.f32 %v3850, %v441
        %v3883 = vadd.f32 %v3851, %v444
        %v3884 = vadd.f32 %v3852, %v446
        %v3885 = vadd.f32 %v3853, %v449
        %v3886 = vadd.f32 %v3854, %v451
        %v3887 = vadd.f32 %v3855, %v454
        %v3888 = vadd.f32 %v3856, %v456
        %v3889 = vadd.f32 %v3857, %v459
        %v3890 = vadd.f32 %v3858, %v461
        %v3891 = vadd.f32 %v3859, %v464
        %v3892 = vadd.f32 %v3860, %v466
        %v3893 = vadd.f32 %v3861, %v588
        %v3894 = vadd.f32 %v3862, %v590
        %v3895 = vadd.f32 %v3863, %v593
        %v3896 = vadd.f32 %v3864, %v595
        %v3897 = vmax.f32 %v3865, 0.0
        %v3898 = vmax.f32 %v3866, 0.0
        %v3899 = vmax.f32 %v3867, 0.0
        %v3900 = vmax.f32 %v3868, 0.0
        %v3901 = vmax.f32 %v3869, 0.0
        %v3902 = vmax.f32 %v3870, 0.0
        %v3903 = vmax.f32 %v3871, 0.0
        %v3904 = vmax.f32 %v3872, 0.0
        %v3905 = vmax.f32 %v3873, 0.0
        %v3906 = vmax.f32 %v3874, 0.0
        %v3907 = vmax.f32 %v3875, 0.0
        %v3908 = vmax.f32 %v3876, 0.0
        %v3909 = vmax.f32 %v3877, 0.0
        %v3910 = vmax.f32 %v3878, 0.0
        %v3911 = vmax.f32 %v3879, 0.0
        %v3912 = vmax.f32 %v3880, 0.0
        %v3913 = vmax.f32 %v3881, 0.0
        %v3914 = vmax.f32 %v3882, 0.0
        %v3915 = vmax.f32 %v3883, 0.0
        %v3916 = vmax.f32 %v3884, 0.0
        %v3917 = vmax.f32 %v3885, 0.0
        %v3918 = vmax.f32 %v3886, 0.0
        %v3919 = vmax.f32 %v3887, 0.0
        %v3920 = vmax.f32 %v3888, 0.0
        %v3921 = vmax.f32 %v3889, 0.0
        %v3922 = vmax.f32 %v3890, 0.0
        %v3923 = vmax.f32 %v3891, 0.0
        %v3924 = vmax.f32 %v3892, 0.0
        %v3925 = vmax.f32 %v3893, 0.0
        %v3926 = vmax.f32 %v3894, 0.0
        %v3927 = vmax.f32 %v3895, 0.0
        %v3928 = vmax.f32 %v3896, 0.0
        %3929 = vst.msk [vmem:[%s271] sm:$0xff] %vm984, %v3897
        %3930 = vst.msk [vmem:[%s271 + $0x8] sm:$0xff] %vm984, %v3898
        %3931 = vst.msk [vmem:[%s271 + $0x10] sm:$0xff] %vm984, %v3899
        %3932 = vst.msk [vmem:[%s271 + $0x18] sm:$0xff] %vm984, %v3900
        %3933 = vst.msk [vmem:[%s271 + $0x20] sm:$0xff] %vm984, %v3901
        %3934 = vst.msk [vmem:[%s271 + $0x28] sm:$0xff] %vm984, %v3902
        %3935 = vst.msk [vmem:[%s271 + $0x30] sm:$0xff] %vm984, %v3903
        %3936 = vst.msk [vmem:[%s271 + $0x38] sm:$0xff] %vm984, %v3904
        %3937 = vst.msk [vmem:[%s271 + $0x40] sm:$0xff] %vm984, %v3905
        %3938 = vst.msk [vmem:[%s271 + $0x48] sm:$0xff] %vm984, %v3906
        %3939 = vst.msk [vmem:[%s271 + $0x50] sm:$0xff] %vm984, %v3907
        %3940 = vst.msk [vmem:[%s271 + $0x58] sm:$0xff] %vm984, %v3908
        %3941 = vst.msk [vmem:[%s271 + $0x60] sm:$0xff] %vm984, %v3909
        %3942 = vst.msk [vmem:[%s271 + $0x68] sm:$0xff] %vm984, %v3910
        %3943 = vst.msk [vmem:[%s271 + $0x70] sm:$0xff] %vm984, %v3911
        %3944 = vst.msk [vmem:[%s271 + $0x78] sm:$0xff] %vm984, %v3912
        %3945 = vst.msk [vmem:[%s271 + $0x80] sm:$0xff] %vm984, %v3913
        %3946 = vst.msk [vmem:[%s271 + $0x88] sm:$0xff] %vm984, %v3914
        %3947 = vst.msk [vmem:[%s271 + $0x90] sm:$0xff] %vm984, %v3915
        %3948 = vst.msk [vmem:[%s271 + $0x98] sm:$0xff] %vm984, %v3916
        %3949 = vst.msk [vmem:[%s271 + $0xa0] sm:$0xff] %vm984, %v3917
        %3950 = vst.msk [vmem:[%s271 + $0xa8] sm:$0xff] %vm984, %v3918
        %3951 = vst.msk [vmem:[%s271 + $0xb0] sm:$0xff] %vm984, %v3919
        %3952 = vst.msk [vmem:[%s271 + $0xb8] sm:$0xff] %vm984, %v3920
        %3953 = vst.msk [vmem:[%s271 + $0xc0] sm:$0xff] %vm984, %v3921
        %3954 = vst.msk [vmem:[%s271 + $0xc8] sm:$0xff] %vm984, %v3922
        %3955 = vst.msk [vmem:[%s271 + $0xd0] sm:$0xff] %vm984, %v3923
        %3956 = vst.msk [vmem:[%s271 + $0xd8] sm:$0xff] %vm984, %v3924
        %3957 = vst.msk [vmem:[%s271 + $0xe0] sm:$0xff] %vm984, %v3925
        %3958 = vst.msk [vmem:[%s271 + $0xe8] sm:$0xff] %vm984, %v3926
        %3959 = vst.msk [vmem:[%s271 + $0xf0] sm:$0xff] %vm984, %v3927
        %3960 = vst.msk [vmem:[%s271 + $0xf8] sm:$0xff] %vm984, %v3928
        %s3961 = sand.u32 %s181, 1
        %s3962 = scalar_lea.sflag [#allocation4], %s3961
        %s3963 = sand.u32 %s181, 1
        %s3964 = smul.addr %s3963, 256
        %s3965 = scalar_lea.vmem [#allocation3], %s3964
        // Predicated region
        $region49: #{d_block_forward.1} parent=47 // pred_check
          %p3966 = pneg %p191
        $region50: #{d_block_forward.1} parent=47 // pred_check_branch
          %3968 = sbr.rel (%p3966) target = $region52
        $region51: #{d_block_forward.1} parent=47 // pred_region
          %3970 = vsyncadd %s3962, 0
          %s3971 = smul.addr %s21, 32
          %s3972 = smul.addr %s3971, 8
          %s3973 = scalar_lea.hbm %s7, %s3972
          %s3974 = sshll.u32 %s3965, 4
          %s3975 = int_to_ptr.vmem [resolvable:$true] %s3974
          %s3976 = sshll.u32 %s3973, 4
          %s3977 = int_to_ptr.hbm [resolvable:$true] %s3976
          %3982 = dma.vmem_to_hbm [thread:$0]  %s3975, 4096, %s3977, %s3962, 128, 128, 8
        $region52: #{d_block_forward.1} parent=47 // pred_fallthru
          _
      $region48: #{d_block_forward.1} parent=5 // pred_fallthru
        _
      %p3983 = scmp.le.s32.totalorder 2, %s16
      // Predicated region
      $region53: #{d_block_forward.1} parent=5 // pred_check
        %p3984 = pneg %p3983
      $region54: #{d_block_forward.1} parent=5 // pred_check_branch
        %3986 = sbr.rel (%p3984) target = $region56
      $region55: #{d_block_forward.1} parent=5 // pred_region
        %s3987 = ssub.s32 %s16, 2
        // Predicated region
        $region57: #{d_block_forward.1} parent=55 // pred_check
          %p3988 = pneg %p197
        $region58: #{d_block_forward.1} parent=55 // pred_check_branch
          %3990 = sbr.rel (%p3988) target = $region60
        $region59: #{d_block_forward.1} parent=55 // pred_region
          %s3991 = sand.u32 %s182, 1
          %s3992 = scalar_lea.sflag [#allocation4], %s3991
          %s3993 = sand.u32 %s182, 1
          %s3994 = smul.addr %s3993, 256
          %s3995 = scalar_lea.vmem [#allocation3], %s3994
          %3997 = dma.done %s3992, 4096
        $region60: #{d_block_forward.1} parent=55 // pred_fallthru
          _
      $region56: #{d_block_forward.1} parent=5 // pred_fallthru
        _
    $region6: #{d_block_forward.1} parent=1 // loop_footer
      %s20 = sadd.s32 1, %s16
    $region7: #{d_block_forward.1} parent=1 // loop_footer_branch
      %15 = sbr.rel target = $region3
    $region8: #{d_block_forward.1} parent=1 // loop_exit
      _
    %3998 = vsyncpa [#allocation4], 1
    %s3999 = scalar_lea.sflag [#allocation4], 1
    %4000 = vsyncpa %s3999, 1

</llo_original>
